<compile_context>
chip_gen: v7x
topology: tpu7x:2x2x1
jax: 0.10.0
libtpu: 0.0.40
codegen_flags: <defaults>
</compile_context>

<pallas_src>
import functools

import jax
import jax.numpy as jnp
from jax.experimental import pallas as pl
from jax.experimental.pallas import tpu as pltpu


def _round_up(x, m):
    return ((x + m - 1) // m) * m


# ----------------------------------------------------------------------------
# Static tap-offset bookkeeping.
#
# All four directional convolutions of a OneD block are length-9 1-D convs.
# Expressed directly on the original (h, w) grid they read x at offsets:
#   branch1 (1,9) on x          -> (0,  d)
#   branch2 (9,1) on x          -> (d,  0)
#   branch3 (9,1) on h-shear(x) -> (d, -d)
#   branch4 (1,9) on v-shear(x) -> (-d, d)
# for d in [-4, 4], zero outside the feature map.  Offsets whose mask is
# identically zero for the given feature map (|dh| >= H or |dw| >= W) are
# pruned statically.
# ----------------------------------------------------------------------------
def make_offsets(h, w):
    offsets, seen = [], set()
    for d in range(-4, 5):
        for off in ((0, d), (d, 0), (d, -d)):
            if abs(off[0]) >= h or abs(off[1]) >= w:
                continue
            if off not in seen:
                seen.add(off)
                offsets.append(off)
    return tuple(offsets)


def make_masks(h, w, offsets):
    r = jnp.arange(h * w)
    hh, ww = r // w, r % w
    ms = []
    for dh, dw in offsets:
        ok = (hh + dh >= 0) & (hh + dh < h) & (ww + dw >= 0) & (ww + dw < w)
        ms.append(ok.astype(jnp.float32))
    return jnp.stack(ms)[:, :, None]                         # (T, H*W, 1)


# ----------------------------------------------------------------------------
# One-time parameter folding (call once at load time, outside the jit).
# ----------------------------------------------------------------------------
def bn_fold(bn):
    s = bn["gamma"] / jnp.sqrt(bn["var"] + bn["eps"])
    t = bn["beta"] - bn["mean"] * s
    return s, t


def _fold_oned(p, offsets, scale=None, shift=None):
    """Fold 4 branch convs + 1x1 conv (+ eval BN) into one (T*Cin, Cout) matrix."""
    w5 = p["w5"][:, :, 0, 0]                                 # (Cout, Cin + Cin//2)
    cin = p["w1"].shape[1]
    cout = w5.shape[0]
    o = [0, cin // 2, cin, cin + cin // 4, cin + cin // 2]
    w5s = [w5[:, o[k]:o[k + 1]] for k in range(4)]

    acc = {off: jnp.zeros((cin, cout), jnp.float32) for off in offsets}

    def add(off, w_tap, w5k):
        if off in acc:                                       # pruned taps are exactly 0
            acc[off] = acc[off] + (w5k @ w_tap).T

    for j in range(9):
        d = j - 4
        add((0, d), p["w1"][:, :, 0, j], w5s[0])             # (1,9) conv
        add((d, 0), p["w2"][:, :, j, 0], w5s[1])             # (9,1) conv
        add((d, -d), p["w3"][:, :, j, 0], w5s[2])            # (9,1) on h-shear
        add((-d, d), p["w4"][:, :, 0, j], w5s[3])            # (1,9) on v-shear

    b_tot = (p["b5"] + w5s[0] @ p["b1"] + w5s[1] @ p["b2"]
             + w5s[2] @ p["b3"] + w5s[3] @ p["b4"])
    w_all = jnp.concatenate([acc[off] for off in offsets], axis=0)   # (T*Cin, Cout)
    if scale is not None:
        w_all = w_all * scale[None, :]
        b_tot = b_tot * scale + shift
    return w_all, b_tot


def fold_params(params, feat_h, feat_w):
    offsets = make_offsets(feat_h, feat_w)
    blocks = [
        (params["block0"], None, None),
        (params["res1"]["block1"], *bn_fold(params["res1"]["bn1"])),
        (params["res1"]["block2"], *bn_fold(params["res1"]["bn2"])),
        (params["res2"]["block1"], *bn_fold(params["res2"]["bn1"])),
        (params["res2"]["block2"], *bn_fold(params["res2"]["bn2"])),
    ]
    wts, bts = [], []
    for p, s, t in blocks:
        w, b = _fold_oned(p, offsets, s, t)
        wts.append(w)
        bts.append(b)
    c = params["patch_w"].shape[0]
    return {
        "pw": params["patch_w"].reshape(c, -1).T.astype(jnp.bfloat16),  # (Ci*p*p, C)
        "pb": params["patch_b"].reshape(1, c).astype(jnp.float32),
        "wt": jnp.stack(wts).astype(jnp.bfloat16),                      # (5, T*C, C)
        "bt": jnp.stack(bts).reshape(5, 1, c).astype(jnp.float32),
    }


# ----------------------------------------------------------------------------
# The single whole-network Pallas kernel (one grid step per batch element).
# ----------------------------------------------------------------------------
def _roadnet_kernel(cols_ref, masks_ref, pw_ref, pb_ref, wt_ref, bt_ref, out_ref,
                    *, offsets, feat_w, mb, rpad, c):
    f32 = jnp.float32
    # Patch embedding: (MB, Kp) @ (Kp, C) + bias, ReLU (bf16 MXU, f32 accumulate).
    x = jnp.dot(cols_ref[...].astype(jnp.bfloat16), pw_ref[...],
                preferred_element_type=f32) + pb_ref[...]
    x = jnp.maximum(x, 0.0)

    zpad = jnp.zeros((rpad, c), f32)

    def oned(xc, bi, relu):
        # In-VMEM tap gather: zero-padded row slab, one shifted slice per tap,
        # rows whose shifted (h, w) leaves the feature map are masked to zero.
        xp = jnp.concatenate([zpad, xc, zpad], axis=0)       # (mb + 2*rpad, c)
        pieces = []
        for t, (dh, dw) in enumerate(offsets):
            start = rpad + dh * feat_w + dw
            xs = xp[start:start + mb, :]
            if (dh, dw) != (0, 0):
                xs = xs * masks_ref[t]
            pieces.append(xs)
        xcat = jnp.concatenate(pieces, axis=1).astype(jnp.bfloat16)   # (mb, T*c)
        y = jnp.dot(xcat, wt_ref[bi], preferred_element_type=f32) + bt_ref[bi]
        if relu:
            y = jnp.maximum(y, 0.0)
        return y

    x = oned(x, 0, False)          # OneD_Block (no BN / ReLU after it)
    y = oned(x, 1, True)           # Residual block 1: OneD -> BN -> ReLU
    y = oned(y, 2, False)          #                   OneD -> BN
    x = x + y
    y = oned(x, 3, True)           # Residual block 2
    y = oned(y, 4, False)
    x = x + y
    out_ref[...] = x.astype(out_ref.dtype)


def roadnet_forward(roadmap, folded, *, patch):
    """roadmap: (B, road_channels, H, W) f32 (NCHW) -> (B, (H/p)*(W/p), C)."""
    b, ci, h, w = roadmap.shape
    hp, wp = h // patch, w // patch
    assert hp == wp, "square feature map required (same assumption as the torch shear trick)"
    mb = hp * wp
    assert mb % 8 == 0, "feature-map rows per image must be a multiple of 8"
    # TODO(synk): pad MB to a multiple of 8 for feature maps where (H/p)*(W/p) % 8 != 0.
    c = folded["pw"].shape[1]
    kp = ci * patch * patch

    offsets = make_offsets(hp, wp)
    nt = len(offsets)
    assert folded["wt"].shape == (5, nt * c, c), "folded params do not match feature-map size"
    rpad = _round_up(max(abs(dh * wp + dw) for dh, dw in offsets), 8)
    masks = make_masks(hp, wp, offsets)

    # Patchify (stride = kernel = patch) as a plain reshape/transpose -> (B*MB, Kp).
    cols = roadmap.reshape(b, ci, hp, patch, wp, patch)
    cols = jnp.transpose(cols, (0, 2, 4, 1, 3, 5)).reshape(b * mb, kp)

    kernel = functools.partial(_roadnet_kernel, offsets=offsets, feat_w=wp,
                               mb=mb, rpad=rpad, c=c)
    out = pl.pallas_call(
        kernel,
        out_shape=jax.ShapeDtypeStruct((b * mb, c), jnp.float32),
        grid=(b,),
        in_specs=[
            pl.BlockSpec((mb, kp), lambda i: (i, 0)),           # patchified input
            pl.BlockSpec((nt, mb, 1), lambda i: (0, 0, 0)),     # tap validity masks
            pl.BlockSpec((kp, c), lambda i: (0, 0)),            # patch-embed weight (bf16)
            pl.BlockSpec((1, c), lambda i: (0, 0)),             # patch-embed bias
            pl.BlockSpec((5, nt * c, c), lambda i: (0, 0, 0)),  # folded OneD weights (bf16)
            pl.BlockSpec((5, 1, c), lambda i: (0, 0, 0)),       # folded OneD biases
        ],
        out_specs=pl.BlockSpec((mb, c), lambda i: (i, 0)),
        compiler_params=pltpu.CompilerParams(
            dimension_semantics=("parallel",),
            vmem_limit_bytes=32 * 1024 * 1024),
    )(cols, masks, folded["pw"], folded["pb"], folded["wt"], folded["bt"])
    return out.reshape(b, mb, c)


# ----------------------------------------------------------------------------
# Pure-JAX f32 reference (direct port of the torch module) for validation.
# ----------------------------------------------------------------------------
def h_transform(x):
    b, h, w, c = x.shape
    x = jnp.pad(x, ((0, 0), (0, 0), (0, w), (0, 0)))
    x = x.reshape(b, h * 2 * w, c)[:, :-w, :]
    return x.reshape(b, h, 2 * w - 1, c)


def inv_h_transform(x):
    b, h, l, c = x.shape
    x = x.reshape(b, h * l, c)
    x = jnp.pad(x, ((0, 0), (0, h), (0, 0)))
    x = x.reshape(b, h, 2 * h, c)
    return x[:, :, :h, :]


def v_transform(x):
    x = jnp.transpose(x, (0, 2, 1, 3))
    b, w, h, c = x.shape
    x = jnp.pad(x, ((0, 0), (0, 0), (0, h), (0, 0)))
    x = x.reshape(b, w * 2 * h, c)[:, :-h, :]
    x = x.reshape(b, w, 2 * h - 1, c)
    return jnp.transpose(x, (0, 2, 1, 3))


def inv_v_transform(x):
    x = jnp.transpose(x, (0, 2, 1, 3))
    b, w, l, c = x.shape
    x = x.reshape(b, w * l, c)
    x = jnp.pad(x, ((0, 0), (0, w), (0, 0)))
    x = x.reshape(b, w, 2 * w, c)
    x = x[:, :, :w, :]
    return jnp.transpose(x, (0, 2, 1, 3))


def _conv_ref(x, w, bias, ph, pw):
    wk = jnp.transpose(w, (2, 3, 1, 0))                      # OIHW -> HWIO
    y = jax.lax.conv_general_dilated(
        x, wk, window_strides=(1, 1), padding=((ph, ph), (pw, pw)),
        dimension_numbers=("NHWC", "HWIO", "NHWC"))
    return y + bias


def _oned_ref(x, p):
    x1 = _conv_ref(x, p["w1"], p["b1"], 0, 4)
    x2 = _conv_ref(x, p["w2"], p["b2"], 4, 0)
    x3 = inv_h_transform(_conv_ref(h_transform(x), p["w3"], p["b3"], 4, 0))
    x4 = inv_v_transform(_conv_ref(v_transform(x), p["w4"], p["b4"], 0, 4))
    xc = jnp.concatenate([x1, x2, x3, x4], axis=-1)
    return _conv_ref(xc, p["w5"], p["b5"], 0, 0)


def roadnet_reference(roadmap, params, patch):
    y = jax.lax.conv_general_dilated(
        roadmap, params["patch_w"], window_strides=(patch, patch), padding="VALID",
        dimension_numbers=("NCHW", "OIHW", "NCHW"))
    y = jnp.maximum(y + params["patch_b"][None, :, None, None], 0.0)
    y = jnp.transpose(y, (0, 2, 3, 1))                       # NHWC
    y = _oned_ref(y, params["block0"])
    for rb in (params["res1"], params["res2"]):
        s1, t1 = bn_fold(rb["bn1"])
        s2, t2 = bn_fold(rb["bn2"])
        z = _oned_ref(y, rb["block1"]) * s1 + t1
        z = jnp.maximum(z, 0.0)
        z = _oned_ref(z, rb["block2"]) * s2 + t2
        y = y + z
    b, hp, wp, c = y.shape
    return y.reshape(b, hp * wp, c)


# ----------------------------------------------------------------------------
# Deterministic synthetic parameter init (torch weight layouts)
# ----------------------------------------------------------------------------
def _init_oned(key, C):
    ks = jax.random.split(key, 10)
    w = lambda k, s: 0.05 * jax.random.normal(k, s, jnp.float32)
    b = lambda k, s: 0.01 * jax.random.normal(k, s, jnp.float32)
    return {
        "w1": w(ks[0], (C // 2, C, 1, 9)), "b1": b(ks[1], (C // 2,)),
        "w2": w(ks[2], (C // 2, C, 9, 1)), "b2": b(ks[3], (C // 2,)),
        "w3": w(ks[4], (C // 4, C, 9, 1)), "b3": b(ks[5], (C // 4,)),
        "w4": w(ks[6], (C // 4, C, 1, 9)), "b4": b(ks[7], (C // 4,)),
        "w5": w(ks[8], (C, C + C // 2, 1, 1)), "b5": b(ks[9], (C,)),
    }


def _init_bn(key, C):
    k1, k2 = jax.random.split(key)
    return {
        "gamma": 1.0 + 0.1 * jax.random.normal(k1, (C,), jnp.float32),
        "beta": 0.1 * jax.random.normal(k2, (C,), jnp.float32),
        "mean": jnp.zeros((C,), jnp.float32),
        "var": jnp.ones((C,), jnp.float32),
        "eps": 1e-5,
    }


def init_params(key, C, patch, road_channels=1):
    ks = jax.random.split(key, 11)
    return {
        "patch_w": 0.05 * jax.random.normal(ks[0], (C, road_channels, patch, patch), jnp.float32),
        "patch_b": 0.01 * jax.random.normal(ks[1], (C,), jnp.float32),
        "block0": _init_oned(ks[2], C),
        "res1": {"block1": _init_oned(ks[3], C), "bn1": _init_bn(ks[4], C),
                 "block2": _init_oned(ks[5], C), "bn2": _init_bn(ks[6], C)},
        "res2": {"block1": _init_oned(ks[7], C), "bn1": _init_bn(ks[8], C),
                 "block2": _init_oned(ks[9], C), "bn2": _init_bn(ks[10], C)},
    }


if __name__ == "__main__":
    key = jax.random.PRNGKey(0)
    kparams, kx = jax.random.split(key)

    B, road_channels, H, W = 2, 1, 16, 16
    patch = 4
    base_channels = 32

    params = init_params(kparams, C=base_channels, patch=patch, road_channels=road_channels)
    roadmap = jax.random.normal(kx, (B, road_channels, H, W), jnp.float32)

    # Weight / BN folding done ONCE at parameter-load time.
    folded = fold_params(params, H // patch, W // patch)

    fwd = jax.jit(functools.partial(roadnet_forward, patch=patch))
    out = jax.block_until_ready(fwd(roadmap, folded))

    assert out.shape == (B, (H // patch) * (W // patch), base_channels), out.shape
    assert bool(jnp.all(jnp.isfinite(out)))

    # Loose parity check vs. the f32 reference (kernel uses bf16 MXU operands).
    ref = roadnet_reference(roadmap, params, patch)
    err = float(jnp.max(jnp.abs(out - ref)) / (jnp.max(jnp.abs(ref)) + 1e-6))
    assert err < 0.1, f"max relative-to-max error too large: {err}"

    print("KERNEL_OK")
</pallas_src>

<mosaic_0001>
module attributes {stable_mosaic.version = 11 : i64} {
  func.func @_roadnet_kernel(%arg0: i32, %arg1: memref<16x16xf32, #tpu.memory_space<vmem>>, %arg2: memref<19x16x1xf32, #tpu.memory_space<vmem>>, %arg3: memref<16x32xbf16, #tpu.memory_space<vmem>>, %arg4: memref<1x32xf32, #tpu.memory_space<vmem>>, %arg5: memref<5x608x32xbf16, #tpu.memory_space<vmem>>, %arg6: memref<5x1x32xf32, #tpu.memory_space<vmem>>, %arg7: memref<16x32xf32, #tpu.memory_space<vmem>>) attributes {dimension_semantics = [#tpu.dimension_semantics<parallel>], iteration_bounds = array<i64: 2>, scalar_prefetch = 0 : i64, scratch_operands = 0 : i64, tpu.core_type = #tpu.core_type<tc>, window_params = [{transform_indices = @transform_0, window_bounds = array<i64: 16, 16>}, {pipeline_mode = #tpu.pipeline_mode<synchronous>, transform_indices = @transform_1, window_bounds = array<i64: 19, 16, 1>}, {pipeline_mode = #tpu.pipeline_mode<synchronous>, transform_indices = @transform_2, window_bounds = array<i64: 16, 32>}, {pipeline_mode = #tpu.pipeline_mode<synchronous>, transform_indices = @transform_3, window_bounds = array<i64: 1, 32>}, {pipeline_mode = #tpu.pipeline_mode<synchronous>, transform_indices = @transform_4, window_bounds = array<i64: 5, 608, 32>}, {pipeline_mode = #tpu.pipeline_mode<synchronous>, transform_indices = @transform_5, window_bounds = array<i64: 5, 1, 32>}, {transform_indices = @transform_6, window_bounds = array<i64: 16, 32>}]} {
    %c0 = arith.constant 0 : index
    %c0_0 = arith.constant 0 : index
    %0 = vector.load %arg1[%c0, %c0_0] : memref<16x16xf32, #tpu.memory_space<vmem>>, vector<16x16xf32>
    %1 = arith.truncf %0 : vector<16x16xf32> to vector<16x16xbf16>
    %c0_1 = arith.constant 0 : index
    %c0_2 = arith.constant 0 : index
    %2 = vector.load %arg3[%c0_1, %c0_2] : memref<16x32xbf16, #tpu.memory_space<vmem>>, vector<16x32xbf16>
    %cst = arith.constant dense<0.000000e+00> : vector<16x32xf32>
    %3 = tpu.matmul %1, %2, %cst {dimension_numbers = #tpu.dot_dimension_numbers<[1], [0], [0], [1], [0, 0, 1, 1], [], []>} : vector<16x16xbf16>, vector<16x32xbf16>, vector<16x32xf32> -> vector<16x32xf32>
    %c0_3 = arith.constant 0 : index
    %c0_4 = arith.constant 0 : index
    %4 = vector.load %arg4[%c0_3, %c0_4] : memref<1x32xf32, #tpu.memory_space<vmem>>, vector<1x32xf32>
    %5 = vector.broadcast %4 : vector<1x32xf32> to vector<16x32xf32>
    %6 = arith.addf %3, %5 : vector<16x32xf32>
    %cst_5 = arith.constant 0.000000e+00 : f32
    %7 = vector.broadcast %cst_5 : f32 to vector<16x32xf32>
    %8 = arith.maximumf %6, %7 : vector<16x32xf32>
    %cst_6 = arith.constant 0.000000e+00 : f32
    %9 = vector.broadcast %cst_6 : f32 to vector<16x32xf32>
    %10 = tpu.concatenate %9, %8, %9 in 0 : vector<16x32xf32>, vector<16x32xf32>, vector<16x32xf32> -> vector<48x32xf32>
    %11 = vector.extract_strided_slice %10 {offsets = [13, 0], sizes = [16, 32], strides = [1, 1]} : vector<48x32xf32> to vector<16x32xf32>
    %c0_7 = arith.constant 0 : index
    %c0_8 = arith.constant 0 : index
    %c0_9 = arith.constant 0 : index
    %12 = vector.load %arg2[%c0_7, %c0_8, %c0_9] : memref<19x16x1xf32, #tpu.memory_space<vmem>>, vector<1x16x1xf32>
    %13 = vector.shape_cast %12 : vector<1x16x1xf32> to vector<16x1xf32>
    %14 = vector.broadcast %13 : vector<16x1xf32> to vector<16x32xf32>
    %15 = arith.mulf %11, %14 : vector<16x32xf32>
    %16 = vector.extract_strided_slice %10 {offsets = [4, 0], sizes = [16, 32], strides = [1, 1]} : vector<48x32xf32> to vector<16x32xf32>
    %c1 = arith.constant 1 : index
    %c0_10 = arith.constant 0 : index
    %c0_11 = arith.constant 0 : index
    %17 = vector.load %arg2[%c1, %c0_10, %c0_11] : memref<19x16x1xf32, #tpu.memory_space<vmem>>, vector<1x16x1xf32>
    %18 = vector.shape_cast %17 : vector<1x16x1xf32> to vector<16x1xf32>
    %19 = vector.broadcast %18 : vector<16x1xf32> to vector<16x32xf32>
    %20 = arith.mulf %16, %19 : vector<16x32xf32>
    %21 = vector.extract_strided_slice %10 {offsets = [7, 0], sizes = [16, 32], strides = [1, 1]} : vector<48x32xf32> to vector<16x32xf32>
    %c2 = arith.constant 2 : index
    %c0_12 = arith.constant 0 : index
    %c0_13 = arith.constant 0 : index
    %22 = vector.load %arg2[%c2, %c0_12, %c0_13] : memref<19x16x1xf32, #tpu.memory_space<vmem>>, vector<1x16x1xf32>
    %23 = vector.shape_cast %22 : vector<1x16x1xf32> to vector<16x1xf32>
    %24 = vector.broadcast %23 : vector<16x1xf32> to vector<16x32xf32>
    %25 = arith.mulf %21, %24 : vector<16x32xf32>
    %26 = vector.extract_strided_slice %10 {offsets = [14, 0], sizes = [16, 32], strides = [1, 1]} : vector<48x32xf32> to vector<16x32xf32>
    %c3 = arith.constant 3 : index
    %c0_14 = arith.constant 0 : index
    %c0_15 = arith.constant 0 : index
    %27 = vector.load %arg2[%c3, %c0_14, %c0_15] : memref<19x16x1xf32, #tpu.memory_space<vmem>>, vector<1x16x1xf32>
    %28 = vector.shape_cast %27 : vector<1x16x1xf32> to vector<16x1xf32>
    %29 = vector.broadcast %28 : vector<16x1xf32> to vector<16x32xf32>
    %30 = arith.mulf %26, %29 : vector<16x32xf32>
    %31 = vector.extract_strided_slice %10 {offsets = [8, 0], sizes = [16, 32], strides = [1, 1]} : vector<48x32xf32> to vector<16x32xf32>
    %c4 = arith.constant 4 : index
    %c0_16 = arith.constant 0 : index
    %c0_17 = arith.constant 0 : index
    %32 = vector.load %arg2[%c4, %c0_16, %c0_17] : memref<19x16x1xf32, #tpu.memory_space<vmem>>, vector<1x16x1xf32>
    %33 = vector.shape_cast %32 : vector<1x16x1xf32> to vector<16x1xf32>
    %34 = vector.broadcast %33 : vector<16x1xf32> to vector<16x32xf32>
    %35 = arith.mulf %31, %34 : vector<16x32xf32>
    %36 = vector.extract_strided_slice %10 {offsets = [10, 0], sizes = [16, 32], strides = [1, 1]} : vector<48x32xf32> to vector<16x32xf32>
    %c5 = arith.constant 5 : index
    %c0_18 = arith.constant 0 : index
    %c0_19 = arith.constant 0 : index
    %37 = vector.load %arg2[%c5, %c0_18, %c0_19] : memref<19x16x1xf32, #tpu.memory_space<vmem>>, vector<1x16x1xf32>
    %38 = vector.shape_cast %37 : vector<1x16x1xf32> to vector<16x1xf32>
    %39 = vector.broadcast %38 : vector<16x1xf32> to vector<16x32xf32>
    %40 = arith.mulf %36, %39 : vector<16x32xf32>
    %41 = vector.extract_strided_slice %10 {offsets = [15, 0], sizes = [16, 32], strides = [1, 1]} : vector<48x32xf32> to vector<16x32xf32>
    %c6 = arith.constant 6 : index
    %c0_20 = arith.constant 0 : index
    %c0_21 = arith.constant 0 : index
    %42 = vector.load %arg2[%c6, %c0_20, %c0_21] : memref<19x16x1xf32, #tpu.memory_space<vmem>>, vector<1x16x1xf32>
    %43 = vector.shape_cast %42 : vector<1x16x1xf32> to vector<16x1xf32>
    %44 = vector.broadcast %43 : vector<16x1xf32> to vector<16x32xf32>
    %45 = arith.mulf %41, %44 : vector<16x32xf32>
    %46 = vector.extract_strided_slice %10 {offsets = [12, 0], sizes = [16, 32], strides = [1, 1]} : vector<48x32xf32> to vector<16x32xf32>
    %c7 = arith.constant 7 : index
    %c0_22 = arith.constant 0 : index
    %c0_23 = arith.constant 0 : index
    %47 = vector.load %arg2[%c7, %c0_22, %c0_23] : memref<19x16x1xf32, #tpu.memory_space<vmem>>, vector<1x16x1xf32>
    %48 = vector.shape_cast %47 : vector<1x16x1xf32> to vector<16x1xf32>
    %49 = vector.broadcast %48 : vector<16x1xf32> to vector<16x32xf32>
    %50 = arith.mulf %46, %49 : vector<16x32xf32>
    %51 = vector.extract_strided_slice %10 {offsets = [13, 0], sizes = [16, 32], strides = [1, 1]} : vector<48x32xf32> to vector<16x32xf32>
    %c8 = arith.constant 8 : index
    %c0_24 = arith.constant 0 : index
    %c0_25 = arith.constant 0 : index
    %52 = vector.load %arg2[%c8, %c0_24, %c0_25] : memref<19x16x1xf32, #tpu.memory_space<vmem>>, vector<1x16x1xf32>
    %53 = vector.shape_cast %52 : vector<1x16x1xf32> to vector<16x1xf32>
    %54 = vector.broadcast %53 : vector<16x1xf32> to vector<16x32xf32>
    %55 = arith.mulf %51, %54 : vector<16x32xf32>
    %56 = vector.extract_strided_slice %10 {offsets = [16, 0], sizes = [16, 32], strides = [1, 1]} : vector<48x32xf32> to vector<16x32xf32>
    %57 = vector.extract_strided_slice %10 {offsets = [17, 0], sizes = [16, 32], strides = [1, 1]} : vector<48x32xf32> to vector<16x32xf32>
    %c10 = arith.constant 10 : index
    %c0_26 = arith.constant 0 : index
    %c0_27 = arith.constant 0 : index
    %58 = vector.load %arg2[%c10, %c0_26, %c0_27] : memref<19x16x1xf32, #tpu.memory_space<vmem>>, vector<1x16x1xf32>
    %59 = vector.shape_cast %58 : vector<1x16x1xf32> to vector<16x1xf32>
    %60 = vector.broadcast %59 : vector<16x1xf32> to vector<16x32xf32>
    %61 = arith.mulf %57, %60 : vector<16x32xf32>
    %62 = vector.extract_strided_slice %10 {offsets = [20, 0], sizes = [16, 32], strides = [1, 1]} : vector<48x32xf32> to vector<16x32xf32>
    %c11 = arith.constant 11 : index
    %c0_28 = arith.constant 0 : index
    %c0_29 = arith.constant 0 : index
    %63 = vector.load %arg2[%c11, %c0_28, %c0_29] : memref<19x16x1xf32, #tpu.memory_space<vmem>>, vector<1x16x1xf32>
    %64 = vector.shape_cast %63 : vector<1x16x1xf32> to vector<16x1xf32>
    %65 = vector.broadcast %64 : vector<16x1xf32> to vector<16x32xf32>
    %66 = arith.mulf %62, %65 : vector<16x32xf32>
    %67 = vector.extract_strided_slice %10 {offsets = [19, 0], sizes = [16, 32], strides = [1, 1]} : vector<48x32xf32> to vector<16x32xf32>
    %c12 = arith.constant 12 : index
    %c0_30 = arith.constant 0 : index
    %c0_31 = arith.constant 0 : index
    %68 = vector.load %arg2[%c12, %c0_30, %c0_31] : memref<19x16x1xf32, #tpu.memory_space<vmem>>, vector<1x16x1xf32>
    %69 = vector.shape_cast %68 : vector<1x16x1xf32> to vector<16x1xf32>
    %70 = vector.broadcast %69 : vector<16x1xf32> to vector<16x32xf32>
    %71 = arith.mulf %67, %70 : vector<16x32xf32>
    %72 = vector.extract_strided_slice %10 {offsets = [18, 0], sizes = [16, 32], strides = [1, 1]} : vector<48x32xf32> to vector<16x32xf32>
    %c13 = arith.constant 13 : index
    %c0_32 = arith.constant 0 : index
    %c0_33 = arith.constant 0 : index
    %73 = vector.load %arg2[%c13, %c0_32, %c0_33] : memref<19x16x1xf32, #tpu.memory_space<vmem>>, vector<1x16x1xf32>
    %74 = vector.shape_cast %73 : vector<1x16x1xf32> to vector<16x1xf32>
    %75 = vector.broadcast %74 : vector<16x1xf32> to vector<16x32xf32>
    %76 = arith.mulf %72, %75 : vector<16x32xf32>
    %77 = vector.extract_strided_slice %10 {offsets = [24, 0], sizes = [16, 32], strides = [1, 1]} : vector<48x32xf32> to vector<16x32xf32>
    %c14 = arith.constant 14 : index
    %c0_34 = arith.constant 0 : index
    %c0_35 = arith.constant 0 : index
    %78 = vector.load %arg2[%c14, %c0_34, %c0_35] : memref<19x16x1xf32, #tpu.memory_space<vmem>>, vector<1x16x1xf32>
    %79 = vector.shape_cast %78 : vector<1x16x1xf32> to vector<16x1xf32>
    %80 = vector.broadcast %79 : vector<16x1xf32> to vector<16x32xf32>
    %81 = arith.mulf %77, %80 : vector<16x32xf32>
    %82 = vector.extract_strided_slice %10 {offsets = [22, 0], sizes = [16, 32], strides = [1, 1]} : vector<48x32xf32> to vector<16x32xf32>
    %c15 = arith.constant 15 : index
    %c0_36 = arith.constant 0 : index
    %c0_37 = arith.constant 0 : index
    %83 = vector.load %arg2[%c15, %c0_36, %c0_37] : memref<19x16x1xf32, #tpu.memory_space<vmem>>, vector<1x16x1xf32>
    %84 = vector.shape_cast %83 : vector<1x16x1xf32> to vector<16x1xf32>
    %85 = vector.broadcast %84 : vector<16x1xf32> to vector<16x32xf32>
    %86 = arith.mulf %82, %85 : vector<16x32xf32>
    %87 = vector.extract_strided_slice %10 {offsets = [19, 0], sizes = [16, 32], strides = [1, 1]} : vector<48x32xf32> to vector<16x32xf32>
    %c16 = arith.constant 16 : index
    %c0_38 = arith.constant 0 : index
    %c0_39 = arith.constant 0 : index
    %88 = vector.load %arg2[%c16, %c0_38, %c0_39] : memref<19x16x1xf32, #tpu.memory_space<vmem>>, vector<1x16x1xf32>
    %89 = vector.shape_cast %88 : vector<1x16x1xf32> to vector<16x1xf32>
    %90 = vector.broadcast %89 : vector<16x1xf32> to vector<16x32xf32>
    %91 = arith.mulf %87, %90 : vector<16x32xf32>
    %92 = vector.extract_strided_slice %10 {offsets = [28, 0], sizes = [16, 32], strides = [1, 1]} : vector<48x32xf32> to vector<16x32xf32>
    %c17 = arith.constant 17 : index
    %c0_40 = arith.constant 0 : index
    %c0_41 = arith.constant 0 : index
    %93 = vector.load %arg2[%c17, %c0_40, %c0_41] : memref<19x16x1xf32, #tpu.memory_space<vmem>>, vector<1x16x1xf32>
    %94 = vector.shape_cast %93 : vector<1x16x1xf32> to vector<16x1xf32>
    %95 = vector.broadcast %94 : vector<16x1xf32> to vector<16x32xf32>
    %96 = arith.mulf %92, %95 : vector<16x32xf32>
    %97 = vector.extract_strided_slice %10 {offsets = [25, 0], sizes = [16, 32], strides = [1, 1]} : vector<48x32xf32> to vector<16x32xf32>
    %c18 = arith.constant 18 : index
    %c0_42 = arith.constant 0 : index
    %c0_43 = arith.constant 0 : index
    %98 = vector.load %arg2[%c18, %c0_42, %c0_43] : memref<19x16x1xf32, #tpu.memory_space<vmem>>, vector<1x16x1xf32>
    %99 = vector.shape_cast %98 : vector<1x16x1xf32> to vector<16x1xf32>
    %100 = vector.broadcast %99 : vector<16x1xf32> to vector<16x32xf32>
    %101 = arith.mulf %97, %100 : vector<16x32xf32>
    %102 = tpu.concatenate %15, %20, %25, %30, %35, %40, %45, %50, %55, %56, %61, %66, %71, %76, %81, %86 in 1 : vector<16x32xf32>, vector<16x32xf32>, vector<16x32xf32>, vector<16x32xf32>, vector<16x32xf32>, vector<16x32xf32>, vector<16x32xf32>, vector<16x32xf32>, vector<16x32xf32>, vector<16x32xf32>, vector<16x32xf32>, vector<16x32xf32>, vector<16x32xf32>, vector<16x32xf32>, vector<16x32xf32>, vector<16x32xf32> -> vector<16x512xf32>
    %103 = tpu.concatenate %91, %96, %101 in 1 : vector<16x32xf32>, vector<16x32xf32>, vector<16x32xf32> -> vector<16x96xf32>
    %104 = tpu.concatenate %102, %103 in 1 : vector<16x512xf32>, vector<16x96xf32> -> vector<16x608xf32>
    %105 = arith.truncf %104 : vector<16x608xf32> to vector<16x608xbf16>
    %c0_44 = arith.constant 0 : index
    %c0_45 = arith.constant 0 : index
    %c0_46 = arith.constant 0 : index
    %106 = vector.load %arg5[%c0_44, %c0_45, %c0_46] : memref<5x608x32xbf16, #tpu.memory_space<vmem>>, vector<1x608x32xbf16>
    %107 = vector.shape_cast %106 : vector<1x608x32xbf16> to vector<608x32xbf16>
    %cst_47 = arith.constant dense<0.000000e+00> : vector<16x32xf32>
    %108 = tpu.matmul %105, %107, %cst_47 {dimension_numbers = #tpu.dot_dimension_numbers<[1], [0], [0], [1], [0, 0, 1, 1], [], []>} : vector<16x608xbf16>, vector<608x32xbf16>, vector<16x32xf32> -> vector<16x32xf32>
    %c0_48 = arith.constant 0 : index
    %c0_49 = arith.constant 0 : index
    %c0_50 = arith.constant 0 : index
    %109 = vector.load %arg6[%c0_48, %c0_49, %c0_50] : memref<5x1x32xf32, #tpu.memory_space<vmem>>, vector<1x1x32xf32>
    %110 = vector.shape_cast %109 : vector<1x1x32xf32> to vector<1x32xf32>
    %111 = vector.broadcast %110 : vector<1x32xf32> to vector<16x32xf32>
    %112 = arith.addf %108, %111 : vector<16x32xf32>
    %113 = tpu.concatenate %9, %112, %9 in 0 : vector<16x32xf32>, vector<16x32xf32>, vector<16x32xf32> -> vector<48x32xf32>
    %114 = vector.extract_strided_slice %113 {offsets = [13, 0], sizes = [16, 32], strides = [1, 1]} : vector<48x32xf32> to vector<16x32xf32>
    %c0_51 = arith.constant 0 : index
    %c0_52 = arith.constant 0 : index
    %c0_53 = arith.constant 0 : index
    %115 = vector.load %arg2[%c0_51, %c0_52, %c0_53] : memref<19x16x1xf32, #tpu.memory_space<vmem>>, vector<1x16x1xf32>
    %116 = vector.shape_cast %115 : vector<1x16x1xf32> to vector<16x1xf32>
    %117 = vector.broadcast %116 : vector<16x1xf32> to vector<16x32xf32>
    %118 = arith.mulf %114, %117 : vector<16x32xf32>
    %119 = vector.extract_strided_slice %113 {offsets = [4, 0], sizes = [16, 32], strides = [1, 1]} : vector<48x32xf32> to vector<16x32xf32>
    %c1_54 = arith.constant 1 : index
    %c0_55 = arith.constant 0 : index
    %c0_56 = arith.constant 0 : index
    %120 = vector.load %arg2[%c1_54, %c0_55, %c0_56] : memref<19x16x1xf32, #tpu.memory_space<vmem>>, vector<1x16x1xf32>
    %121 = vector.shape_cast %120 : vector<1x16x1xf32> to vector<16x1xf32>
    %122 = vector.broadcast %121 : vector<16x1xf32> to vector<16x32xf32>
    %123 = arith.mulf %119, %122 : vector<16x32xf32>
    %124 = vector.extract_strided_slice %113 {offsets = [7, 0], sizes = [16, 32], strides = [1, 1]} : vector<48x32xf32> to vector<16x32xf32>
    %c2_57 = arith.constant 2 : index
    %c0_58 = arith.constant 0 : index
    %c0_59 = arith.constant 0 : index
    %125 = vector.load %arg2[%c2_57, %c0_58, %c0_59] : memref<19x16x1xf32, #tpu.memory_space<vmem>>, vector<1x16x1xf32>
    %126 = vector.shape_cast %125 : vector<1x16x1xf32> to vector<16x1xf32>
    %127 = vector.broadcast %126 : vector<16x1xf32> to vector<16x32xf32>
    %128 = arith.mulf %124, %127 : vector<16x32xf32>
    %129 = vector.extract_strided_slice %113 {offsets = [14, 0], sizes = [16, 32], strides = [1, 1]} : vector<48x32xf32> to vector<16x32xf32>
    %c3_60 = arith.constant 3 : index
    %c0_61 = arith.constant 0 : index
    %c0_62 = arith.constant 0 : index
    %130 = vector.load %arg2[%c3_60, %c0_61, %c0_62] : memref<19x16x1xf32, #tpu.memory_space<vmem>>, vector<1x16x1xf32>
    %131 = vector.shape_cast %130 : vector<1x16x1xf32> to vector<16x1xf32>
    %132 = vector.broadcast %131 : vector<16x1xf32> to vector<16x32xf32>
    %133 = arith.mulf %129, %132 : vector<16x32xf32>
    %134 = vector.extract_strided_slice %113 {offsets = [8, 0], sizes = [16, 32], strides = [1, 1]} : vector<48x32xf32> to vector<16x32xf32>
    %c4_63 = arith.constant 4 : index
    %c0_64 = arith.constant 0 : index
    %c0_65 = arith.constant 0 : index
    %135 = vector.load %arg2[%c4_63, %c0_64, %c0_65] : memref<19x16x1xf32, #tpu.memory_space<vmem>>, vector<1x16x1xf32>
    %136 = vector.shape_cast %135 : vector<1x16x1xf32> to vector<16x1xf32>
    %137 = vector.broadcast %136 : vector<16x1xf32> to vector<16x32xf32>
    %138 = arith.mulf %134, %137 : vector<16x32xf32>
    %139 = vector.extract_strided_slice %113 {offsets = [10, 0], sizes = [16, 32], strides = [1, 1]} : vector<48x32xf32> to vector<16x32xf32>
    %c5_66 = arith.constant 5 : index
    %c0_67 = arith.constant 0 : index
    %c0_68 = arith.constant 0 : index
    %140 = vector.load %arg2[%c5_66, %c0_67, %c0_68] : memref<19x16x1xf32, #tpu.memory_space<vmem>>, vector<1x16x1xf32>
    %141 = vector.shape_cast %140 : vector<1x16x1xf32> to vector<16x1xf32>
    %142 = vector.broadcast %141 : vector<16x1xf32> to vector<16x32xf32>
    %143 = arith.mulf %139, %142 : vector<16x32xf32>
    %144 = vector.extract_strided_slice %113 {offsets = [15, 0], sizes = [16, 32], strides = [1, 1]} : vector<48x32xf32> to vector<16x32xf32>
    %c6_69 = arith.constant 6 : index
    %c0_70 = arith.constant 0 : index
    %c0_71 = arith.constant 0 : index
    %145 = vector.load %arg2[%c6_69, %c0_70, %c0_71] : memref<19x16x1xf32, #tpu.memory_space<vmem>>, vector<1x16x1xf32>
    %146 = vector.shape_cast %145 : vector<1x16x1xf32> to vector<16x1xf32>
    %147 = vector.broadcast %146 : vector<16x1xf32> to vector<16x32xf32>
    %148 = arith.mulf %144, %147 : vector<16x32xf32>
    %149 = vector.extract_strided_slice %113 {offsets = [12, 0], sizes = [16, 32], strides = [1, 1]} : vector<48x32xf32> to vector<16x32xf32>
    %c7_72 = arith.constant 7 : index
    %c0_73 = arith.constant 0 : index
    %c0_74 = arith.constant 0 : index
    %150 = vector.load %arg2[%c7_72, %c0_73, %c0_74] : memref<19x16x1xf32, #tpu.memory_space<vmem>>, vector<1x16x1xf32>
    %151 = vector.shape_cast %150 : vector<1x16x1xf32> to vector<16x1xf32>
    %152 = vector.broadcast %151 : vector<16x1xf32> to vector<16x32xf32>
    %153 = arith.mulf %149, %152 : vector<16x32xf32>
    %154 = vector.extract_strided_slice %113 {offsets = [13, 0], sizes = [16, 32], strides = [1, 1]} : vector<48x32xf32> to vector<16x32xf32>
    %c8_75 = arith.constant 8 : index
    %c0_76 = arith.constant 0 : index
    %c0_77 = arith.constant 0 : index
    %155 = vector.load %arg2[%c8_75, %c0_76, %c0_77] : memref<19x16x1xf32, #tpu.memory_space<vmem>>, vector<1x16x1xf32>
    %156 = vector.shape_cast %155 : vector<1x16x1xf32> to vector<16x1xf32>
    %157 = vector.broadcast %156 : vector<16x1xf32> to vector<16x32xf32>
    %158 = arith.mulf %154, %157 : vector<16x32xf32>
    %159 = vector.extract_strided_slice %113 {offsets = [16, 0], sizes = [16, 32], strides = [1, 1]} : vector<48x32xf32> to vector<16x32xf32>
    %160 = vector.extract_strided_slice %113 {offsets = [17, 0], sizes = [16, 32], strides = [1, 1]} : vector<48x32xf32> to vector<16x32xf32>
    %c10_78 = arith.constant 10 : index
    %c0_79 = arith.constant 0 : index
    %c0_80 = arith.constant 0 : index
    %161 = vector.load %arg2[%c10_78, %c0_79, %c0_80] : memref<19x16x1xf32, #tpu.memory_space<vmem>>, vector<1x16x1xf32>
    %162 = vector.shape_cast %161 : vector<1x16x1xf32> to vector<16x1xf32>
    %163 = vector.broadcast %162 : vector<16x1xf32> to vector<16x32xf32>
    %164 = arith.mulf %160, %163 : vector<16x32xf32>
    %165 = vector.extract_strided_slice %113 {offsets = [20, 0], sizes = [16, 32], strides = [1, 1]} : vector<48x32xf32> to vector<16x32xf32>
    %c11_81 = arith.constant 11 : index
    %c0_82 = arith.constant 0 : index
    %c0_83 = arith.constant 0 : index
    %166 = vector.load %arg2[%c11_81, %c0_82, %c0_83] : memref<19x16x1xf32, #tpu.memory_space<vmem>>, vector<1x16x1xf32>
    %167 = vector.shape_cast %166 : vector<1x16x1xf32> to vector<16x1xf32>
    %168 = vector.broadcast %167 : vector<16x1xf32> to vector<16x32xf32>
    %169 = arith.mulf %165, %168 : vector<16x32xf32>
    %170 = vector.extract_strided_slice %113 {offsets = [19, 0], sizes = [16, 32], strides = [1, 1]} : vector<48x32xf32> to vector<16x32xf32>
    %c12_84 = arith.constant 12 : index
    %c0_85 = arith.constant 0 : index
    %c0_86 = arith.constant 0 : index
    %171 = vector.load %arg2[%c12_84, %c0_85, %c0_86] : memref<19x16x1xf32, #tpu.memory_space<vmem>>, vector<1x16x1xf32>
    %172 = vector.shape_cast %171 : vector<1x16x1xf32> to vector<16x1xf32>
    %173 = vector.broadcast %172 : vector<16x1xf32> to vector<16x32xf32>
    %174 = arith.mulf %170, %173 : vector<16x32xf32>
    %175 = vector.extract_strided_slice %113 {offsets = [18, 0], sizes = [16, 32], strides = [1, 1]} : vector<48x32xf32> to vector<16x32xf32>
    %c13_87 = arith.constant 13 : index
    %c0_88 = arith.constant 0 : index
    %c0_89 = arith.constant 0 : index
    %176 = vector.load %arg2[%c13_87, %c0_88, %c0_89] : memref<19x16x1xf32, #tpu.memory_space<vmem>>, vector<1x16x1xf32>
    %177 = vector.shape_cast %176 : vector<1x16x1xf32> to vector<16x1xf32>
    %178 = vector.broadcast %177 : vector<16x1xf32> to vector<16x32xf32>
    %179 = arith.mulf %175, %178 : vector<16x32xf32>
    %180 = vector.extract_strided_slice %113 {offsets = [24, 0], sizes = [16, 32], strides = [1, 1]} : vector<48x32xf32> to vector<16x32xf32>
    %c14_90 = arith.constant 14 : index
    %c0_91 = arith.constant 0 : index
    %c0_92 = arith.constant 0 : index
    %181 = vector.load %arg2[%c14_90, %c0_91, %c0_92] : memref<19x16x1xf32, #tpu.memory_space<vmem>>, vector<1x16x1xf32>
    %182 = vector.shape_cast %181 : vector<1x16x1xf32> to vector<16x1xf32>
    %183 = vector.broadcast %182 : vector<16x1xf32> to vector<16x32xf32>
    %184 = arith.mulf %180, %183 : vector<16x32xf32>
    %185 = vector.extract_strided_slice %113 {offsets = [22, 0], sizes = [16, 32], strides = [1, 1]} : vector<48x32xf32> to vector<16x32xf32>
    %c15_93 = arith.constant 15 : index
    %c0_94 = arith.constant 0 : index
    %c0_95 = arith.constant 0 : index
    %186 = vector.load %arg2[%c15_93, %c0_94, %c0_95] : memref<19x16x1xf32, #tpu.memory_space<vmem>>, vector<1x16x1xf32>
    %187 = vector.shape_cast %186 : vector<1x16x1xf32> to vector<16x1xf32>
    %188 = vector.broadcast %187 : vector<16x1xf32> to vector<16x32xf32>
    %189 = arith.mulf %185, %188 : vector<16x32xf32>
    %190 = vector.extract_strided_slice %113 {offsets = [19, 0], sizes = [16, 32], strides = [1, 1]} : vector<48x32xf32> to vector<16x32xf32>
    %c16_96 = arith.constant 16 : index
    %c0_97 = arith.constant 0 : index
    %c0_98 = arith.constant 0 : index
    %191 = vector.load %arg2[%c16_96, %c0_97, %c0_98] : memref<19x16x1xf32, #tpu.memory_space<vmem>>, vector<1x16x1xf32>
    %192 = vector.shape_cast %191 : vector<1x16x1xf32> to vector<16x1xf32>
    %193 = vector.broadcast %192 : vector<16x1xf32> to vector<16x32xf32>
    %194 = arith.mulf %190, %193 : vector<16x32xf32>
    %195 = vector.extract_strided_slice %113 {offsets = [28, 0], sizes = [16, 32], strides = [1, 1]} : vector<48x32xf32> to vector<16x32xf32>
    %c17_99 = arith.constant 17 : index
    %c0_100 = arith.constant 0 : index
    %c0_101 = arith.constant 0 : index
    %196 = vector.load %arg2[%c17_99, %c0_100, %c0_101] : memref<19x16x1xf32, #tpu.memory_space<vmem>>, vector<1x16x1xf32>
    %197 = vector.shape_cast %196 : vector<1x16x1xf32> to vector<16x1xf32>
    %198 = vector.broadcast %197 : vector<16x1xf32> to vector<16x32xf32>
    %199 = arith.mulf %195, %198 : vector<16x32xf32>
    %200 = vector.extract_strided_slice %113 {offsets = [25, 0], sizes = [16, 32], strides = [1, 1]} : vector<48x32xf32> to vector<16x32xf32>
    %c18_102 = arith.constant 18 : index
    %c0_103 = arith.constant 0 : index
    %c0_104 = arith.constant 0 : index
    %201 = vector.load %arg2[%c18_102, %c0_103, %c0_104] : memref<19x16x1xf32, #tpu.memory_space<vmem>>, vector<1x16x1xf32>
    %202 = vector.shape_cast %201 : vector<1x16x1xf32> to vector<16x1xf32>
    %203 = vector.broadcast %202 : vector<16x1xf32> to vector<16x32xf32>
    %204 = arith.mulf %200, %203 : vector<16x32xf32>
    %205 = tpu.concatenate %118, %123, %128, %133, %138, %143, %148, %153, %158, %159, %164, %169, %174, %179, %184, %189 in 1 : vector<16x32xf32>, vector<16x32xf32>, vector<16x32xf32>, vector<16x32xf32>, vector<16x32xf32>, vector<16x32xf32>, vector<16x32xf32>, vector<16x32xf32>, vector<16x32xf32>, vector<16x32xf32>, vector<16x32xf32>, vector<16x32xf32>, vector<16x32xf32>, vector<16x32xf32>, vector<16x32xf32>, vector<16x32xf32> -> vector<16x512xf32>
    %206 = tpu.concatenate %194, %199, %204 in 1 : vector<16x32xf32>, vector<16x32xf32>, vector<16x32xf32> -> vector<16x96xf32>
    %207 = tpu.concatenate %205, %206 in 1 : vector<16x512xf32>, vector<16x96xf32> -> vector<16x608xf32>
    %208 = arith.truncf %207 : vector<16x608xf32> to vector<16x608xbf16>
    %c1_105 = arith.constant 1 : index
    %c0_106 = arith.constant 0 : index
    %c0_107 = arith.constant 0 : index
    %209 = vector.load %arg5[%c1_105, %c0_106, %c0_107] : memref<5x608x32xbf16, #tpu.memory_space<vmem>>, vector<1x608x32xbf16>
    %210 = vector.shape_cast %209 : vector<1x608x32xbf16> to vector<608x32xbf16>
    %cst_108 = arith.constant dense<0.000000e+00> : vector<16x32xf32>
    %211 = tpu.matmul %208, %210, %cst_108 {dimension_numbers = #tpu.dot_dimension_numbers<[1], [0], [0], [1], [0, 0, 1, 1], [], []>} : vector<16x608xbf16>, vector<608x32xbf16>, vector<16x32xf32> -> vector<16x32xf32>
    %c1_109 = arith.constant 1 : index
    %c0_110 = arith.constant 0 : index
    %c0_111 = arith.constant 0 : index
    %212 = vector.load %arg6[%c1_109, %c0_110, %c0_111] : memref<5x1x32xf32, #tpu.memory_space<vmem>>, vector<1x1x32xf32>
    %213 = vector.shape_cast %212 : vector<1x1x32xf32> to vector<1x32xf32>
    %214 = vector.broadcast %213 : vector<1x32xf32> to vector<16x32xf32>
    %215 = arith.addf %211, %214 : vector<16x32xf32>
    %cst_112 = arith.constant 0.000000e+00 : f32
    %216 = vector.broadcast %cst_112 : f32 to vector<16x32xf32>
    %217 = arith.maximumf %215, %216 : vector<16x32xf32>
    %218 = tpu.concatenate %9, %217, %9 in 0 : vector<16x32xf32>, vector<16x32xf32>, vector<16x32xf32> -> vector<48x32xf32>
    %219 = vector.extract_strided_slice %218 {offsets = [13, 0], sizes = [16, 32], strides = [1, 1]} : vector<48x32xf32> to vector<16x32xf32>
    %c0_113 = arith.constant 0 : index
    %c0_114 = arith.constant 0 : index
    %c0_115 = arith.constant 0 : index
    %220 = vector.load %arg2[%c0_113, %c0_114, %c0_115] : memref<19x16x1xf32, #tpu.memory_space<vmem>>, vector<1x16x1xf32>
    %221 = vector.shape_cast %220 : vector<1x16x1xf32> to vector<16x1xf32>
    %222 = vector.broadcast %221 : vector<16x1xf32> to vector<16x32xf32>
    %223 = arith.mulf %219, %222 : vector<16x32xf32>
    %224 = vector.extract_strided_slice %218 {offsets = [4, 0], sizes = [16, 32], strides = [1, 1]} : vector<48x32xf32> to vector<16x32xf32>
    %c1_116 = arith.constant 1 : index
    %c0_117 = arith.constant 0 : index
    %c0_118 = arith.constant 0 : index
    %225 = vector.load %arg2[%c1_116, %c0_117, %c0_118] : memref<19x16x1xf32, #tpu.memory_space<vmem>>, vector<1x16x1xf32>
    %226 = vector.shape_cast %225 : vector<1x16x1xf32> to vector<16x1xf32>
    %227 = vector.broadcast %226 : vector<16x1xf32> to vector<16x32xf32>
    %228 = arith.mulf %224, %227 : vector<16x32xf32>
    %229 = vector.extract_strided_slice %218 {offsets = [7, 0], sizes = [16, 32], strides = [1, 1]} : vector<48x32xf32> to vector<16x32xf32>
    %c2_119 = arith.constant 2 : index
    %c0_120 = arith.constant 0 : index
    %c0_121 = arith.constant 0 : index
    %230 = vector.load %arg2[%c2_119, %c0_120, %c0_121] : memref<19x16x1xf32, #tpu.memory_space<vmem>>, vector<1x16x1xf32>
    %231 = vector.shape_cast %230 : vector<1x16x1xf32> to vector<16x1xf32>
    %232 = vector.broadcast %231 : vector<16x1xf32> to vector<16x32xf32>
    %233 = arith.mulf %229, %232 : vector<16x32xf32>
    %234 = vector.extract_strided_slice %218 {offsets = [14, 0], sizes = [16, 32], strides = [1, 1]} : vector<48x32xf32> to vector<16x32xf32>
    %c3_122 = arith.constant 3 : index
    %c0_123 = arith.constant 0 : index
    %c0_124 = arith.constant 0 : index
    %235 = vector.load %arg2[%c3_122, %c0_123, %c0_124] : memref<19x16x1xf32, #tpu.memory_space<vmem>>, vector<1x16x1xf32>
    %236 = vector.shape_cast %235 : vector<1x16x1xf32> to vector<16x1xf32>
    %237 = vector.broadcast %236 : vector<16x1xf32> to vector<16x32xf32>
    %238 = arith.mulf %234, %237 : vector<16x32xf32>
    %239 = vector.extract_strided_slice %218 {offsets = [8, 0], sizes = [16, 32], strides = [1, 1]} : vector<48x32xf32> to vector<16x32xf32>
    %c4_125 = arith.constant 4 : index
    %c0_126 = arith.constant 0 : index
    %c0_127 = arith.constant 0 : index
    %240 = vector.load %arg2[%c4_125, %c0_126, %c0_127] : memref<19x16x1xf32, #tpu.memory_space<vmem>>, vector<1x16x1xf32>
    %241 = vector.shape_cast %240 : vector<1x16x1xf32> to vector<16x1xf32>
    %242 = vector.broadcast %241 : vector<16x1xf32> to vector<16x32xf32>
    %243 = arith.mulf %239, %242 : vector<16x32xf32>
    %244 = vector.extract_strided_slice %218 {offsets = [10, 0], sizes = [16, 32], strides = [1, 1]} : vector<48x32xf32> to vector<16x32xf32>
    %c5_128 = arith.constant 5 : index
    %c0_129 = arith.constant 0 : index
    %c0_130 = arith.constant 0 : index
    %245 = vector.load %arg2[%c5_128, %c0_129, %c0_130] : memref<19x16x1xf32, #tpu.memory_space<vmem>>, vector<1x16x1xf32>
    %246 = vector.shape_cast %245 : vector<1x16x1xf32> to vector<16x1xf32>
    %247 = vector.broadcast %246 : vector<16x1xf32> to vector<16x32xf32>
    %248 = arith.mulf %244, %247 : vector<16x32xf32>
    %249 = vector.extract_strided_slice %218 {offsets = [15, 0], sizes = [16, 32], strides = [1, 1]} : vector<48x32xf32> to vector<16x32xf32>
    %c6_131 = arith.constant 6 : index
    %c0_132 = arith.constant 0 : index
    %c0_133 = arith.constant 0 : index
    %250 = vector.load %arg2[%c6_131, %c0_132, %c0_133] : memref<19x16x1xf32, #tpu.memory_space<vmem>>, vector<1x16x1xf32>
    %251 = vector.shape_cast %250 : vector<1x16x1xf32> to vector<16x1xf32>
    %252 = vector.broadcast %251 : vector<16x1xf32> to vector<16x32xf32>
    %253 = arith.mulf %249, %252 : vector<16x32xf32>
    %254 = vector.extract_strided_slice %218 {offsets = [12, 0], sizes = [16, 32], strides = [1, 1]} : vector<48x32xf32> to vector<16x32xf32>
    %c7_134 = arith.constant 7 : index
    %c0_135 = arith.constant 0 : index
    %c0_136 = arith.constant 0 : index
    %255 = vector.load %arg2[%c7_134, %c0_135, %c0_136] : memref<19x16x1xf32, #tpu.memory_space<vmem>>, vector<1x16x1xf32>
    %256 = vector.shape_cast %255 : vector<1x16x1xf32> to vector<16x1xf32>
    %257 = vector.broadcast %256 : vector<16x1xf32> to vector<16x32xf32>
    %258 = arith.mulf %254, %257 : vector<16x32xf32>
    %259 = vector.extract_strided_slice %218 {offsets = [13, 0], sizes = [16, 32], strides = [1, 1]} : vector<48x32xf32> to vector<16x32xf32>
    %c8_137 = arith.constant 8 : index
    %c0_138 = arith.constant 0 : index
    %c0_139 = arith.constant 0 : index
    %260 = vector.load %arg2[%c8_137, %c0_138, %c0_139] : memref<19x16x1xf32, #tpu.memory_space<vmem>>, vector<1x16x1xf32>
    %261 = vector.shape_cast %260 : vector<1x16x1xf32> to vector<16x1xf32>
    %262 = vector.broadcast %261 : vector<16x1xf32> to vector<16x32xf32>
    %263 = arith.mulf %259, %262 : vector<16x32xf32>
    %264 = vector.extract_strided_slice %218 {offsets = [16, 0], sizes = [16, 32], strides = [1, 1]} : vector<48x32xf32> to vector<16x32xf32>
    %265 = vector.extract_strided_slice %218 {offsets = [17, 0], sizes = [16, 32], strides = [1, 1]} : vector<48x32xf32> to vector<16x32xf32>
    %c10_140 = arith.constant 10 : index
    %c0_141 = arith.constant 0 : index
    %c0_142 = arith.constant 0 : index
    %266 = vector.load %arg2[%c10_140, %c0_141, %c0_142] : memref<19x16x1xf32, #tpu.memory_space<vmem>>, vector<1x16x1xf32>
    %267 = vector.shape_cast %266 : vector<1x16x1xf32> to vector<16x1xf32>
    %268 = vector.broadcast %267 : vector<16x1xf32> to vector<16x32xf32>
    %269 = arith.mulf %265, %268 : vector<16x32xf32>
    %270 = vector.extract_strided_slice %218 {offsets = [20, 0], sizes = [16, 32], strides = [1, 1]} : vector<48x32xf32> to vector<16x32xf32>
    %c11_143 = arith.constant 11 : index
    %c0_144 = arith.constant 0 : index
    %c0_145 = arith.constant 0 : index
    %271 = vector.load %arg2[%c11_143, %c0_144, %c0_145] : memref<19x16x1xf32, #tpu.memory_space<vmem>>, vector<1x16x1xf32>
    %272 = vector.shape_cast %271 : vector<1x16x1xf32> to vector<16x1xf32>
    %273 = vector.broadcast %272 : vector<16x1xf32> to vector<16x32xf32>
    %274 = arith.mulf %270, %273 : vector<16x32xf32>
    %275 = vector.extract_strided_slice %218 {offsets = [19, 0], sizes = [16, 32], strides = [1, 1]} : vector<48x32xf32> to vector<16x32xf32>
    %c12_146 = arith.constant 12 : index
    %c0_147 = arith.constant 0 : index
    %c0_148 = arith.constant 0 : index
    %276 = vector.load %arg2[%c12_146, %c0_147, %c0_148] : memref<19x16x1xf32, #tpu.memory_space<vmem>>, vector<1x16x1xf32>
    %277 = vector.shape_cast %276 : vector<1x16x1xf32> to vector<16x1xf32>
    %278 = vector.broadcast %277 : vector<16x1xf32> to vector<16x32xf32>
    %279 = arith.mulf %275, %278 : vector<16x32xf32>
    %280 = vector.extract_strided_slice %218 {offsets = [18, 0], sizes = [16, 32], strides = [1, 1]} : vector<48x32xf32> to vector<16x32xf32>
    %c13_149 = arith.constant 13 : index
    %c0_150 = arith.constant 0 : index
    %c0_151 = arith.constant 0 : index
    %281 = vector.load %arg2[%c13_149, %c0_150, %c0_151] : memref<19x16x1xf32, #tpu.memory_space<vmem>>, vector<1x16x1xf32>
    %282 = vector.shape_cast %281 : vector<1x16x1xf32> to vector<16x1xf32>
    %283 = vector.broadcast %282 : vector<16x1xf32> to vector<16x32xf32>
    %284 = arith.mulf %280, %283 : vector<16x32xf32>
    %285 = vector.extract_strided_slice %218 {offsets = [24, 0], sizes = [16, 32], strides = [1, 1]} : vector<48x32xf32> to vector<16x32xf32>
    %c14_152 = arith.constant 14 : index
    %c0_153 = arith.constant 0 : index
    %c0_154 = arith.constant 0 : index
    %286 = vector.load %arg2[%c14_152, %c0_153, %c0_154] : memref<19x16x1xf32, #tpu.memory_space<vmem>>, vector<1x16x1xf32>
    %287 = vector.shape_cast %286 : vector<1x16x1xf32> to vector<16x1xf32>
    %288 = vector.broadcast %287 : vector<16x1xf32> to vector<16x32xf32>
    %289 = arith.mulf %285, %288 : vector<16x32xf32>
    %290 = vector.extract_strided_slice %218 {offsets = [22, 0], sizes = [16, 32], strides = [1, 1]} : vector<48x32xf32> to vector<16x32xf32>
    %c15_155 = arith.constant 15 : index
    %c0_156 = arith.constant 0 : index
    %c0_157 = arith.constant 0 : index
    %291 = vector.load %arg2[%c15_155, %c0_156, %c0_157] : memref<19x16x1xf32, #tpu.memory_space<vmem>>, vector<1x16x1xf32>
    %292 = vector.shape_cast %291 : vector<1x16x1xf32> to vector<16x1xf32>
    %293 = vector.broadcast %292 : vector<16x1xf32> to vector<16x32xf32>
    %294 = arith.mulf %290, %293 : vector<16x32xf32>
    %295 = vector.extract_strided_slice %218 {offsets = [19, 0], sizes = [16, 32], strides = [1, 1]} : vector<48x32xf32> to vector<16x32xf32>
    %c16_158 = arith.constant 16 : index
    %c0_159 = arith.constant 0 : index
    %c0_160 = arith.constant 0 : index
    %296 = vector.load %arg2[%c16_158, %c0_159, %c0_160] : memref<19x16x1xf32, #tpu.memory_space<vmem>>, vector<1x16x1xf32>
    %297 = vector.shape_cast %296 : vector<1x16x1xf32> to vector<16x1xf32>
    %298 = vector.broadcast %297 : vector<16x1xf32> to vector<16x32xf32>
    %299 = arith.mulf %295, %298 : vector<16x32xf32>
    %300 = vector.extract_strided_slice %218 {offsets = [28, 0], sizes = [16, 32], strides = [1, 1]} : vector<48x32xf32> to vector<16x32xf32>
    %c17_161 = arith.constant 17 : index
    %c0_162 = arith.constant 0 : index
    %c0_163 = arith.constant 0 : index
    %301 = vector.load %arg2[%c17_161, %c0_162, %c0_163] : memref<19x16x1xf32, #tpu.memory_space<vmem>>, vector<1x16x1xf32>
    %302 = vector.shape_cast %301 : vector<1x16x1xf32> to vector<16x1xf32>
    %303 = vector.broadcast %302 : vector<16x1xf32> to vector<16x32xf32>
    %304 = arith.mulf %300, %303 : vector<16x32xf32>
    %305 = vector.extract_strided_slice %218 {offsets = [25, 0], sizes = [16, 32], strides = [1, 1]} : vector<48x32xf32> to vector<16x32xf32>
    %c18_164 = arith.constant 18 : index
    %c0_165 = arith.constant 0 : index
    %c0_166 = arith.constant 0 : index
    %306 = vector.load %arg2[%c18_164, %c0_165, %c0_166] : memref<19x16x1xf32, #tpu.memory_space<vmem>>, vector<1x16x1xf32>
    %307 = vector.shape_cast %306 : vector<1x16x1xf32> to vector<16x1xf32>
    %308 = vector.broadcast %307 : vector<16x1xf32> to vector<16x32xf32>
    %309 = arith.mulf %305, %308 : vector<16x32xf32>
    %310 = tpu.concatenate %223, %228, %233, %238, %243, %248, %253, %258, %263, %264, %269, %274, %279, %284, %289, %294 in 1 : vector<16x32xf32>, vector<16x32xf32>, vector<16x32xf32>, vector<16x32xf32>, vector<16x32xf32>, vector<16x32xf32>, vector<16x32xf32>, vector<16x32xf32>, vector<16x32xf32>, vector<16x32xf32>, vector<16x32xf32>, vector<16x32xf32>, vector<16x32xf32>, vector<16x32xf32>, vector<16x32xf32>, vector<16x32xf32> -> vector<16x512xf32>
    %311 = tpu.concatenate %299, %304, %309 in 1 : vector<16x32xf32>, vector<16x32xf32>, vector<16x32xf32> -> vector<16x96xf32>
    %312 = tpu.concatenate %310, %311 in 1 : vector<16x512xf32>, vector<16x96xf32> -> vector<16x608xf32>
    %313 = arith.truncf %312 : vector<16x608xf32> to vector<16x608xbf16>
    %c2_167 = arith.constant 2 : index
    %c0_168 = arith.constant 0 : index
    %c0_169 = arith.constant 0 : index
    %314 = vector.load %arg5[%c2_167, %c0_168, %c0_169] : memref<5x608x32xbf16, #tpu.memory_space<vmem>>, vector<1x608x32xbf16>
    %315 = vector.shape_cast %314 : vector<1x608x32xbf16> to vector<608x32xbf16>
    %cst_170 = arith.constant dense<0.000000e+00> : vector<16x32xf32>
    %316 = tpu.matmul %313, %315, %cst_170 {dimension_numbers = #tpu.dot_dimension_numbers<[1], [0], [0], [1], [0, 0, 1, 1], [], []>} : vector<16x608xbf16>, vector<608x32xbf16>, vector<16x32xf32> -> vector<16x32xf32>
    %c2_171 = arith.constant 2 : index
    %c0_172 = arith.constant 0 : index
    %c0_173 = arith.constant 0 : index
    %317 = vector.load %arg6[%c2_171, %c0_172, %c0_173] : memref<5x1x32xf32, #tpu.memory_space<vmem>>, vector<1x1x32xf32>
    %318 = vector.shape_cast %317 : vector<1x1x32xf32> to vector<1x32xf32>
    %319 = vector.broadcast %318 : vector<1x32xf32> to vector<16x32xf32>
    %320 = arith.addf %316, %319 : vector<16x32xf32>
    %321 = arith.addf %112, %320 : vector<16x32xf32>
    %322 = tpu.concatenate %9, %321, %9 in 0 : vector<16x32xf32>, vector<16x32xf32>, vector<16x32xf32> -> vector<48x32xf32>
    %323 = vector.extract_strided_slice %322 {offsets = [13, 0], sizes = [16, 32], strides = [1, 1]} : vector<48x32xf32> to vector<16x32xf32>
    %c0_174 = arith.constant 0 : index
    %c0_175 = arith.constant 0 : index
    %c0_176 = arith.constant 0 : index
    %324 = vector.load %arg2[%c0_174, %c0_175, %c0_176] : memref<19x16x1xf32, #tpu.memory_space<vmem>>, vector<1x16x1xf32>
    %325 = vector.shape_cast %324 : vector<1x16x1xf32> to vector<16x1xf32>
    %326 = vector.broadcast %325 : vector<16x1xf32> to vector<16x32xf32>
    %327 = arith.mulf %323, %326 : vector<16x32xf32>
    %328 = vector.extract_strided_slice %322 {offsets = [4, 0], sizes = [16, 32], strides = [1, 1]} : vector<48x32xf32> to vector<16x32xf32>
    %c1_177 = arith.constant 1 : index
    %c0_178 = arith.constant 0 : index
    %c0_179 = arith.constant 0 : index
    %329 = vector.load %arg2[%c1_177, %c0_178, %c0_179] : memref<19x16x1xf32, #tpu.memory_space<vmem>>, vector<1x16x1xf32>
    %330 = vector.shape_cast %329 : vector<1x16x1xf32> to vector<16x1xf32>
    %331 = vector.broadcast %330 : vector<16x1xf32> to vector<16x32xf32>
    %332 = arith.mulf %328, %331 : vector<16x32xf32>
    %333 = vector.extract_strided_slice %322 {offsets = [7, 0], sizes = [16, 32], strides = [1, 1]} : vector<48x32xf32> to vector<16x32xf32>
    %c2_180 = arith.constant 2 : index
    %c0_181 = arith.constant 0 : index
    %c0_182 = arith.constant 0 : index
    %334 = vector.load %arg2[%c2_180, %c0_181, %c0_182] : memref<19x16x1xf32, #tpu.memory_space<vmem>>, vector<1x16x1xf32>
    %335 = vector.shape_cast %334 : vector<1x16x1xf32> to vector<16x1xf32>
    %336 = vector.broadcast %335 : vector<16x1xf32> to vector<16x32xf32>
    %337 = arith.mulf %333, %336 : vector<16x32xf32>
    %338 = vector.extract_strided_slice %322 {offsets = [14, 0], sizes = [16, 32], strides = [1, 1]} : vector<48x32xf32> to vector<16x32xf32>
    %c3_183 = arith.constant 3 : index
    %c0_184 = arith.constant 0 : index
    %c0_185 = arith.constant 0 : index
    %339 = vector.load %arg2[%c3_183, %c0_184, %c0_185] : memref<19x16x1xf32, #tpu.memory_space<vmem>>, vector<1x16x1xf32>
    %340 = vector.shape_cast %339 : vector<1x16x1xf32> to vector<16x1xf32>
    %341 = vector.broadcast %340 : vector<16x1xf32> to vector<16x32xf32>
    %342 = arith.mulf %338, %341 : vector<16x32xf32>
    %343 = vector.extract_strided_slice %322 {offsets = [8, 0], sizes = [16, 32], strides = [1, 1]} : vector<48x32xf32> to vector<16x32xf32>
    %c4_186 = arith.constant 4 : index
    %c0_187 = arith.constant 0 : index
    %c0_188 = arith.constant 0 : index
    %344 = vector.load %arg2[%c4_186, %c0_187, %c0_188] : memref<19x16x1xf32, #tpu.memory_space<vmem>>, vector<1x16x1xf32>
    %345 = vector.shape_cast %344 : vector<1x16x1xf32> to vector<16x1xf32>
    %346 = vector.broadcast %345 : vector<16x1xf32> to vector<16x32xf32>
    %347 = arith.mulf %343, %346 : vector<16x32xf32>
    %348 = vector.extract_strided_slice %322 {offsets = [10, 0], sizes = [16, 32], strides = [1, 1]} : vector<48x32xf32> to vector<16x32xf32>
    %c5_189 = arith.constant 5 : index
    %c0_190 = arith.constant 0 : index
    %c0_191 = arith.constant 0 : index
    %349 = vector.load %arg2[%c5_189, %c0_190, %c0_191] : memref<19x16x1xf32, #tpu.memory_space<vmem>>, vector<1x16x1xf32>
    %350 = vector.shape_cast %349 : vector<1x16x1xf32> to vector<16x1xf32>
    %351 = vector.broadcast %350 : vector<16x1xf32> to vector<16x32xf32>
    %352 = arith.mulf %348, %351 : vector<16x32xf32>
    %353 = vector.extract_strided_slice %322 {offsets = [15, 0], sizes = [16, 32], strides = [1, 1]} : vector<48x32xf32> to vector<16x32xf32>
    %c6_192 = arith.constant 6 : index
    %c0_193 = arith.constant 0 : index
    %c0_194 = arith.constant 0 : index
    %354 = vector.load %arg2[%c6_192, %c0_193, %c0_194] : memref<19x16x1xf32, #tpu.memory_space<vmem>>, vector<1x16x1xf32>
    %355 = vector.shape_cast %354 : vector<1x16x1xf32> to vector<16x1xf32>
    %356 = vector.broadcast %355 : vector<16x1xf32> to vector<16x32xf32>
    %357 = arith.mulf %353, %356 : vector<16x32xf32>
    %358 = vector.extract_strided_slice %322 {offsets = [12, 0], sizes = [16, 32], strides = [1, 1]} : vector<48x32xf32> to vector<16x32xf32>
    %c7_195 = arith.constant 7 : index
    %c0_196 = arith.constant 0 : index
    %c0_197 = arith.constant 0 : index
    %359 = vector.load %arg2[%c7_195, %c0_196, %c0_197] : memref<19x16x1xf32, #tpu.memory_space<vmem>>, vector<1x16x1xf32>
    %360 = vector.shape_cast %359 : vector<1x16x1xf32> to vector<16x1xf32>
    %361 = vector.broadcast %360 : vector<16x1xf32> to vector<16x32xf32>
    %362 = arith.mulf %358, %361 : vector<16x32xf32>
    %363 = vector.extract_strided_slice %322 {offsets = [13, 0], sizes = [16, 32], strides = [1, 1]} : vector<48x32xf32> to vector<16x32xf32>
    %c8_198 = arith.constant 8 : index
    %c0_199 = arith.constant 0 : index
    %c0_200 = arith.constant 0 : index
    %364 = vector.load %arg2[%c8_198, %c0_199, %c0_200] : memref<19x16x1xf32, #tpu.memory_space<vmem>>, vector<1x16x1xf32>
    %365 = vector.shape_cast %364 : vector<1x16x1xf32> to vector<16x1xf32>
    %366 = vector.broadcast %365 : vector<16x1xf32> to vector<16x32xf32>
    %367 = arith.mulf %363, %366 : vector<16x32xf32>
    %368 = vector.extract_strided_slice %322 {offsets = [16, 0], sizes = [16, 32], strides = [1, 1]} : vector<48x32xf32> to vector<16x32xf32>
    %369 = vector.extract_strided_slice %322 {offsets = [17, 0], sizes = [16, 32], strides = [1, 1]} : vector<48x32xf32> to vector<16x32xf32>
    %c10_201 = arith.constant 10 : index
    %c0_202 = arith.constant 0 : index
    %c0_203 = arith.constant 0 : index
    %370 = vector.load %arg2[%c10_201, %c0_202, %c0_203] : memref<19x16x1xf32, #tpu.memory_space<vmem>>, vector<1x16x1xf32>
    %371 = vector.shape_cast %370 : vector<1x16x1xf32> to vector<16x1xf32>
    %372 = vector.broadcast %371 : vector<16x1xf32> to vector<16x32xf32>
    %373 = arith.mulf %369, %372 : vector<16x32xf32>
    %374 = vector.extract_strided_slice %322 {offsets = [20, 0], sizes = [16, 32], strides = [1, 1]} : vector<48x32xf32> to vector<16x32xf32>
    %c11_204 = arith.constant 11 : index
    %c0_205 = arith.constant 0 : index
    %c0_206 = arith.constant 0 : index
    %375 = vector.load %arg2[%c11_204, %c0_205, %c0_206] : memref<19x16x1xf32, #tpu.memory_space<vmem>>, vector<1x16x1xf32>
    %376 = vector.shape_cast %375 : vector<1x16x1xf32> to vector<16x1xf32>
    %377 = vector.broadcast %376 : vector<16x1xf32> to vector<16x32xf32>
    %378 = arith.mulf %374, %377 : vector<16x32xf32>
    %379 = vector.extract_strided_slice %322 {offsets = [19, 0], sizes = [16, 32], strides = [1, 1]} : vector<48x32xf32> to vector<16x32xf32>
    %c12_207 = arith.constant 12 : index
    %c0_208 = arith.constant 0 : index
    %c0_209 = arith.constant 0 : index
    %380 = vector.load %arg2[%c12_207, %c0_208, %c0_209] : memref<19x16x1xf32, #tpu.memory_space<vmem>>, vector<1x16x1xf32>
    %381 = vector.shape_cast %380 : vector<1x16x1xf32> to vector<16x1xf32>
    %382 = vector.broadcast %381 : vector<16x1xf32> to vector<16x32xf32>
    %383 = arith.mulf %379, %382 : vector<16x32xf32>
    %384 = vector.extract_strided_slice %322 {offsets = [18, 0], sizes = [16, 32], strides = [1, 1]} : vector<48x32xf32> to vector<16x32xf32>
    %c13_210 = arith.constant 13 : index
    %c0_211 = arith.constant 0 : index
    %c0_212 = arith.constant 0 : index
    %385 = vector.load %arg2[%c13_210, %c0_211, %c0_212] : memref<19x16x1xf32, #tpu.memory_space<vmem>>, vector<1x16x1xf32>
    %386 = vector.shape_cast %385 : vector<1x16x1xf32> to vector<16x1xf32>
    %387 = vector.broadcast %386 : vector<16x1xf32> to vector<16x32xf32>
    %388 = arith.mulf %384, %387 : vector<16x32xf32>
    %389 = vector.extract_strided_slice %322 {offsets = [24, 0], sizes = [16, 32], strides = [1, 1]} : vector<48x32xf32> to vector<16x32xf32>
    %c14_213 = arith.constant 14 : index
    %c0_214 = arith.constant 0 : index
    %c0_215 = arith.constant 0 : index
    %390 = vector.load %arg2[%c14_213, %c0_214, %c0_215] : memref<19x16x1xf32, #tpu.memory_space<vmem>>, vector<1x16x1xf32>
    %391 = vector.shape_cast %390 : vector<1x16x1xf32> to vector<16x1xf32>
    %392 = vector.broadcast %391 : vector<16x1xf32> to vector<16x32xf32>
    %393 = arith.mulf %389, %392 : vector<16x32xf32>
    %394 = vector.extract_strided_slice %322 {offsets = [22, 0], sizes = [16, 32], strides = [1, 1]} : vector<48x32xf32> to vector<16x32xf32>
    %c15_216 = arith.constant 15 : index
    %c0_217 = arith.constant 0 : index
    %c0_218 = arith.constant 0 : index
    %395 = vector.load %arg2[%c15_216, %c0_217, %c0_218] : memref<19x16x1xf32, #tpu.memory_space<vmem>>, vector<1x16x1xf32>
    %396 = vector.shape_cast %395 : vector<1x16x1xf32> to vector<16x1xf32>
    %397 = vector.broadcast %396 : vector<16x1xf32> to vector<16x32xf32>
    %398 = arith.mulf %394, %397 : vector<16x32xf32>
    %399 = vector.extract_strided_slice %322 {offsets = [19, 0], sizes = [16, 32], strides = [1, 1]} : vector<48x32xf32> to vector<16x32xf32>
    %c16_219 = arith.constant 16 : index
    %c0_220 = arith.constant 0 : index
    %c0_221 = arith.constant 0 : index
    %400 = vector.load %arg2[%c16_219, %c0_220, %c0_221] : memref<19x16x1xf32, #tpu.memory_space<vmem>>, vector<1x16x1xf32>
    %401 = vector.shape_cast %400 : vector<1x16x1xf32> to vector<16x1xf32>
    %402 = vector.broadcast %401 : vector<16x1xf32> to vector<16x32xf32>
    %403 = arith.mulf %399, %402 : vector<16x32xf32>
    %404 = vector.extract_strided_slice %322 {offsets = [28, 0], sizes = [16, 32], strides = [1, 1]} : vector<48x32xf32> to vector<16x32xf32>
    %c17_222 = arith.constant 17 : index
    %c0_223 = arith.constant 0 : index
    %c0_224 = arith.constant 0 : index
    %405 = vector.load %arg2[%c17_222, %c0_223, %c0_224] : memref<19x16x1xf32, #tpu.memory_space<vmem>>, vector<1x16x1xf32>
    %406 = vector.shape_cast %405 : vector<1x16x1xf32> to vector<16x1xf32>
    %407 = vector.broadcast %406 : vector<16x1xf32> to vector<16x32xf32>
    %408 = arith.mulf %404, %407 : vector<16x32xf32>
    %409 = vector.extract_strided_slice %322 {offsets = [25, 0], sizes = [16, 32], strides = [1, 1]} : vector<48x32xf32> to vector<16x32xf32>
    %c18_225 = arith.constant 18 : index
    %c0_226 = arith.constant 0 : index
    %c0_227 = arith.constant 0 : index
    %410 = vector.load %arg2[%c18_225, %c0_226, %c0_227] : memref<19x16x1xf32, #tpu.memory_space<vmem>>, vector<1x16x1xf32>
    %411 = vector.shape_cast %410 : vector<1x16x1xf32> to vector<16x1xf32>
    %412 = vector.broadcast %411 : vector<16x1xf32> to vector<16x32xf32>
    %413 = arith.mulf %409, %412 : vector<16x32xf32>
    %414 = tpu.concatenate %327, %332, %337, %342, %347, %352, %357, %362, %367, %368, %373, %378, %383, %388, %393, %398 in 1 : vector<16x32xf32>, vector<16x32xf32>, vector<16x32xf32>, vector<16x32xf32>, vector<16x32xf32>, vector<16x32xf32>, vector<16x32xf32>, vector<16x32xf32>, vector<16x32xf32>, vector<16x32xf32>, vector<16x32xf32>, vector<16x32xf32>, vector<16x32xf32>, vector<16x32xf32>, vector<16x32xf32>, vector<16x32xf32> -> vector<16x512xf32>
    %415 = tpu.concatenate %403, %408, %413 in 1 : vector<16x32xf32>, vector<16x32xf32>, vector<16x32xf32> -> vector<16x96xf32>
    %416 = tpu.concatenate %414, %415 in 1 : vector<16x512xf32>, vector<16x96xf32> -> vector<16x608xf32>
    %417 = arith.truncf %416 : vector<16x608xf32> to vector<16x608xbf16>
    %c3_228 = arith.constant 3 : index
    %c0_229 = arith.constant 0 : index
    %c0_230 = arith.constant 0 : index
    %418 = vector.load %arg5[%c3_228, %c0_229, %c0_230] : memref<5x608x32xbf16, #tpu.memory_space<vmem>>, vector<1x608x32xbf16>
    %419 = vector.shape_cast %418 : vector<1x608x32xbf16> to vector<608x32xbf16>
    %cst_231 = arith.constant dense<0.000000e+00> : vector<16x32xf32>
    %420 = tpu.matmul %417, %419, %cst_231 {dimension_numbers = #tpu.dot_dimension_numbers<[1], [0], [0], [1], [0, 0, 1, 1], [], []>} : vector<16x608xbf16>, vector<608x32xbf16>, vector<16x32xf32> -> vector<16x32xf32>
    %c3_232 = arith.constant 3 : index
    %c0_233 = arith.constant 0 : index
    %c0_234 = arith.constant 0 : index
    %421 = vector.load %arg6[%c3_232, %c0_233, %c0_234] : memref<5x1x32xf32, #tpu.memory_space<vmem>>, vector<1x1x32xf32>
    %422 = vector.shape_cast %421 : vector<1x1x32xf32> to vector<1x32xf32>
    %423 = vector.broadcast %422 : vector<1x32xf32> to vector<16x32xf32>
    %424 = arith.addf %420, %423 : vector<16x32xf32>
    %cst_235 = arith.constant 0.000000e+00 : f32
    %425 = vector.broadcast %cst_235 : f32 to vector<16x32xf32>
    %426 = arith.maximumf %424, %425 : vector<16x32xf32>
    %427 = tpu.concatenate %9, %426, %9 in 0 : vector<16x32xf32>, vector<16x32xf32>, vector<16x32xf32> -> vector<48x32xf32>
    %428 = vector.extract_strided_slice %427 {offsets = [13, 0], sizes = [16, 32], strides = [1, 1]} : vector<48x32xf32> to vector<16x32xf32>
    %c0_236 = arith.constant 0 : index
    %c0_237 = arith.constant 0 : index
    %c0_238 = arith.constant 0 : index
    %429 = vector.load %arg2[%c0_236, %c0_237, %c0_238] : memref<19x16x1xf32, #tpu.memory_space<vmem>>, vector<1x16x1xf32>
    %430 = vector.shape_cast %429 : vector<1x16x1xf32> to vector<16x1xf32>
    %431 = vector.broadcast %430 : vector<16x1xf32> to vector<16x32xf32>
    %432 = arith.mulf %428, %431 : vector<16x32xf32>
    %433 = vector.extract_strided_slice %427 {offsets = [4, 0], sizes = [16, 32], strides = [1, 1]} : vector<48x32xf32> to vector<16x32xf32>
    %c1_239 = arith.constant 1 : index
    %c0_240 = arith.constant 0 : index
    %c0_241 = arith.constant 0 : index
    %434 = vector.load %arg2[%c1_239, %c0_240, %c0_241] : memref<19x16x1xf32, #tpu.memory_space<vmem>>, vector<1x16x1xf32>
    %435 = vector.shape_cast %434 : vector<1x16x1xf32> to vector<16x1xf32>
    %436 = vector.broadcast %435 : vector<16x1xf32> to vector<16x32xf32>
    %437 = arith.mulf %433, %436 : vector<16x32xf32>
    %438 = vector.extract_strided_slice %427 {offsets = [7, 0], sizes = [16, 32], strides = [1, 1]} : vector<48x32xf32> to vector<16x32xf32>
    %c2_242 = arith.constant 2 : index
    %c0_243 = arith.constant 0 : index
    %c0_244 = arith.constant 0 : index
    %439 = vector.load %arg2[%c2_242, %c0_243, %c0_244] : memref<19x16x1xf32, #tpu.memory_space<vmem>>, vector<1x16x1xf32>
    %440 = vector.shape_cast %439 : vector<1x16x1xf32> to vector<16x1xf32>
    %441 = vector.broadcast %440 : vector<16x1xf32> to vector<16x32xf32>
    %442 = arith.mulf %438, %441 : vector<16x32xf32>
    %443 = vector.extract_strided_slice %427 {offsets = [14, 0], sizes = [16, 32], strides = [1, 1]} : vector<48x32xf32> to vector<16x32xf32>
    %c3_245 = arith.constant 3 : index
    %c0_246 = arith.constant 0 : index
    %c0_247 = arith.constant 0 : index
    %444 = vector.load %arg2[%c3_245, %c0_246, %c0_247] : memref<19x16x1xf32, #tpu.memory_space<vmem>>, vector<1x16x1xf32>
    %445 = vector.shape_cast %444 : vector<1x16x1xf32> to vector<16x1xf32>
    %446 = vector.broadcast %445 : vector<16x1xf32> to vector<16x32xf32>
    %447 = arith.mulf %443, %446 : vector<16x32xf32>
    %448 = vector.extract_strided_slice %427 {offsets = [8, 0], sizes = [16, 32], strides = [1, 1]} : vector<48x32xf32> to vector<16x32xf32>
    %c4_248 = arith.constant 4 : index
    %c0_249 = arith.constant 0 : index
    %c0_250 = arith.constant 0 : index
    %449 = vector.load %arg2[%c4_248, %c0_249, %c0_250] : memref<19x16x1xf32, #tpu.memory_space<vmem>>, vector<1x16x1xf32>
    %450 = vector.shape_cast %449 : vector<1x16x1xf32> to vector<16x1xf32>
    %451 = vector.broadcast %450 : vector<16x1xf32> to vector<16x32xf32>
    %452 = arith.mulf %448, %451 : vector<16x32xf32>
    %453 = vector.extract_strided_slice %427 {offsets = [10, 0], sizes = [16, 32], strides = [1, 1]} : vector<48x32xf32> to vector<16x32xf32>
    %c5_251 = arith.constant 5 : index
    %c0_252 = arith.constant 0 : index
    %c0_253 = arith.constant 0 : index
    %454 = vector.load %arg2[%c5_251, %c0_252, %c0_253] : memref<19x16x1xf32, #tpu.memory_space<vmem>>, vector<1x16x1xf32>
    %455 = vector.shape_cast %454 : vector<1x16x1xf32> to vector<16x1xf32>
    %456 = vector.broadcast %455 : vector<16x1xf32> to vector<16x32xf32>
    %457 = arith.mulf %453, %456 : vector<16x32xf32>
    %458 = vector.extract_strided_slice %427 {offsets = [15, 0], sizes = [16, 32], strides = [1, 1]} : vector<48x32xf32> to vector<16x32xf32>
    %c6_254 = arith.constant 6 : index
    %c0_255 = arith.constant 0 : index
    %c0_256 = arith.constant 0 : index
    %459 = vector.load %arg2[%c6_254, %c0_255, %c0_256] : memref<19x16x1xf32, #tpu.memory_space<vmem>>, vector<1x16x1xf32>
    %460 = vector.shape_cast %459 : vector<1x16x1xf32> to vector<16x1xf32>
    %461 = vector.broadcast %460 : vector<16x1xf32> to vector<16x32xf32>
    %462 = arith.mulf %458, %461 : vector<16x32xf32>
    %463 = vector.extract_strided_slice %427 {offsets = [12, 0], sizes = [16, 32], strides = [1, 1]} : vector<48x32xf32> to vector<16x32xf32>
    %c7_257 = arith.constant 7 : index
    %c0_258 = arith.constant 0 : index
    %c0_259 = arith.constant 0 : index
    %464 = vector.load %arg2[%c7_257, %c0_258, %c0_259] : memref<19x16x1xf32, #tpu.memory_space<vmem>>, vector<1x16x1xf32>
    %465 = vector.shape_cast %464 : vector<1x16x1xf32> to vector<16x1xf32>
    %466 = vector.broadcast %465 : vector<16x1xf32> to vector<16x32xf32>
    %467 = arith.mulf %463, %466 : vector<16x32xf32>
    %468 = vector.extract_strided_slice %427 {offsets = [13, 0], sizes = [16, 32], strides = [1, 1]} : vector<48x32xf32> to vector<16x32xf32>
    %c8_260 = arith.constant 8 : index
    %c0_261 = arith.constant 0 : index
    %c0_262 = arith.constant 0 : index
    %469 = vector.load %arg2[%c8_260, %c0_261, %c0_262] : memref<19x16x1xf32, #tpu.memory_space<vmem>>, vector<1x16x1xf32>
    %470 = vector.shape_cast %469 : vector<1x16x1xf32> to vector<16x1xf32>
    %471 = vector.broadcast %470 : vector<16x1xf32> to vector<16x32xf32>
    %472 = arith.mulf %468, %471 : vector<16x32xf32>
    %473 = vector.extract_strided_slice %427 {offsets = [16, 0], sizes = [16, 32], strides = [1, 1]} : vector<48x32xf32> to vector<16x32xf32>
    %474 = vector.extract_strided_slice %427 {offsets = [17, 0], sizes = [16, 32], strides = [1, 1]} : vector<48x32xf32> to vector<16x32xf32>
    %c10_263 = arith.constant 10 : index
    %c0_264 = arith.constant 0 : index
    %c0_265 = arith.constant 0 : index
    %475 = vector.load %arg2[%c10_263, %c0_264, %c0_265] : memref<19x16x1xf32, #tpu.memory_space<vmem>>, vector<1x16x1xf32>
    %476 = vector.shape_cast %475 : vector<1x16x1xf32> to vector<16x1xf32>
    %477 = vector.broadcast %476 : vector<16x1xf32> to vector<16x32xf32>
    %478 = arith.mulf %474, %477 : vector<16x32xf32>
    %479 = vector.extract_strided_slice %427 {offsets = [20, 0], sizes = [16, 32], strides = [1, 1]} : vector<48x32xf32> to vector<16x32xf32>
    %c11_266 = arith.constant 11 : index
    %c0_267 = arith.constant 0 : index
    %c0_268 = arith.constant 0 : index
    %480 = vector.load %arg2[%c11_266, %c0_267, %c0_268] : memref<19x16x1xf32, #tpu.memory_space<vmem>>, vector<1x16x1xf32>
    %481 = vector.shape_cast %480 : vector<1x16x1xf32> to vector<16x1xf32>
    %482 = vector.broadcast %481 : vector<16x1xf32> to vector<16x32xf32>
    %483 = arith.mulf %479, %482 : vector<16x32xf32>
    %484 = vector.extract_strided_slice %427 {offsets = [19, 0], sizes = [16, 32], strides = [1, 1]} : vector<48x32xf32> to vector<16x32xf32>
    %c12_269 = arith.constant 12 : index
    %c0_270 = arith.constant 0 : index
    %c0_271 = arith.constant 0 : index
    %485 = vector.load %arg2[%c12_269, %c0_270, %c0_271] : memref<19x16x1xf32, #tpu.memory_space<vmem>>, vector<1x16x1xf32>
    %486 = vector.shape_cast %485 : vector<1x16x1xf32> to vector<16x1xf32>
    %487 = vector.broadcast %486 : vector<16x1xf32> to vector<16x32xf32>
    %488 = arith.mulf %484, %487 : vector<16x32xf32>
    %489 = vector.extract_strided_slice %427 {offsets = [18, 0], sizes = [16, 32], strides = [1, 1]} : vector<48x32xf32> to vector<16x32xf32>
    %c13_272 = arith.constant 13 : index
    %c0_273 = arith.constant 0 : index
    %c0_274 = arith.constant 0 : index
    %490 = vector.load %arg2[%c13_272, %c0_273, %c0_274] : memref<19x16x1xf32, #tpu.memory_space<vmem>>, vector<1x16x1xf32>
    %491 = vector.shape_cast %490 : vector<1x16x1xf32> to vector<16x1xf32>
    %492 = vector.broadcast %491 : vector<16x1xf32> to vector<16x32xf32>
    %493 = arith.mulf %489, %492 : vector<16x32xf32>
    %494 = vector.extract_strided_slice %427 {offsets = [24, 0], sizes = [16, 32], strides = [1, 1]} : vector<48x32xf32> to vector<16x32xf32>
    %c14_275 = arith.constant 14 : index
    %c0_276 = arith.constant 0 : index
    %c0_277 = arith.constant 0 : index
    %495 = vector.load %arg2[%c14_275, %c0_276, %c0_277] : memref<19x16x1xf32, #tpu.memory_space<vmem>>, vector<1x16x1xf32>
    %496 = vector.shape_cast %495 : vector<1x16x1xf32> to vector<16x1xf32>
    %497 = vector.broadcast %496 : vector<16x1xf32> to vector<16x32xf32>
    %498 = arith.mulf %494, %497 : vector<16x32xf32>
    %499 = vector.extract_strided_slice %427 {offsets = [22, 0], sizes = [16, 32], strides = [1, 1]} : vector<48x32xf32> to vector<16x32xf32>
    %c15_278 = arith.constant 15 : index
    %c0_279 = arith.constant 0 : index
    %c0_280 = arith.constant 0 : index
    %500 = vector.load %arg2[%c15_278, %c0_279, %c0_280] : memref<19x16x1xf32, #tpu.memory_space<vmem>>, vector<1x16x1xf32>
    %501 = vector.shape_cast %500 : vector<1x16x1xf32> to vector<16x1xf32>
    %502 = vector.broadcast %501 : vector<16x1xf32> to vector<16x32xf32>
    %503 = arith.mulf %499, %502 : vector<16x32xf32>
    %504 = vector.extract_strided_slice %427 {offsets = [19, 0], sizes = [16, 32], strides = [1, 1]} : vector<48x32xf32> to vector<16x32xf32>
    %c16_281 = arith.constant 16 : index
    %c0_282 = arith.constant 0 : index
    %c0_283 = arith.constant 0 : index
    %505 = vector.load %arg2[%c16_281, %c0_282, %c0_283] : memref<19x16x1xf32, #tpu.memory_space<vmem>>, vector<1x16x1xf32>
    %506 = vector.shape_cast %505 : vector<1x16x1xf32> to vector<16x1xf32>
    %507 = vector.broadcast %506 : vector<16x1xf32> to vector<16x32xf32>
    %508 = arith.mulf %504, %507 : vector<16x32xf32>
    %509 = vector.extract_strided_slice %427 {offsets = [28, 0], sizes = [16, 32], strides = [1, 1]} : vector<48x32xf32> to vector<16x32xf32>
    %c17_284 = arith.constant 17 : index
    %c0_285 = arith.constant 0 : index
    %c0_286 = arith.constant 0 : index
    %510 = vector.load %arg2[%c17_284, %c0_285, %c0_286] : memref<19x16x1xf32, #tpu.memory_space<vmem>>, vector<1x16x1xf32>
    %511 = vector.shape_cast %510 : vector<1x16x1xf32> to vector<16x1xf32>
    %512 = vector.broadcast %511 : vector<16x1xf32> to vector<16x32xf32>
    %513 = arith.mulf %509, %512 : vector<16x32xf32>
    %514 = vector.extract_strided_slice %427 {offsets = [25, 0], sizes = [16, 32], strides = [1, 1]} : vector<48x32xf32> to vector<16x32xf32>
    %c18_287 = arith.constant 18 : index
    %c0_288 = arith.constant 0 : index
    %c0_289 = arith.constant 0 : index
    %515 = vector.load %arg2[%c18_287, %c0_288, %c0_289] : memref<19x16x1xf32, #tpu.memory_space<vmem>>, vector<1x16x1xf32>
    %516 = vector.shape_cast %515 : vector<1x16x1xf32> to vector<16x1xf32>
    %517 = vector.broadcast %516 : vector<16x1xf32> to vector<16x32xf32>
    %518 = arith.mulf %514, %517 : vector<16x32xf32>
    %519 = tpu.concatenate %432, %437, %442, %447, %452, %457, %462, %467, %472, %473, %478, %483, %488, %493, %498, %503 in 1 : vector<16x32xf32>, vector<16x32xf32>, vector<16x32xf32>, vector<16x32xf32>, vector<16x32xf32>, vector<16x32xf32>, vector<16x32xf32>, vector<16x32xf32>, vector<16x32xf32>, vector<16x32xf32>, vector<16x32xf32>, vector<16x32xf32>, vector<16x32xf32>, vector<16x32xf32>, vector<16x32xf32>, vector<16x32xf32> -> vector<16x512xf32>
    %520 = tpu.concatenate %508, %513, %518 in 1 : vector<16x32xf32>, vector<16x32xf32>, vector<16x32xf32> -> vector<16x96xf32>
    %521 = tpu.concatenate %519, %520 in 1 : vector<16x512xf32>, vector<16x96xf32> -> vector<16x608xf32>
    %522 = arith.truncf %521 : vector<16x608xf32> to vector<16x608xbf16>
    %c4_290 = arith.constant 4 : index
    %c0_291 = arith.constant 0 : index
    %c0_292 = arith.constant 0 : index
    %523 = vector.load %arg5[%c4_290, %c0_291, %c0_292] : memref<5x608x32xbf16, #tpu.memory_space<vmem>>, vector<1x608x32xbf16>
    %524 = vector.shape_cast %523 : vector<1x608x32xbf16> to vector<608x32xbf16>
    %cst_293 = arith.constant dense<0.000000e+00> : vector<16x32xf32>
    %525 = tpu.matmul %522, %524, %cst_293 {dimension_numbers = #tpu.dot_dimension_numbers<[1], [0], [0], [1], [0, 0, 1, 1], [], []>} : vector<16x608xbf16>, vector<608x32xbf16>, vector<16x32xf32> -> vector<16x32xf32>
    %c4_294 = arith.constant 4 : index
    %c0_295 = arith.constant 0 : index
    %c0_296 = arith.constant 0 : index
    %526 = vector.load %arg6[%c4_294, %c0_295, %c0_296] : memref<5x1x32xf32, #tpu.memory_space<vmem>>, vector<1x1x32xf32>
    %527 = vector.shape_cast %526 : vector<1x1x32xf32> to vector<1x32xf32>
    %528 = vector.broadcast %527 : vector<1x32xf32> to vector<16x32xf32>
    %529 = arith.addf %525, %528 : vector<16x32xf32>
    %530 = arith.addf %321, %529 : vector<16x32xf32>
    %c0_297 = arith.constant 0 : index
    %c0_298 = arith.constant 0 : index
    %531 = vector.load %arg7[%c0_297, %c0_298] : memref<16x32xf32, #tpu.memory_space<vmem>>, vector<16x32xf32>
    tpu.vector_store %arg7[%c0_297, %c0_298], %530 {strides = array<i32>} : memref<16x32xf32, #tpu.memory_space<vmem>>, vector<16x32xf32>,
    return
  }
  func.func @transform_0(%arg0: i32) -> (i32, i32) {
    %c0_i32 = arith.constant 0 : i32
    %c0_i32_0 = arith.constant 0 : i32
    return %arg0, %c0_i32 : i32, i32
  }
  func.func @transform_1(%arg0: i32) -> (i32, i32, i32) {
    %c0_i32 = arith.constant 0 : i32
    %c0_i32_0 = arith.constant 0 : i32
    %c0_i32_1 = arith.constant 0 : i32
    %c0_i32_2 = arith.constant 0 : i32
    return %c0_i32, %c0_i32_0, %c0_i32_1 : i32, i32, i32
  }
  func.func @transform_2(%arg0: i32) -> (i32, i32) {
    %c0_i32 = arith.constant 0 : i32
    %c0_i32_0 = arith.constant 0 : i32
    %c0_i32_1 = arith.constant 0 : i32
    return %c0_i32, %c0_i32_0 : i32, i32
  }
  func.func @transform_3(%arg0: i32) -> (i32, i32) {
    %c0_i32 = arith.constant 0 : i32
    %c0_i32_0 = arith.constant 0 : i32
    %c0_i32_1 = arith.constant 0 : i32
    return %c0_i32, %c0_i32_0 : i32, i32
  }
  func.func @transform_4(%arg0: i32) -> (i32, i32, i32) {
    %c0_i32 = arith.constant 0 : i32
    %c0_i32_0 = arith.constant 0 : i32
    %c0_i32_1 = arith.constant 0 : i32
    %c0_i32_2 = arith.constant 0 : i32
    return %c0_i32, %c0_i32_0, %c0_i32_1 : i32, i32, i32
  }
  func.func @transform_5(%arg0: i32) -> (i32, i32, i32) {
    %c0_i32 = arith.constant 0 : i32
    %c0_i32_0 = arith.constant 0 : i32
    %c0_i32_1 = arith.constant 0 : i32
    %c0_i32_2 = arith.constant 0 : i32
    return %c0_i32, %c0_i32_0, %c0_i32_1 : i32, i32, i32
  }
  func.func @transform_6(%arg0: i32) -> (i32, i32) {
    %c0_i32 = arith.constant 0 : i32
    %c0_i32_0 = arith.constant 0 : i32
    return %arg0, %c0_i32 : i32, i32
  }
}

</mosaic_0001>

<llo_original>
// kernel: roadnet_forward.1
$region0: #{roadnet_forward.1}
  #allocation0 [shape = 'u32[]', space=smem, size = 0x4, offset = 0x4, fixed_abs, tag = 'smem constant byte address 0x4 - core index']
  #allocation1 [shape = 'u32[144,128]{1,0:T(1,128)}', space=vmem, size = 0x12000, scoped, tag = 'internal scratch']
  %s0 = inlined_call_operand.vmem [shape: f32[32,16], index: 0, kind: input, shape index: {}]
  %s1 = inlined_call_operand.vmem [shape: f32[19,16,1], index: 1, kind: input, shape index: {}]
  %s2 = inlined_call_operand.vmem [shape: bf16[16,32], index: 2, kind: input, shape index: {}]
  %s3 = inlined_call_operand.vmem [shape: f32[1,32], index: 3, kind: input, shape index: {}]
  %s4 = inlined_call_operand.vmem [shape: bf16[5,608,32], index: 4, kind: input, shape index: {}]
  %s5 = inlined_call_operand.vmem [shape: f32[5,1,32], index: 5, kind: input, shape index: {}]
  %s6 = inlined_call_operand.hbm [shape: f32[32,32], index: 6, kind: output, shape index: {}]
  %s7 = sld [smem:[#allocation0]]
  $region57: #{roadnet_forward.1} parent=0
    _
  %s9 = ssub.s32 1, %s7
  %s10 = scalar_select 0, %s9, %s7
  $region1: #{roadnet_forward.1} parent=0
    #allocation2 [shape = 'u8[16384]{0}', space=vmem, size = 0x4000, scoped, tag = 'output window, operand 0']
    #allocation3 [shape = 's32[2]{0}', space=sflag, size = 0x8, scoped, tag = 'scoped memory for roadnet_forward.1']
    %11 = vsyncpa [#allocation3], 0
    %s12 = scalar_lea.sflag [#allocation3], 1
    %13 = vsyncpa %s12, 0
    loop: start=0, step=1, limit=4
    $region2: #{roadnet_forward.1} parent=1 // loop_pre_header
      _
    $region3: #{roadnet_forward.1} parent=1 // loop_header
      %s15 = sphi 0, %s19
      %p16 = scmp.ge.s32.totalorder %s15, 4
      %s25 = sphi 0, %s27
      %s28 = sphi 0, %s25
      %s29 = sphi 0, %s28
      %s45 = sphi 0, %s29
      %s49 = sphi 0, %s49
      %s51 = sphi 0, %s49
      %s52 = sphi 0, %s51
      %s66 = sphi 0, %s52
      %s70 = sphi 0, %s70
      %s72 = sphi 0, %s70
      %s73 = sphi 0, %s72
      %s87 = sphi 0, %s73
      %s91 = sphi 0, %s91
      %s93 = sphi 0, %s91
      %s94 = sphi 0, %s93
      %s108 = sphi 0, %s94
      %s112 = sphi 0, %s112
      %s114 = sphi 0, %s112
      %s115 = sphi 0, %s114
      %s129 = sphi 0, %s115
      %s133 = sphi 0, %s133
      %s135 = sphi 0, %s133
      %s136 = sphi 0, %s135
      %s150 = sphi 0, %s136
      %s156 = sphi 0, %s158
      %s159 = sphi 0, %s156
      %s160 = sphi 0, %s159
      %s176 = sphi 0, %s160
    $region4: #{roadnet_forward.1} parent=1 // loop_header_branch
      %18 = sbr.rel (%p16) target = $region8
    $region5: #{roadnet_forward.1} parent=1 // loop_body
      %s20 = ssub.s32 %s15, 1
      %s21 = ssub.s32 %s15, 2
      %s22 = sadd.s32 %s15, 1
      %s23 = ssub.s32 %s15, %s22
      %p24 = scmp.eq.s32.totalorder %s23, 0
      %s26 = sadd.s32 %s25, 1
      %s27 = scalar_select %p24, %s25, %s26
      %p30 = pneg %p24
      %p31 = scmp.eq.s32.totalorder %s15, 1
      %p32 = por %p30, %p31
      %p33 = scmp.ne.s32.totalorder %s25, %s28
      %p34 = scmp.eq.s32.totalorder %s15, 0
      %p35 = por %p33, %p34
      %p36 = scmp.ne.s32.totalorder %s25, %s28
      %p37 = scmp.eq.s32.totalorder %s20, 1
      %p38 = por %p36, %p37
      %p39 = scmp.ne.s32.totalorder %s28, %s29
      %p40 = scmp.eq.s32.totalorder %s20, 0
      %p41 = por %p39, %p40
      %p42 = scmp.ne.s32.totalorder %s28, %s29
      %p43 = scmp.eq.s32.totalorder %s21, 1
      %p44 = por %p42, %p43
      %p46 = scmp.ne.s32.totalorder %s29, %s45
      %p47 = scmp.eq.s32.totalorder %s21, 0
      %p48 = por %p46, %p47
      %s50 = sadd.s32 %s49, 1
      %p53 = scmp.eq.s32.totalorder %s15, 1
      %p54 = scmp.ne.s32.totalorder %s49, %s51
      %p55 = scmp.eq.s32.totalorder %s15, 0
      %p56 = por %p54, %p55
      %p57 = scmp.ne.s32.totalorder %s49, %s51
      %p58 = scmp.eq.s32.totalorder %s20, 1
      %p59 = por %p57, %p58
      %p60 = scmp.ne.s32.totalorder %s51, %s52
      %p61 = scmp.eq.s32.totalorder %s20, 0
      %p62 = por %p60, %p61
      %p63 = scmp.ne.s32.totalorder %s51, %s52
      %p64 = scmp.eq.s32.totalorder %s21, 1
      %p65 = por %p63, %p64
      %p67 = scmp.ne.s32.totalorder %s52, %s66
      %p68 = scmp.eq.s32.totalorder %s21, 0
      %p69 = por %p67, %p68
      %s71 = sadd.s32 %s70, 1
      %p74 = scmp.eq.s32.totalorder %s15, 1
      %p75 = scmp.ne.s32.totalorder %s70, %s72
      %p76 = scmp.eq.s32.totalorder %s15, 0
      %p77 = por %p75, %p76
      %p78 = scmp.ne.s32.totalorder %s70, %s72
      %p79 = scmp.eq.s32.totalorder %s20, 1
      %p80 = por %p78, %p79
      %p81 = scmp.ne.s32.totalorder %s72, %s73
      %p82 = scmp.eq.s32.totalorder %s20, 0
      %p83 = por %p81, %p82
      %p84 = scmp.ne.s32.totalorder %s72, %s73
      %p85 = scmp.eq.s32.totalorder %s21, 1
      %p86 = por %p84, %p85
      %p88 = scmp.ne.s32.totalorder %s73, %s87
      %p89 = scmp.eq.s32.totalorder %s21, 0
      %p90 = por %p88, %p89
      %s92 = sadd.s32 %s91, 1
      %p95 = scmp.eq.s32.totalorder %s15, 1
      %p96 = scmp.ne.s32.totalorder %s91, %s93
      %p97 = scmp.eq.s32.totalorder %s15, 0
      %p98 = por %p96, %p97
      %p99 = scmp.ne.s32.totalorder %s91, %s93
      %p100 = scmp.eq.s32.totalorder %s20, 1
      %p101 = por %p99, %p100
      %p102 = scmp.ne.s32.totalorder %s93, %s94
      %p103 = scmp.eq.s32.totalorder %s20, 0
      %p104 = por %p102, %p103
      %p105 = scmp.ne.s32.totalorder %s93, %s94
      %p106 = scmp.eq.s32.totalorder %s21, 1
      %p107 = por %p105, %p106
      %p109 = scmp.ne.s32.totalorder %s94, %s108
      %p110 = scmp.eq.s32.totalorder %s21, 0
      %p111 = por %p109, %p110
      %s113 = sadd.s32 %s112, 1
      %p116 = scmp.eq.s32.totalorder %s15, 1
      %p117 = scmp.ne.s32.totalorder %s112, %s114
      %p118 = scmp.eq.s32.totalorder %s15, 0
      %p119 = por %p117, %p118
      %p120 = scmp.ne.s32.totalorder %s112, %s114
      %p121 = scmp.eq.s32.totalorder %s20, 1
      %p122 = por %p120, %p121
      %p123 = scmp.ne.s32.totalorder %s114, %s115
      %p124 = scmp.eq.s32.totalorder %s20, 0
      %p125 = por %p123, %p124
      %p126 = scmp.ne.s32.totalorder %s114, %s115
      %p127 = scmp.eq.s32.totalorder %s21, 1
      %p128 = por %p126, %p127
      %p130 = scmp.ne.s32.totalorder %s115, %s129
      %p131 = scmp.eq.s32.totalorder %s21, 0
      %p132 = por %p130, %p131
      %s134 = sadd.s32 %s133, 1
      %p137 = scmp.eq.s32.totalorder %s15, 1
      %p138 = scmp.ne.s32.totalorder %s133, %s135
      %p139 = scmp.eq.s32.totalorder %s15, 0
      %p140 = por %p138, %p139
      %p141 = scmp.ne.s32.totalorder %s133, %s135
      %p142 = scmp.eq.s32.totalorder %s20, 1
      %p143 = por %p141, %p142
      %p144 = scmp.ne.s32.totalorder %s135, %s136
      %p145 = scmp.eq.s32.totalorder %s20, 0
      %p146 = por %p144, %p145
      %p147 = scmp.ne.s32.totalorder %s135, %s136
      %p148 = scmp.eq.s32.totalorder %s21, 1
      %p149 = por %p147, %p148
      %p151 = scmp.ne.s32.totalorder %s136, %s150
      %p152 = scmp.eq.s32.totalorder %s21, 0
      %p153 = por %p151, %p152
      %s154 = ssub.s32 %s15, %s22
      %p155 = scmp.eq.s32.totalorder %s154, 0
      %s157 = sadd.s32 %s156, 1
      %s158 = scalar_select %p155, %s156, %s157
      %p161 = pneg %p155
      %p162 = scmp.eq.s32.totalorder %s15, 1
      %p163 = por %p161, %p162
      %p164 = scmp.ne.s32.totalorder %s156, %s159
      %p165 = scmp.eq.s32.totalorder %s15, 0
      %p166 = por %p164, %p165
      %p167 = scmp.ne.s32.totalorder %s156, %s159
      %p168 = scmp.eq.s32.totalorder %s20, 1
      %p169 = por %p167, %p168
      %p170 = scmp.ne.s32.totalorder %s159, %s160
      %p171 = scmp.eq.s32.totalorder %s20, 0
      %p172 = por %p170, %p171
      %p173 = scmp.ne.s32.totalorder %s159, %s160
      %p174 = scmp.eq.s32.totalorder %s21, 1
      %p175 = por %p173, %p174
      %p177 = scmp.ne.s32.totalorder %s160, %s176
      %p178 = scmp.eq.s32.totalorder %s21, 0
      %p179 = por %p177, %p178
      %p180 = scmp.le.s32.totalorder 1, %s15
      %p181 = scmp.lt.s32.totalorder %s15, 3
      %p182 = pnand %p180, %p181
      %p183 = pneg %p182
      // Predicated region
      $region9: #{roadnet_forward.1} parent=5 // pred_check
        _
      $region10: #{roadnet_forward.1} parent=5 // pred_check_branch
        %185 = sbr.rel (%p182) target = $region12
      $region11: #{roadnet_forward.1} parent=5 // pred_region
        %s186 = ssub.s32 %s15, 1
        // Predicated region
        $region13: #{roadnet_forward.1} parent=11 // pred_check
          %p187 = pneg %p62
        $region14: #{roadnet_forward.1} parent=11 // pred_check_branch
          %189 = sbr.rel (%p187) target = $region16
        $region15: #{roadnet_forward.1} parent=11 // pred_region
          _
        $region16: #{roadnet_forward.1} parent=11 // pred_fallthru
          _
        // Predicated region
        $region17: #{roadnet_forward.1} parent=11 // pred_check
          %p190 = pneg %p83
        $region18: #{roadnet_forward.1} parent=11 // pred_check_branch
          %192 = sbr.rel (%p190) target = $region20
        $region19: #{roadnet_forward.1} parent=11 // pred_region
          _
        $region20: #{roadnet_forward.1} parent=11 // pred_fallthru
          _
        // Predicated region
        $region21: #{roadnet_forward.1} parent=11 // pred_check
          %p193 = pneg %p104
        $region22: #{roadnet_forward.1} parent=11 // pred_check_branch
          %195 = sbr.rel (%p193) target = $region24
        $region23: #{roadnet_forward.1} parent=11 // pred_region
          _
        $region24: #{roadnet_forward.1} parent=11 // pred_fallthru
          _
        // Predicated region
        $region25: #{roadnet_forward.1} parent=11 // pred_check
          %p196 = pneg %p125
        $region26: #{roadnet_forward.1} parent=11 // pred_check_branch
          %198 = sbr.rel (%p196) target = $region28
        $region27: #{roadnet_forward.1} parent=11 // pred_region
          _
        $region28: #{roadnet_forward.1} parent=11 // pred_fallthru
          _
        // Predicated region
        $region29: #{roadnet_forward.1} parent=11 // pred_check
          %p199 = pneg %p146
        $region30: #{roadnet_forward.1} parent=11 // pred_check_branch
          %201 = sbr.rel (%p199) target = $region32
        $region31: #{roadnet_forward.1} parent=11 // pred_region
          _
        $region32: #{roadnet_forward.1} parent=11 // pred_fallthru
          _
      $region12: #{roadnet_forward.1} parent=5 // pred_fallthru
        _
      %p202 = scmp.lt.s32.totalorder %s15, 2
      // Predicated region
      $region33: #{roadnet_forward.1} parent=5 // pred_check
        %p203 = pneg %p202
      $region34: #{roadnet_forward.1} parent=5 // pred_check_branch
        %205 = sbr.rel (%p203) target = $region36
      $region35: #{roadnet_forward.1} parent=5 // pred_region
        // Predicated region
        $region37: #{roadnet_forward.1} parent=35 // pred_check
          %p206 = pneg %p35
        $region38: #{roadnet_forward.1} parent=35 // pred_check_branch
          %208 = sbr.rel (%p206) target = $region40
        $region39: #{roadnet_forward.1} parent=35 // pred_region
          %s209 = smul.u32 2, %s15
          %p210 = scmp.lt.s32.totalorder %s209, 3
          %s211 = scalar_select %p210, %s209, 3
          %s212 = smul.addr %s211, 8
          %s213 = scalar_lea.vmem %s0, %s212
          %s214 = smul.u32 2, %s15
        $region40: #{roadnet_forward.1} parent=35 // pred_fallthru
          _
      $region36: #{roadnet_forward.1} parent=5 // pred_fallthru
        _
      %p215 = scmp.le.s32.totalorder 1, %s15
      %p216 = scmp.lt.s32.totalorder %s15, 3
      %p217 = pnand %p215, %p216
      %p218 = pneg %p217
      // Predicated region
      $region41: #{roadnet_forward.1} parent=5 // pred_check
        _
      $region42: #{roadnet_forward.1} parent=5 // pred_check_branch
        %220 = sbr.rel (%p217) target = $region44
      $region43: #{roadnet_forward.1} parent=5 // pred_region
        %s221 = ssub.s32 %s15, 1
        %s222 = smul.u32 2, %s20
        %p223 = scmp.lt.s32.totalorder %s222, 3
        %s224 = scalar_select %p223, %s222, 3
        %s225 = smul.addr %s224, 8
        %s226 = scalar_lea.vmem %s0, %s225
        %p227 = pneg %p41
        %p228 = pneg %p38
        %p229 = pneg %p62
        %p230 = pneg %p59
        %p231 = pneg %p83
        %p232 = pneg %p80
        %p233 = pneg %p104
        %p234 = pneg %p101
        %p235 = pneg %p125
        %p236 = pneg %p122
        %p237 = pneg %p146
        %p238 = pneg %p143
        %p239 = pneg %p172
        %p240 = pneg %p169
        %s241 = sand.u32 %s159, 1
        %s242 = scalar_lea.sflag [#allocation3], %s241
        %s243 = sand.u32 %s159, 1
        %s244 = smul.addr %s243, 16
        %s245 = scalar_lea.vmem [#allocation2], %s244
        %s246 = smul.u32 2, %s20
        %p247 = scmp.lt.s32.totalorder %s246, 3
        %s248 = scalar_select %p247, %s246, 3
        %s249 = smul.addr %s248, 8
        %s250 = scalar_lea.vmem %s0, %s249
        %s251 = smul.u32 2, %s20
        %s252 = smul.u32 2, %s20
        %v254 = vld [vmem:[%s250] sm:$0xff]
        %v255 = vld [vmem:[%s250 + $0x8] sm:$0xff]
        %v256 = vpack.c.bf16 %v255, %v254
        %v257 = vld [vmem:[%s2] sm:$0xf]
        %v258 = vld [vmem:[%s2 + $0x4] sm:$0xf]
        %v259 = vld [vmem:[%s3] sm:$0x1]
        %v261 = vlaneseq
        %v262 = vshrl.u32 %v261, 7
        %v263 = vsub.s32 0, %v262
        %v264 = vrot.slane %v259, %v263
        %v268 = vunpack.c.l.b16 %v257
        %v269 = vunpack.c.l.b16 %v258
        %v270 = vpack.c.b16 %v269, %v268
        %vm272 = vcmask 130048
        %v274 = vsel %vm272, %v256, 0
        %276 = vmatprep.subr.bf16.mxu0 0
        %277 = vmatpush1.bf16.msra.mxu0 %v270
        %278 = vmatprep.subr.bf16.mxu0 0
        %279 = vmatpush1.bf16.msra.mxu0 0
        %280 = vmatprep.subr.bf16.mxu0 0
        %281 = vmatpush1.bf16.msra.mxu0 0
        %282 = vmatprep.subr.bf16.mxu0 0
        %283 = vmatpush1.bf16.msra.mxu0 0
        %284 = vmatprep.subr.bf16.mxu0 0
        %285 = vmatpush1.bf16.msra.mxu0 0
        %286 = vmatprep.subr.bf16.mxu0 0
        %287 = vmatpush1.bf16.msra.mxu0 0
        %288 = vmatprep.subr.bf16.mxu0 0
        %289 = vmatpush1.bf16.msra.mxu0 0
        %290 = vmatprep.subr.bf16.mxu0 0
        %291 = vmatpush1.bf16.msra.mxu0 0
        %292 = vmatprep.subr.bf16.mxu0 0
        %293 = vmatpush1.bf16.msra.mxu0 0
        %294 = vmatprep.subr.bf16.mxu0 0
        %295 = vmatpush1.bf16.msra.mxu0 0
        %296 = vmatprep.subr.bf16.mxu0 0
        %297 = vmatpush1.bf16.msra.mxu0 0
        %298 = vmatprep.subr.bf16.mxu0 0
        %299 = vmatpush1.bf16.msra.mxu0 0
        %300 = vmatprep.subr.bf16.mxu0 0
        %301 = vmatpush1.bf16.msra.mxu0 0
        %302 = vmatprep.subr.bf16.mxu0 0
        %303 = vmatpush1.bf16.msra.mxu0 0
        %304 = vmatprep.subr.bf16.mxu0 0
        %305 = vmatpush1.bf16.msra.mxu0 0
        %306 = vmatprep.subr.bf16.mxu0 0
        %307 = vmatpush1.bf16.msra.mxu0 0
        %308 = vmatprep.mubr.bf16.mxu0 0
        %309 = vmatmul.mubr.bf16.gmra.mrb[0].mxu0 %v274
        %v310 = vpop.f32.mrb[0].mxu0
        %v311 = vadd.f32 %v264, %v310
        %v312 = vpop.f32.mrb[0].mxu0
        %v313 = vpop.f32.mrb[0].mxu0
        %v314 = vadd.f32 %v264, %v313
        %v315 = vpop.f32.mrb[0].mxu0
        %316 = vdwg.mxu0
        %v317 = vmax.f32 %v311, 0.0
        %v318 = vmax.f32 %v314, 0.0
        %v319 = vld [vmem:[%s1] sm:$0xff]
        %v320 = vld [vmem:[%s1 + $0x8] sm:$0xff]
        %322 = vset.pattern.permute.xlu0 0
        %323 = vperm.xlu0 %322, %v319
        %v324 = vpop.permute.xlu0 %323
        %326 = vset.pattern.permute.xlu0 0
        %327 = vperm.xlu0 %326, %v320
        %v328 = vpop.permute.xlu0 %327
        %vm329 = vcmask 1044480
        %v330 = vrot.slane %v324, 3
        %v331 = vrot.slane %v328, 3
        %v332 = vsel %vm329, %v330, %v331
        %v336 = vmul.f32 %v330, 0.0
        %v337 = vmul.f32 %v317, %v332
        %v338 = vmul.f32 %v318, %v331
        %s339 = scalar_lea.vmem %s1, 16
        %v340 = vld [vmem:[%s339] sm:$0xff]
        %v341 = vld [vmem:[%s339 + $0x8] sm:$0xff]
        %343 = vset.pattern.permute.xlu0 0
        %344 = vperm.xlu0 %343, %v340
        %v345 = vpop.permute.xlu0 %344
        %347 = vset.pattern.permute.xlu0 0
        %348 = vperm.xlu0 %347, %v341
        %v349 = vpop.permute.xlu0 %348
        %vm350 = vcmask 1043456
        %v351 = vrot.slane %v345, 4
        %v352 = vrot.slane %v349, 4
        %v353 = vsel %vm350, %v351, %v352
        %v357 = vmul.f32 %v351, 0.0
        %v358 = vmul.f32 %v353, 0.0
        %v359 = vmul.f32 %v317, %v352
        %s360 = scalar_lea.vmem %s1, 32
        %v361 = vld [vmem:[%s360] sm:$0xff]
        %v362 = vld [vmem:[%s360 + $0x8] sm:$0xff]
        %364 = vset.pattern.permute.xlu0 0
        %365 = vperm.xlu0 %364, %v361
        %v366 = vpop.permute.xlu0 %365
        %368 = vset.pattern.permute.xlu0 0
        %369 = vperm.xlu0 %368, %v362
        %v370 = vpop.permute.xlu0 %369
        %vm371 = vcmask 1046528
        %v372 = vrot.slane %v366, 1
        %v373 = vrot.slane %v370, 1
        %v374 = vsel %vm371, %v372, %v373
        %v378 = vmul.f32 %v372, 0.0
        %v379 = vmul.f32 %v374, 0.0
        %v380 = vmul.f32 %v317, %v373
        %s381 = scalar_lea.vmem %s1, 48
        %v382 = vld [vmem:[%s381] sm:$0xff]
        %v383 = vld [vmem:[%s381 + $0x8] sm:$0xff]
        %385 = vset.pattern.permute.xlu0 0
        %386 = vperm.xlu0 %385, %v382
        %v387 = vpop.permute.xlu0 %386
        %389 = vset.pattern.permute.xlu0 0
        %390 = vperm.xlu0 %389, %v383
        %v391 = vpop.permute.xlu0 %390
        %vm392 = vcmask 1045504
        %v393 = vrot.slane %v387, 2
        %v394 = vrot.slane %v391, 2
        %v395 = vsel %vm392, %v393, %v394
        %v399 = vmul.f32 %v393, 0.0
        %v400 = vmul.f32 %v317, %v395
        %v401 = vmul.f32 %v318, %v394
        %s402 = scalar_lea.vmem %s1, 64
        %v403 = vld [vmem:[%s402] sm:$0xff]
        %v404 = vld [vmem:[%s402 + $0x8] sm:$0xff]
        %406 = vset.pattern.permute.xlu0 0
        %407 = vperm.xlu0 %406, %v403
        %v408 = vpop.permute.xlu0 %407
        %411 = vset.pattern.permute.xlu0 0
        %412 = vperm.xlu0 %411, %v404
        %v413 = vpop.permute.xlu0 %412
        %v415 = vmul.f32 %v408, 0.0
        %v416 = vmul.f32 %v317, %v413
        %s417 = scalar_lea.vmem %s1, 80
        %v418 = vld [vmem:[%s417] sm:$0xff]
        %v419 = vld [vmem:[%s417 + $0x8] sm:$0xff]
        %421 = vset.pattern.permute.xlu0 0
        %422 = vperm.xlu0 %421, %v418
        %v423 = vpop.permute.xlu0 %422
        %425 = vset.pattern.permute.xlu0 0
        %426 = vperm.xlu0 %425, %v419
        %v427 = vpop.permute.xlu0 %426
        %vm428 = vcmask 1041408
        %v429 = vrot.slane %v423, 6
        %v430 = vrot.slane %v427, 6
        %v431 = vsel %vm428, %v429, %v430
        %v435 = vmul.f32 %v429, 0.0
        %v436 = vmul.f32 %v317, %v431
        %v437 = vmul.f32 %v318, %v430
        %s438 = scalar_lea.vmem %s1, 96
        %v439 = vld [vmem:[%s438] sm:$0xff]
        %v440 = vld [vmem:[%s438 + $0x8] sm:$0xff]
        %442 = vset.pattern.permute.xlu0 0
        %443 = vperm.xlu0 %442, %v439
        %v444 = vpop.permute.xlu0 %443
        %446 = vset.pattern.permute.xlu0 0
        %447 = vperm.xlu0 %446, %v440
        %v448 = vpop.permute.xlu0 %447
        %v449 = vrot.slane %v444, 1
        %v450 = vrot.slane %v448, 1
        %v451 = vsel %vm371, %v449, %v450
        %v455 = vmul.f32 %v449, 0.0
        %v456 = vmul.f32 %v317, %v451
        %v457 = vmul.f32 %v318, %v450
        %s458 = scalar_lea.vmem %s1, 112
        %v459 = vld [vmem:[%s458] sm:$0xff]
        %v460 = vld [vmem:[%s458 + $0x8] sm:$0xff]
        %462 = vset.pattern.permute.xlu0 0
        %463 = vperm.xlu0 %462, %v459
        %v464 = vpop.permute.xlu0 %463
        %466 = vset.pattern.permute.xlu0 0
        %467 = vperm.xlu0 %466, %v460
        %v468 = vpop.permute.xlu0 %467
        %v469 = vrot.slane %v464, 4
        %v470 = vrot.slane %v468, 4
        %v471 = vsel %vm350, %v469, %v470
        %v475 = vmul.f32 %v469, 0.0
        %v476 = vmul.f32 %v317, %v471
        %v477 = vmul.f32 %v318, %v470
        %s478 = scalar_lea.vmem %s1, 128
        %v479 = vld [vmem:[%s478] sm:$0xff]
        %v480 = vld [vmem:[%s478 + $0x8] sm:$0xff]
        %482 = vset.pattern.permute.xlu0 0
        %483 = vperm.xlu0 %482, %v479
        %v484 = vpop.permute.xlu0 %483
        %486 = vset.pattern.permute.xlu0 0
        %487 = vperm.xlu0 %486, %v480
        %v488 = vpop.permute.xlu0 %487
        %v489 = vrot.slane %v484, 3
        %v490 = vrot.slane %v488, 3
        %v491 = vsel %vm329, %v489, %v490
        %v495 = vmul.f32 %v489, 0.0
        %v496 = vmul.f32 %v317, %v491
        %v497 = vmul.f32 %v318, %v490
        %s498 = scalar_lea.vmem %s1, 160
        %v499 = vld [vmem:[%s498] sm:$0xff]
        %v500 = vld [vmem:[%s498 + $0x8] sm:$0xff]
        %502 = vset.pattern.permute.xlu0 0
        %503 = vperm.xlu0 %502, %v499
        %v504 = vpop.permute.xlu0 %503
        %506 = vset.pattern.permute.xlu0 0
        %507 = vperm.xlu0 %506, %v500
        %v508 = vpop.permute.xlu0 %507
        %vm509 = vcmask 1040384
        %v510 = vrot.slane %v504, 7
        %v511 = vrot.slane %v508, 7
        %v512 = vsel %vm509, %v510, %v511
        %v516 = vmul.f32 %v317, %v510
        %v517 = vmul.f32 %v318, %v512
        %v518 = vmul.f32 %v511, 0.0
        %s519 = scalar_lea.vmem %s1, 176
        %v520 = vld [vmem:[%s519] sm:$0xff]
        %v521 = vld [vmem:[%s519 + $0x8] sm:$0xff]
        %523 = vset.pattern.permute.xlu0 0
        %524 = vperm.xlu0 %523, %v520
        %v525 = vpop.permute.xlu0 %524
        %527 = vset.pattern.permute.xlu0 0
        %528 = vperm.xlu0 %527, %v521
        %v529 = vpop.permute.xlu0 %528
        %v530 = vrot.slane %v525, 4
        %v531 = vrot.slane %v529, 4
        %v532 = vsel %vm350, %v530, %v531
        %v536 = vmul.f32 %v317, %v530
        %v537 = vmul.f32 %v318, %v532
        %v538 = vmul.f32 %v531, 0.0
        %s539 = scalar_lea.vmem %s1, 192
        %v540 = vld [vmem:[%s539] sm:$0xff]
        %v541 = vld [vmem:[%s539 + $0x8] sm:$0xff]
        %543 = vset.pattern.permute.xlu0 0
        %544 = vperm.xlu0 %543, %v540
        %v545 = vpop.permute.xlu0 %544
        %547 = vset.pattern.permute.xlu0 0
        %548 = vperm.xlu0 %547, %v541
        %v549 = vpop.permute.xlu0 %548
        %vm550 = vcmask 1042432
        %v551 = vrot.slane %v545, 5
        %v552 = vrot.slane %v549, 5
        %v553 = vsel %vm550, %v551, %v552
        %v557 = vmul.f32 %v317, %v551
        %v558 = vmul.f32 %v318, %v553
        %v559 = vmul.f32 %v552, 0.0
        %s560 = scalar_lea.vmem %s1, 208
        %v561 = vld [vmem:[%s560] sm:$0xff]
        %v562 = vld [vmem:[%s560 + $0x8] sm:$0xff]
        %564 = vset.pattern.permute.xlu0 0
        %565 = vperm.xlu0 %564, %v561
        %v566 = vpop.permute.xlu0 %565
        %568 = vset.pattern.permute.xlu0 0
        %569 = vperm.xlu0 %568, %v562
        %v570 = vpop.permute.xlu0 %569
        %v571 = vrot.slane %v566, 6
        %v572 = vrot.slane %v570, 6
        %v573 = vsel %vm428, %v571, %v572
        %v577 = vmul.f32 %v317, %v571
        %v578 = vmul.f32 %v318, %v573
        %v579 = vmul.f32 %v572, 0.0
        %s580 = scalar_lea.vmem %s1, 224
        %v581 = vld [vmem:[%s580] sm:$0xff]
        %v582 = vld [vmem:[%s580 + $0x8] sm:$0xff]
        %584 = vset.pattern.permute.xlu0 0
        %585 = vperm.xlu0 %584, %v581
        %v586 = vpop.permute.xlu0 %585
        %589 = vset.pattern.permute.xlu0 0
        %590 = vperm.xlu0 %589, %v582
        %v591 = vpop.permute.xlu0 %590
        %v593 = vmul.f32 %v318, %v586
        %v594 = vmul.f32 %v591, 0.0
        %s595 = scalar_lea.vmem %s1, 240
        %v596 = vld [vmem:[%s595] sm:$0xff]
        %v597 = vld [vmem:[%s595 + $0x8] sm:$0xff]
        %599 = vset.pattern.permute.xlu0 0
        %600 = vperm.xlu0 %599, %v596
        %v601 = vpop.permute.xlu0 %600
        %603 = vset.pattern.permute.xlu0 0
        %604 = vperm.xlu0 %603, %v597
        %v605 = vpop.permute.xlu0 %604
        %v606 = vrot.slane %v601, 2
        %v607 = vrot.slane %v605, 2
        %v608 = vsel %vm392, %v606, %v607
        %v612 = vmul.f32 %v317, %v606
        %v613 = vmul.f32 %v318, %v608
        %v614 = vmul.f32 %v607, 0.0
        %s615 = scalar_lea.vmem %s1, 256
        %v616 = vld [vmem:[%s615] sm:$0xff]
        %v617 = vld [vmem:[%s615 + $0x8] sm:$0xff]
        %619 = vset.pattern.permute.xlu0 0
        %620 = vperm.xlu0 %619, %v616
        %v621 = vpop.permute.xlu0 %620
        %623 = vset.pattern.permute.xlu0 0
        %624 = vperm.xlu0 %623, %v617
        %v625 = vpop.permute.xlu0 %624
        %v626 = vrot.slane %v621, 5
        %v627 = vrot.slane %v625, 5
        %v628 = vsel %vm550, %v626, %v627
        %v632 = vmul.f32 %v317, %v626
        %v633 = vmul.f32 %v318, %v628
        %v634 = vmul.f32 %v627, 0.0
        %s635 = scalar_lea.vmem %s1, 272
        %v636 = vld [vmem:[%s635] sm:$0xff]
        %v637 = vld [vmem:[%s635 + $0x8] sm:$0xff]
        %639 = vset.pattern.permute.xlu0 0
        %640 = vperm.xlu0 %639, %v636
        %v641 = vpop.permute.xlu0 %640
        %643 = vset.pattern.permute.xlu0 0
        %644 = vperm.xlu0 %643, %v637
        %v645 = vpop.permute.xlu0 %644
        %v646 = vrot.slane %v641, 4
        %v647 = vrot.slane %v645, 4
        %v648 = vsel %vm350, %v646, %v647
        %v652 = vmul.f32 %v318, %v646
        %v653 = vmul.f32 %v648, 0.0
        %v654 = vmul.f32 %v647, 0.0
        %s655 = scalar_lea.vmem %s1, 288
        %v656 = vld [vmem:[%s655] sm:$0xff]
        %v657 = vld [vmem:[%s655 + $0x8] sm:$0xff]
        %659 = vset.pattern.permute.xlu0 0
        %660 = vperm.xlu0 %659, %v656
        %v661 = vpop.permute.xlu0 %660
        %663 = vset.pattern.permute.xlu0 0
        %664 = vperm.xlu0 %663, %v657
        %v665 = vpop.permute.xlu0 %664
        %v666 = vrot.slane %v661, 7
        %v667 = vrot.slane %v665, 7
        %v668 = vsel %vm509, %v666, %v667
        %v672 = vmul.f32 %v318, %v666
        %v673 = vmul.f32 %v668, 0.0
        %v674 = vmul.f32 %v667, 0.0
        %v678 = vrot.slane %v357, 7
        %v679 = vrot.slane %v358, 7
        %v680 = vsel %vm509, %v678, %v679
        %v681 = vrot.slane %v359, 7
        %v682 = vsel %vm509, %v679, %v681
        %683 = vrot.lane.b32.xlu0 %v678, 32
        %v684 = vpop.permute.xlu0 %683
        %685 = vrot.lane.b32.xlu0 %v680, 32
        %v686 = vpop.permute.xlu0 %685
        %687 = vrot.lane.b32.xlu0 %v682, 32
        %v688 = vpop.permute.xlu0 %687
        %v695 = vrot.slane %v378, 2
        %v696 = vrot.slane %v379, 2
        %v697 = vsel %vm392, %v695, %v696
        %v698 = vrot.slane %v380, 2
        %v699 = vsel %vm392, %v696, %v698
        %700 = vrot.lane.b32.xlu0 %v697, 64
        %v701 = vpop.permute.xlu0 %700
        %702 = vrot.lane.b32.xlu0 %v699, 64
        %v703 = vpop.permute.xlu0 %702
        %704 = vrot.lane.b32.xlu0 %v698, 64
        %v705 = vpop.permute.xlu0 %704
        %v712 = vrot.slane %v399, 1
        %v713 = vrot.slane %v400, 1
        %v714 = vsel %vm371, %v712, %v713
        %v715 = vrot.slane %v401, 1
        %v716 = vsel %vm371, %v713, %v715
        %717 = vrot.lane.b32.xlu0 %v714, 96
        %v718 = vpop.permute.xlu0 %717
        %719 = vrot.lane.b32.xlu0 %v716, 96
        %v720 = vpop.permute.xlu0 %719
        %721 = vrot.lane.b32.xlu0 %v715, 96
        %v722 = vpop.permute.xlu0 %721
        %v728 = vrot.slane %v415, 3
        %v729 = vrot.slane %v416, 3
        %v730 = vsel %vm329, %v728, %v729
        %v737 = vrot.slane %v435, 5
        %v738 = vrot.slane %v436, 5
        %v739 = vsel %vm550, %v737, %v738
        %v740 = vrot.slane %v437, 5
        %v741 = vsel %vm550, %v738, %v740
        %742 = vrot.lane.b32.xlu0 %v737, 32
        %v743 = vpop.permute.xlu0 %742
        %744 = vrot.lane.b32.xlu0 %v739, 32
        %v745 = vpop.permute.xlu0 %744
        %746 = vrot.lane.b32.xlu0 %v741, 32
        %v747 = vpop.permute.xlu0 %746
        %v754 = vrot.slane %v455, 2
        %v755 = vrot.slane %v456, 2
        %v756 = vsel %vm392, %v754, %v755
        %v757 = vrot.slane %v457, 2
        %v758 = vsel %vm392, %v755, %v757
        %759 = vrot.lane.b32.xlu0 %v756, 64
        %v760 = vpop.permute.xlu0 %759
        %761 = vrot.lane.b32.xlu0 %v758, 64
        %v762 = vpop.permute.xlu0 %761
        %763 = vrot.lane.b32.xlu0 %v757, 64
        %v764 = vpop.permute.xlu0 %763
        %v771 = vrot.slane %v475, 7
        %v772 = vrot.slane %v476, 7
        %v773 = vsel %vm509, %v771, %v772
        %v774 = vrot.slane %v477, 7
        %v775 = vsel %vm509, %v772, %v774
        %776 = vrot.lane.b32.xlu0 %v771, 96
        %v777 = vpop.permute.xlu0 %776
        %778 = vrot.lane.b32.xlu0 %v773, 96
        %v779 = vpop.permute.xlu0 %778
        %780 = vrot.lane.b32.xlu0 %v775, 96
        %v781 = vpop.permute.xlu0 %780
        %v787 = vrot.slane %v317, 3
        %v788 = vrot.slane %v318, 3
        %v789 = vsel %vm329, %v787, %v788
        %790 = vrot.lane.b32.xlu0 %v787, 32
        %v791 = vpop.permute.xlu0 %790
        %792 = vrot.lane.b32.xlu0 %v789, 32
        %v793 = vpop.permute.xlu0 %792
        %794 = vrot.lane.b32.xlu0 %v788, 32
        %v795 = vpop.permute.xlu0 %794
        %v802 = vrot.slane %v516, 4
        %v803 = vrot.slane %v517, 4
        %v804 = vsel %vm350, %v802, %v803
        %v805 = vrot.slane %v518, 4
        %v806 = vsel %vm350, %v803, %v805
        %807 = vrot.lane.b32.xlu0 %v802, 64
        %v808 = vpop.permute.xlu0 %807
        %809 = vrot.lane.b32.xlu0 %v804, 64
        %v810 = vpop.permute.xlu0 %809
        %811 = vrot.lane.b32.xlu0 %v806, 64
        %v812 = vpop.permute.xlu0 %811
        %v819 = vrot.slane %v536, 7
        %v820 = vrot.slane %v537, 7
        %v821 = vsel %vm509, %v819, %v820
        %v822 = vrot.slane %v538, 7
        %v823 = vsel %vm509, %v820, %v822
        %824 = vrot.lane.b32.xlu0 %v819, 96
        %v825 = vpop.permute.xlu0 %824
        %826 = vrot.lane.b32.xlu0 %v821, 96
        %v827 = vpop.permute.xlu0 %826
        %828 = vrot.lane.b32.xlu0 %v823, 96
        %v829 = vpop.permute.xlu0 %828
        %v836 = vrot.slane %v557, 6
        %v837 = vrot.slane %v558, 6
        %v838 = vsel %vm428, %v836, %v837
        %v839 = vrot.slane %v559, 6
        %v840 = vsel %vm428, %v837, %v839
        %v847 = vrot.slane %v577, 5
        %v848 = vrot.slane %v578, 5
        %v849 = vsel %vm550, %v847, %v848
        %v850 = vrot.slane %v579, 5
        %v851 = vsel %vm550, %v848, %v850
        %852 = vrot.lane.b32.xlu0 %v847, 32
        %v853 = vpop.permute.xlu0 %852
        %854 = vrot.lane.b32.xlu0 %v849, 32
        %v855 = vpop.permute.xlu0 %854
        %856 = vrot.lane.b32.xlu0 %v851, 32
        %v857 = vpop.permute.xlu0 %856
        %v863 = vrot.slane %v593, 3
        %v864 = vrot.slane %v594, 3
        %v865 = vsel %vm329, %v863, %v864
        %866 = vrot.lane.b32.xlu0 %v863, 64
        %v867 = vpop.permute.xlu0 %866
        %868 = vrot.lane.b32.xlu0 %v865, 64
        %v869 = vpop.permute.xlu0 %868
        %870 = vrot.lane.b32.xlu0 %v864, 64
        %v871 = vpop.permute.xlu0 %870
        %v878 = vrot.slane %v612, 1
        %v879 = vrot.slane %v613, 1
        %v880 = vsel %vm371, %v878, %v879
        %v881 = vrot.slane %v614, 1
        %v882 = vsel %vm371, %v879, %v881
        %883 = vrot.lane.b32.xlu0 %v880, 96
        %v884 = vpop.permute.xlu0 %883
        %885 = vrot.lane.b32.xlu0 %v882, 96
        %v886 = vpop.permute.xlu0 %885
        %887 = vrot.lane.b32.xlu0 %v881, 96
        %v888 = vpop.permute.xlu0 %887
        %vm892 = vcmask 261120
        %v893 = vsel %vm892, %v336, %v684
        %v894 = vsel %vm892, %v337, %v686
        %v895 = vsel %vm892, %v338, %v688
        %vm896 = vcmask 523264
        %v897 = vsel %vm896, %v893, %v701
        %v898 = vsel %vm896, %v894, %v703
        %v899 = vsel %vm896, %v895, %v705
        %vm900 = vcmask 785408
        %v901 = vsel %vm900, %v897, %v718
        %v902 = vsel %vm900, %v898, %v720
        %v903 = vsel %vm900, %v899, %v722
        %v904 = vsel %vm892, %v728, %v743
        %v905 = vsel %vm892, %v730, %v745
        %v906 = vsel %vm892, %v729, %v747
        %v907 = vsel %vm896, %v904, %v760
        %v908 = vsel %vm896, %v905, %v762
        %v909 = vsel %vm896, %v906, %v764
        %v910 = vsel %vm900, %v907, %v777
        %v911 = vsel %vm900, %v908, %v779
        %v912 = vsel %vm900, %v909, %v781
        %v913 = vsel %vm892, %v495, %v791
        %v914 = vsel %vm892, %v496, %v793
        %v915 = vsel %vm892, %v497, %v795
        %v916 = vsel %vm896, %v913, %v808
        %v917 = vsel %vm896, %v914, %v810
        %v918 = vsel %vm896, %v915, %v812
        %v919 = vsel %vm900, %v916, %v825
        %v920 = vsel %vm900, %v917, %v827
        %v921 = vsel %vm900, %v918, %v829
        %v922 = vsel %vm892, %v836, %v853
        %v923 = vsel %vm892, %v838, %v855
        %v924 = vsel %vm892, %v840, %v857
        %v925 = vsel %vm896, %v922, %v867
        %v926 = vsel %vm896, %v923, %v869
        %v927 = vsel %vm896, %v924, %v871
        %v928 = vsel %vm900, %v925, %v884
        %v929 = vsel %vm900, %v926, %v886
        %v930 = vsel %vm900, %v927, %v888
        %v934 = vrot.slane %v652, 1
        %v935 = vrot.slane %v653, 1
        %v936 = vsel %vm371, %v934, %v935
        %v937 = vrot.slane %v654, 1
        %v938 = vsel %vm371, %v935, %v937
        %939 = vrot.lane.b32.xlu0 %v936, 32
        %v940 = vpop.permute.xlu0 %939
        %941 = vrot.lane.b32.xlu0 %v938, 32
        %v942 = vpop.permute.xlu0 %941
        %943 = vrot.lane.b32.xlu0 %v937, 32
        %v944 = vpop.permute.xlu0 %943
        %v951 = vrot.slane %v672, 6
        %v952 = vrot.slane %v673, 6
        %v953 = vsel %vm428, %v951, %v952
        %v954 = vrot.slane %v674, 6
        %v955 = vsel %vm428, %v952, %v954
        %956 = vrot.lane.b32.xlu0 %v951, 64
        %v957 = vpop.permute.xlu0 %956
        %958 = vrot.lane.b32.xlu0 %v953, 64
        %v959 = vpop.permute.xlu0 %958
        %960 = vrot.lane.b32.xlu0 %v955, 64
        %v961 = vpop.permute.xlu0 %960
        %v965 = vsel %vm892, %v632, %v940
        %v966 = vsel %vm892, %v633, %v942
        %v967 = vsel %vm892, %v634, %v944
        %v968 = vsel %vm896, %v965, %v957
        %v969 = vsel %vm896, %v966, %v959
        %v970 = vsel %vm896, %v967, %v961
        %v974 = vrot.slane %v968, 6
        %v975 = vrot.slane %v969, 6
        %v976 = vsel %vm428, %v974, %v975
        %v977 = vrot.slane %v970, 6
        %v978 = vsel %vm428, %v975, %v977
        %v982 = vpack.c.bf16 %v902, %v901
        %v983 = vpack.c.bf16 %v911, %v910
        %v984 = vpack.c.bf16 %v920, %v919
        %v985 = vpack.c.bf16 %v929, %v928
        %v986 = vpack.c.bf16 %v976, %v974
        %v987 = vpack.c.bf16 %v903, %v903
        %v988 = vpack.c.bf16 %v912, %v912
        %v989 = vpack.c.bf16 %v921, %v921
        %v990 = vpack.c.bf16 %v930, %v930
        %v991 = vpack.c.bf16 %v978, %v978
        %v992 = vld [vmem:[%s4] sm:$0xf]
        %v993 = vld [vmem:[%s4 + $0x4] sm:$0xf]
        %v994 = vld [vmem:[%s4 + $0x8] sm:$0xf]
        %v995 = vld [vmem:[%s4 + $0xc] sm:$0xf]
        %v996 = vld [vmem:[%s4 + $0x10] sm:$0xf]
        %v997 = vld [vmem:[%s4 + $0x14] sm:$0xf]
        %v998 = vld [vmem:[%s4 + $0x18] sm:$0xf]
        %v999 = vld [vmem:[%s4 + $0x1c] sm:$0xf]
        %v1000 = vld [vmem:[%s4 + $0x20] sm:$0xf]
        %v1001 = vld [vmem:[%s4 + $0x24] sm:$0xf]
        %v1002 = vld [vmem:[%s4 + $0x28] sm:$0xf]
        %v1003 = vld [vmem:[%s4 + $0x2c] sm:$0xf]
        %v1004 = vld [vmem:[%s4 + $0x30] sm:$0xf]
        %v1005 = vld [vmem:[%s4 + $0x34] sm:$0xf]
        %v1006 = vld [vmem:[%s4 + $0x38] sm:$0xf]
        %v1007 = vld [vmem:[%s4 + $0x3c] sm:$0xf]
        %v1008 = vld [vmem:[%s4 + $0x40] sm:$0xf]
        %v1009 = vld [vmem:[%s4 + $0x44] sm:$0xf]
        %v1010 = vld [vmem:[%s4 + $0x48] sm:$0xf]
        %v1011 = vld [vmem:[%s4 + $0x4c] sm:$0xf]
        %v1012 = vld [vmem:[%s4 + $0x50] sm:$0xf]
        %v1013 = vld [vmem:[%s4 + $0x54] sm:$0xf]
        %v1014 = vld [vmem:[%s4 + $0x58] sm:$0xf]
        %v1015 = vld [vmem:[%s4 + $0x5c] sm:$0xf]
        %v1016 = vld [vmem:[%s4 + $0x60] sm:$0xf]
        %v1017 = vld [vmem:[%s4 + $0x64] sm:$0xf]
        %v1018 = vld [vmem:[%s4 + $0x68] sm:$0xf]
        %v1019 = vld [vmem:[%s4 + $0x6c] sm:$0xf]
        %v1020 = vld [vmem:[%s4 + $0x70] sm:$0xf]
        %v1021 = vld [vmem:[%s4 + $0x74] sm:$0xf]
        %v1022 = vld [vmem:[%s4 + $0x78] sm:$0xf]
        %v1023 = vld [vmem:[%s4 + $0x7c] sm:$0xf]
        %v1024 = vld [vmem:[%s4 + $0x80] sm:$0xf]
        %v1025 = vld [vmem:[%s4 + $0x84] sm:$0xf]
        %v1026 = vld [vmem:[%s4 + $0x88] sm:$0xf]
        %v1027 = vld [vmem:[%s4 + $0x8c] sm:$0xf]
        %v1028 = vld [vmem:[%s4 + $0x90] sm:$0xf]
        %v1029 = vld [vmem:[%s4 + $0x94] sm:$0xf]
        %v1030 = vld [vmem:[%s4 + $0x98] sm:$0xf]
        %v1031 = vld [vmem:[%s4 + $0x9c] sm:$0xf]
        %v1032 = vld [vmem:[%s4 + $0xa0] sm:$0xf]
        %v1033 = vld [vmem:[%s4 + $0xa4] sm:$0xf]
        %v1034 = vld [vmem:[%s4 + $0xa8] sm:$0xf]
        %v1035 = vld [vmem:[%s4 + $0xac] sm:$0xf]
        %v1036 = vld [vmem:[%s4 + $0xb0] sm:$0xf]
        %v1037 = vld [vmem:[%s4 + $0xb4] sm:$0xf]
        %v1038 = vld [vmem:[%s4 + $0xb8] sm:$0xf]
        %v1039 = vld [vmem:[%s4 + $0xbc] sm:$0xf]
        %v1040 = vld [vmem:[%s4 + $0xc0] sm:$0xf]
        %v1041 = vld [vmem:[%s4 + $0xc4] sm:$0xf]
        %v1042 = vld [vmem:[%s4 + $0xc8] sm:$0xf]
        %v1043 = vld [vmem:[%s4 + $0xcc] sm:$0xf]
        %v1044 = vld [vmem:[%s4 + $0xd0] sm:$0xf]
        %v1045 = vld [vmem:[%s4 + $0xd4] sm:$0xf]
        %v1046 = vld [vmem:[%s4 + $0xd8] sm:$0xf]
        %v1047 = vld [vmem:[%s4 + $0xdc] sm:$0xf]
        %v1048 = vld [vmem:[%s4 + $0xe0] sm:$0xf]
        %v1049 = vld [vmem:[%s4 + $0xe4] sm:$0xf]
        %v1050 = vld [vmem:[%s4 + $0xe8] sm:$0xf]
        %v1051 = vld [vmem:[%s4 + $0xec] sm:$0xf]
        %v1052 = vld [vmem:[%s4 + $0xf0] sm:$0xf]
        %v1053 = vld [vmem:[%s4 + $0xf4] sm:$0xf]
        %v1054 = vld [vmem:[%s4 + $0xf8] sm:$0xf]
        %v1055 = vld [vmem:[%s4 + $0xfc] sm:$0xf]
        %v1056 = vld [vmem:[%s4 + $0x100] sm:$0xf]
        %v1057 = vld [vmem:[%s4 + $0x104] sm:$0xf]
        %v1058 = vld [vmem:[%s4 + $0x108] sm:$0xf]
        %v1059 = vld [vmem:[%s4 + $0x10c] sm:$0xf]
        %v1060 = vld [vmem:[%s4 + $0x110] sm:$0xf]
        %v1061 = vld [vmem:[%s4 + $0x114] sm:$0xf]
        %v1062 = vld [vmem:[%s4 + $0x118] sm:$0xf]
        %v1063 = vld [vmem:[%s4 + $0x11c] sm:$0xf]
        %v1064 = vld [vmem:[%s4 + $0x120] sm:$0xf]
        %v1065 = vld [vmem:[%s4 + $0x124] sm:$0xf]
        %v1066 = vld [vmem:[%s4 + $0x128] sm:$0xf]
        %v1067 = vld [vmem:[%s4 + $0x12c] sm:$0xf]
        %v1068 = vld [vmem:[%s5] sm:$0x1]
        %v1070 = vlaneseq
        %v1071 = vshrl.u32 %v1070, 7
        %v1072 = vsub.s32 0, %v1071
        %v1073 = vrot.slane %v1068, %v1072
        %vm1075 = vsmask.f32 5376
        %v1077 = vshrl.u32 %v982, 16
        %v1079 = vrot.slane %v1077, 2
        %v1080 = vshll.u32 %v982, 16
        %v1082 = vrot.slane %v1080, 3
        %v1083 = vor.u32 %v1079, %v1082
        %v1085 = vshrl.u32 %v987, 16
        %v1087 = vrot.slane %v1085, 2
        %v1088 = vshll.u32 %v987, 16
        %v1090 = vrot.slane %v1088, 3
        %v1091 = vor.u32 %v1087, %v1090
        %v1092 = vsel %vm1075, %v1083, %v1091
        %v1094 = vshrl.u32 %v983, 16
        %v1096 = vrot.slane %v1094, 2
        %v1097 = vshll.u32 %v983, 16
        %v1099 = vrot.slane %v1097, 3
        %v1100 = vor.u32 %v1096, %v1099
        %v1102 = vshrl.u32 %v988, 16
        %v1104 = vrot.slane %v1102, 2
        %v1105 = vshll.u32 %v988, 16
        %v1107 = vrot.slane %v1105, 3
        %v1108 = vor.u32 %v1104, %v1107
        %v1109 = vsel %vm1075, %v1100, %v1108
        %v1111 = vshrl.u32 %v984, 16
        %v1113 = vrot.slane %v1111, 2
        %v1114 = vshll.u32 %v984, 16
        %v1116 = vrot.slane %v1114, 3
        %v1117 = vor.u32 %v1113, %v1116
        %v1119 = vshrl.u32 %v989, 16
        %v1121 = vrot.slane %v1119, 2
        %v1122 = vshll.u32 %v989, 16
        %v1124 = vrot.slane %v1122, 3
        %v1125 = vor.u32 %v1121, %v1124
        %v1126 = vsel %vm1075, %v1117, %v1125
        %v1128 = vshrl.u32 %v985, 16
        %v1130 = vrot.slane %v1128, 2
        %v1131 = vshll.u32 %v985, 16
        %v1133 = vrot.slane %v1131, 3
        %v1134 = vor.u32 %v1130, %v1133
        %v1136 = vshrl.u32 %v990, 16
        %v1138 = vrot.slane %v1136, 2
        %v1139 = vshll.u32 %v990, 16
        %v1141 = vrot.slane %v1139, 3
        %v1142 = vor.u32 %v1138, %v1141
        %v1143 = vsel %vm1075, %v1134, %v1142
        %v1145 = vshrl.u32 %v986, 16
        %v1147 = vrot.slane %v1145, 2
        %v1148 = vshll.u32 %v986, 16
        %v1150 = vrot.slane %v1148, 3
        %v1151 = vor.u32 %v1147, %v1150
        %v1153 = vshrl.u32 %v991, 16
        %v1155 = vrot.slane %v1153, 2
        %v1156 = vshll.u32 %v991, 16
        %v1158 = vrot.slane %v1156, 3
        %v1159 = vor.u32 %v1155, %v1158
        %v1160 = vsel %vm1075, %v1151, %v1159
        %v1241 = vunpack.c.l.b16 %v992
        %v1242 = vunpack.c.l.b16 %v993
        %v1243 = vunpack.c.l.b16 %v994
        %v1244 = vunpack.c.l.b16 %v995
        %v1245 = vunpack.c.l.b16 %v996
        %v1246 = vunpack.c.l.b16 %v997
        %v1247 = vunpack.c.l.b16 %v998
        %v1248 = vunpack.c.l.b16 %v999
        %v1249 = vunpack.c.l.b16 %v1000
        %v1250 = vunpack.c.l.b16 %v1001
        %v1251 = vunpack.c.l.b16 %v1002
        %v1252 = vunpack.c.l.b16 %v1003
        %v1253 = vunpack.c.l.b16 %v1004
        %v1254 = vunpack.c.l.b16 %v1005
        %v1255 = vunpack.c.l.b16 %v1006
        %v1256 = vunpack.c.l.b16 %v1007
        %v1257 = vunpack.c.l.b16 %v1008
        %v1258 = vunpack.c.l.b16 %v1009
        %v1259 = vunpack.c.l.b16 %v1010
        %v1260 = vunpack.c.l.b16 %v1011
        %v1261 = vunpack.c.l.b16 %v1012
        %v1262 = vunpack.c.l.b16 %v1013
        %v1263 = vunpack.c.l.b16 %v1014
        %v1264 = vunpack.c.l.b16 %v1015
        %v1265 = vunpack.c.l.b16 %v1016
        %v1266 = vunpack.c.l.b16 %v1017
        %v1267 = vunpack.c.l.b16 %v1018
        %v1268 = vunpack.c.l.b16 %v1019
        %v1269 = vunpack.c.l.b16 %v1020
        %v1270 = vunpack.c.l.b16 %v1021
        %v1271 = vunpack.c.l.b16 %v1022
        %v1272 = vunpack.c.l.b16 %v1023
        %v1273 = vunpack.c.l.b16 %v1024
        %v1274 = vunpack.c.l.b16 %v1025
        %v1275 = vunpack.c.l.b16 %v1026
        %v1276 = vunpack.c.l.b16 %v1027
        %v1277 = vunpack.c.l.b16 %v1028
        %v1278 = vunpack.c.l.b16 %v1029
        %v1279 = vunpack.c.l.b16 %v1030
        %v1280 = vunpack.c.l.b16 %v1031
        %v1281 = vunpack.c.l.b16 %v1032
        %v1282 = vunpack.c.l.b16 %v1033
        %v1283 = vunpack.c.l.b16 %v1034
        %v1284 = vunpack.c.l.b16 %v1035
        %v1285 = vunpack.c.l.b16 %v1036
        %v1286 = vunpack.c.l.b16 %v1037
        %v1287 = vunpack.c.l.b16 %v1038
        %v1288 = vunpack.c.l.b16 %v1039
        %v1289 = vunpack.c.l.b16 %v1040
        %v1290 = vunpack.c.l.b16 %v1041
        %v1291 = vunpack.c.l.b16 %v1042
        %v1292 = vunpack.c.l.b16 %v1043
        %v1293 = vunpack.c.l.b16 %v1044
        %v1294 = vunpack.c.l.b16 %v1045
        %v1295 = vunpack.c.l.b16 %v1046
        %v1296 = vunpack.c.l.b16 %v1047
        %v1297 = vunpack.c.l.b16 %v1048
        %v1298 = vunpack.c.l.b16 %v1049
        %v1299 = vunpack.c.l.b16 %v1050
        %v1300 = vunpack.c.l.b16 %v1051
        %v1301 = vunpack.c.l.b16 %v1052
        %v1302 = vunpack.c.l.b16 %v1053
        %v1303 = vunpack.c.l.b16 %v1054
        %v1304 = vunpack.c.l.b16 %v1055
        %v1305 = vunpack.c.l.b16 %v1056
        %v1306 = vunpack.c.l.b16 %v1057
        %v1307 = vunpack.c.l.b16 %v1058
        %v1308 = vunpack.c.l.b16 %v1059
        %v1309 = vunpack.c.l.b16 %v1060
        %v1310 = vunpack.c.l.b16 %v1061
        %v1311 = vunpack.c.l.b16 %v1062
        %v1312 = vunpack.c.l.b16 %v1063
        %v1313 = vunpack.c.l.b16 %v1064
        %v1314 = vunpack.c.l.b16 %v1065
        %v1315 = vunpack.c.l.b16 %v1066
        %v1316 = vunpack.c.l.b16 %v1067
        %v1317 = vpack.c.b16 %v1242, %v1241
        %v1318 = vpack.c.b16 %v1244, %v1243
        %v1319 = vpack.c.b16 %v1246, %v1245
        %v1320 = vpack.c.b16 %v1248, %v1247
        %v1321 = vpack.c.b16 %v1250, %v1249
        %v1322 = vpack.c.b16 %v1252, %v1251
        %v1323 = vpack.c.b16 %v1254, %v1253
        %v1324 = vpack.c.b16 %v1256, %v1255
        %v1325 = vpack.c.b16 %v1258, %v1257
        %v1326 = vpack.c.b16 %v1260, %v1259
        %v1327 = vpack.c.b16 %v1262, %v1261
        %v1328 = vpack.c.b16 %v1264, %v1263
        %v1329 = vpack.c.b16 %v1266, %v1265
        %v1330 = vpack.c.b16 %v1268, %v1267
        %v1331 = vpack.c.b16 %v1270, %v1269
        %v1332 = vpack.c.b16 %v1272, %v1271
        %v1333 = vpack.c.b16 %v1274, %v1273
        %v1334 = vpack.c.b16 %v1276, %v1275
        %v1335 = vpack.c.b16 %v1278, %v1277
        %v1336 = vpack.c.b16 %v1280, %v1279
        %v1337 = vpack.c.b16 %v1282, %v1281
        %v1338 = vpack.c.b16 %v1284, %v1283
        %v1339 = vpack.c.b16 %v1286, %v1285
        %v1340 = vpack.c.b16 %v1288, %v1287
        %v1341 = vpack.c.b16 %v1290, %v1289
        %v1342 = vpack.c.b16 %v1292, %v1291
        %v1343 = vpack.c.b16 %v1294, %v1293
        %v1344 = vpack.c.b16 %v1296, %v1295
        %v1345 = vpack.c.b16 %v1298, %v1297
        %v1346 = vpack.c.b16 %v1300, %v1299
        %v1347 = vpack.c.b16 %v1302, %v1301
        %v1348 = vpack.c.b16 %v1304, %v1303
        %v1349 = vpack.c.b16 %v1306, %v1305
        %v1350 = vpack.c.b16 %v1308, %v1307
        %v1351 = vpack.c.b16 %v1310, %v1309
        %v1352 = vpack.c.b16 %v1312, %v1311
        %v1353 = vpack.c.b16 %v1314, %v1313
        %v1354 = vpack.c.b16 %v1316, %v1315
        %v1394 = vsel %vm900, %v1160, 0
        %1396 = vmatprep.subr.bf16.mxu0 0
        %1397 = vmatpush1.bf16.msra.mxu0 %v1317
        %1398 = vmatprep.subr.bf16.mxu0 0
        %1399 = vmatpush1.bf16.msra.mxu0 %v1318
        %1400 = vmatprep.subr.bf16.mxu0 0
        %1401 = vmatpush1.bf16.msra.mxu0 %v1319
        %1402 = vmatprep.subr.bf16.mxu0 0
        %1403 = vmatpush1.bf16.msra.mxu0 %v1320
        %1404 = vmatprep.subr.bf16.mxu0 0
        %1405 = vmatpush1.bf16.msra.mxu0 %v1321
        %1406 = vmatprep.subr.bf16.mxu0 0
        %1407 = vmatpush1.bf16.msra.mxu0 %v1322
        %1408 = vmatprep.subr.bf16.mxu0 0
        %1409 = vmatpush1.bf16.msra.mxu0 %v1323
        %1410 = vmatprep.subr.bf16.mxu0 0
        %1411 = vmatpush1.bf16.msra.mxu0 %v1324
        %1412 = vmatprep.subr.bf16.mxu0 0
        %1413 = vmatpush1.bf16.msra.mxu0 %v1325
        %1414 = vmatprep.subr.bf16.mxu0 0
        %1415 = vmatpush1.bf16.msra.mxu0 %v1326
        %1416 = vmatprep.subr.bf16.mxu0 0
        %1417 = vmatpush1.bf16.msra.mxu0 %v1327
        %1418 = vmatprep.subr.bf16.mxu0 0
        %1419 = vmatpush1.bf16.msra.mxu0 %v1328
        %1420 = vmatprep.subr.bf16.mxu0 0
        %1421 = vmatpush1.bf16.msra.mxu0 %v1329
        %1422 = vmatprep.subr.bf16.mxu0 0
        %1423 = vmatpush1.bf16.msra.mxu0 %v1330
        %1424 = vmatprep.subr.bf16.mxu0 0
        %1425 = vmatpush1.bf16.msra.mxu0 %v1331
        %1426 = vmatprep.subr.bf16.mxu0 0
        %1427 = vmatpush1.bf16.msra.mxu0 %v1332
        %1428 = vmatprep.mubr.bf16.mxu0 %v1109
        %1429 = vmatmul.mubr.bf16.gmra.mrb[0].mxu0 %v1092
        %v1430 = vpop.f32.mrb[0].mxu0
        %v1431 = vadd.f32 %v1073, %v1430
        %v1432 = vpop.f32.mrb[0].mxu0
        %v1433 = vpop.f32.mrb[0].mxu0
        %v1434 = vadd.f32 %v1073, %v1433
        %v1435 = vpop.f32.mrb[0].mxu0
        %1436 = vdwg.mxu0
        %1437 = vmatprep.subr.bf16.mxu0 0
        %1438 = vmatpush1.bf16.msra.mxu0 %v1333
        %1439 = vmatprep.subr.bf16.mxu0 0
        %1440 = vmatpush1.bf16.msra.mxu0 %v1334
        %1441 = vmatprep.subr.bf16.mxu0 0
        %1442 = vmatpush1.bf16.msra.mxu0 %v1335
        %1443 = vmatprep.subr.bf16.mxu0 0
        %1444 = vmatpush1.bf16.msra.mxu0 %v1336
        %1445 = vmatprep.subr.bf16.mxu0 0
        %1446 = vmatpush1.bf16.msra.mxu0 %v1337
        %1447 = vmatprep.subr.bf16.mxu0 0
        %1448 = vmatpush1.bf16.msra.mxu0 %v1338
        %1449 = vmatprep.subr.bf16.mxu0 0
        %1450 = vmatpush1.bf16.msra.mxu0 %v1339
        %1451 = vmatprep.subr.bf16.mxu0 0
        %1452 = vmatpush1.bf16.msra.mxu0 %v1340
        %1453 = vmatprep.subr.bf16.mxu0 0
        %1454 = vmatpush1.bf16.msra.mxu0 %v1341
        %1455 = vmatprep.subr.bf16.mxu0 0
        %1456 = vmatpush1.bf16.msra.mxu0 %v1342
        %1457 = vmatprep.subr.bf16.mxu0 0
        %1458 = vmatpush1.bf16.msra.mxu0 %v1343
        %1459 = vmatprep.subr.bf16.mxu0 0
        %1460 = vmatpush1.bf16.msra.mxu0 %v1344
        %1461 = vmatprep.subr.bf16.mxu0 0
        %1462 = vmatpush1.bf16.msra.mxu0 %v1345
        %1463 = vmatprep.subr.bf16.mxu0 0
        %1464 = vmatpush1.bf16.msra.mxu0 %v1346
        %1465 = vmatprep.subr.bf16.mxu0 0
        %1466 = vmatpush1.bf16.msra.mxu0 %v1347
        %1467 = vmatprep.subr.bf16.mxu0 0
        %1468 = vmatpush1.bf16.msra.mxu0 %v1348
        %1469 = vmatprep.mubr.bf16.mxu0 %v1143
        %1470 = vmatmul.mubr.bf16.gmra.mrb[0].mxu0 %v1126
        %v1471 = vpop.f32.mrb[0].mxu0
        %v1472 = vadd.f32 %v1431, %v1471
        %v1473 = vpop.f32.mrb[0].mxu0
        %v1474 = vpop.f32.mrb[0].mxu0
        %v1475 = vadd.f32 %v1434, %v1474
        %v1476 = vpop.f32.mrb[0].mxu0
        %1477 = vdwg.mxu0
        %1478 = vmatprep.subr.bf16.mxu0 0
        %1479 = vmatpush1.bf16.msra.mxu0 %v1349
        %1480 = vmatprep.subr.bf16.mxu0 0
        %1481 = vmatpush1.bf16.msra.mxu0 %v1350
        %1482 = vmatprep.subr.bf16.mxu0 0
        %1483 = vmatpush1.bf16.msra.mxu0 %v1351
        %1484 = vmatprep.subr.bf16.mxu0 0
        %1485 = vmatpush1.bf16.msra.mxu0 %v1352
        %1486 = vmatprep.subr.bf16.mxu0 0
        %1487 = vmatpush1.bf16.msra.mxu0 %v1353
        %1488 = vmatprep.subr.bf16.mxu0 0
        %1489 = vmatpush1.bf16.msra.mxu0 %v1354
        %1490 = vmatprep.subr.bf16.mxu0 0
        %1491 = vmatpush1.bf16.msra.mxu0 0
        %1492 = vmatprep.subr.bf16.mxu0 0
        %1493 = vmatpush1.bf16.msra.mxu0 0
        %1494 = vmatprep.subr.bf16.mxu0 0
        %1495 = vmatpush1.bf16.msra.mxu0 0
        %1496 = vmatprep.subr.bf16.mxu0 0
        %1497 = vmatpush1.bf16.msra.mxu0 0
        %1498 = vmatprep.subr.bf16.mxu0 0
        %1499 = vmatpush1.bf16.msra.mxu0 0
        %1500 = vmatprep.subr.bf16.mxu0 0
        %1501 = vmatpush1.bf16.msra.mxu0 0
        %1502 = vmatprep.subr.bf16.mxu0 0
        %1503 = vmatpush1.bf16.msra.mxu0 0
        %1504 = vmatprep.subr.bf16.mxu0 0
        %1505 = vmatpush1.bf16.msra.mxu0 0
        %1506 = vmatprep.subr.bf16.mxu0 0
        %1507 = vmatpush1.bf16.msra.mxu0 0
        %1508 = vmatprep.subr.bf16.mxu0 0
        %1509 = vmatpush1.bf16.msra.mxu0 0
        %1510 = vmatprep.mubr.bf16.mxu0 0
        %1511 = vmatmul.mubr.bf16.gmra.mrb[0].mxu0 %v1394
        %v1512 = vpop.f32.mrb[0].mxu0
        %v1513 = vadd.f32 %v1472, %v1512
        %v1514 = vpop.f32.mrb[0].mxu0
        %v1515 = vpop.f32.mrb[0].mxu0
        %v1516 = vadd.f32 %v1475, %v1515
        %v1517 = vpop.f32.mrb[0].mxu0
        %1518 = vdwg.mxu0
        %v1519 = vmul.f32 %v1513, %v332
        %v1520 = vmul.f32 %v1516, %v331
        %v1521 = vmul.f32 %v1513, %v352
        %v1522 = vmul.f32 %v1513, %v373
        %v1523 = vmul.f32 %v1513, %v395
        %v1524 = vmul.f32 %v1516, %v394
        %v1525 = vmul.f32 %v1513, %v413
        %v1526 = vmul.f32 %v1513, %v431
        %v1527 = vmul.f32 %v1516, %v430
        %v1528 = vmul.f32 %v1513, %v451
        %v1529 = vmul.f32 %v1516, %v450
        %v1530 = vmul.f32 %v1513, %v471
        %v1531 = vmul.f32 %v1516, %v470
        %v1532 = vmul.f32 %v1513, %v491
        %v1533 = vmul.f32 %v1516, %v490
        %v1534 = vmul.f32 %v1513, %v510
        %v1535 = vmul.f32 %v1516, %v512
        %v1536 = vmul.f32 %v1513, %v530
        %v1537 = vmul.f32 %v1516, %v532
        %v1538 = vmul.f32 %v1513, %v551
        %v1539 = vmul.f32 %v1516, %v553
        %v1540 = vmul.f32 %v1513, %v571
        %v1541 = vmul.f32 %v1516, %v573
        %v1542 = vmul.f32 %v1516, %v586
        %v1543 = vmul.f32 %v1513, %v606
        %v1544 = vmul.f32 %v1516, %v608
        %v1545 = vmul.f32 %v1513, %v626
        %v1546 = vmul.f32 %v1516, %v628
        %v1547 = vmul.f32 %v1516, %v646
        %v1548 = vmul.f32 %v1516, %v666
        %v1550 = vrot.slane %v1521, 7
        %v1551 = vsel %vm509, %v679, %v1550
        %1552 = vrot.lane.b32.xlu0 %v1551, 32
        %v1553 = vpop.permute.xlu0 %1552
        %v1556 = vrot.slane %v1522, 2
        %v1557 = vsel %vm392, %v696, %v1556
        %1558 = vrot.lane.b32.xlu0 %v1557, 64
        %v1559 = vpop.permute.xlu0 %1558
        %1560 = vrot.lane.b32.xlu0 %v1556, 64
        %v1561 = vpop.permute.xlu0 %1560
        %v1566 = vrot.slane %v1523, 1
        %v1567 = vsel %vm371, %v712, %v1566
        %v1568 = vrot.slane %v1524, 1
        %v1569 = vsel %vm371, %v1566, %v1568
        %1570 = vrot.lane.b32.xlu0 %v1567, 96
        %v1571 = vpop.permute.xlu0 %1570
        %1572 = vrot.lane.b32.xlu0 %v1569, 96
        %v1573 = vpop.permute.xlu0 %1572
        %1574 = vrot.lane.b32.xlu0 %v1568, 96
        %v1575 = vpop.permute.xlu0 %1574
        %v1580 = vrot.slane %v1525, 3
        %v1581 = vsel %vm329, %v728, %v1580
        %v1586 = vrot.slane %v1526, 5
        %v1587 = vsel %vm550, %v737, %v1586
        %v1588 = vrot.slane %v1527, 5
        %v1589 = vsel %vm550, %v1586, %v1588
        %1590 = vrot.lane.b32.xlu0 %v1587, 32
        %v1591 = vpop.permute.xlu0 %1590
        %1592 = vrot.lane.b32.xlu0 %v1589, 32
        %v1593 = vpop.permute.xlu0 %1592
        %v1598 = vrot.slane %v1528, 2
        %v1599 = vsel %vm392, %v754, %v1598
        %v1600 = vrot.slane %v1529, 2
        %v1601 = vsel %vm392, %v1598, %v1600
        %1602 = vrot.lane.b32.xlu0 %v1599, 64
        %v1603 = vpop.permute.xlu0 %1602
        %1604 = vrot.lane.b32.xlu0 %v1601, 64
        %v1605 = vpop.permute.xlu0 %1604
        %1606 = vrot.lane.b32.xlu0 %v1600, 64
        %v1607 = vpop.permute.xlu0 %1606
        %v1613 = vrot.slane %v1530, 7
        %v1614 = vsel %vm509, %v771, %v1613
        %v1615 = vrot.slane %v1531, 7
        %v1616 = vsel %vm509, %v1613, %v1615
        %1617 = vrot.lane.b32.xlu0 %v1614, 96
        %v1618 = vpop.permute.xlu0 %1617
        %1619 = vrot.lane.b32.xlu0 %v1616, 96
        %v1620 = vpop.permute.xlu0 %1619
        %v1625 = vrot.slane %v1513, 3
        %v1626 = vrot.slane %v1516, 3
        %v1627 = vsel %vm329, %v1625, %v1626
        %1628 = vrot.lane.b32.xlu0 %v1625, 32
        %v1629 = vpop.permute.xlu0 %1628
        %1630 = vrot.lane.b32.xlu0 %v1627, 32
        %v1631 = vpop.permute.xlu0 %1630
        %1632 = vrot.lane.b32.xlu0 %v1626, 32
        %v1633 = vpop.permute.xlu0 %1632
        %v1639 = vrot.slane %v1534, 4
        %v1640 = vrot.slane %v1535, 4
        %v1641 = vsel %vm350, %v1639, %v1640
        %v1642 = vsel %vm350, %v1640, %v805
        %1643 = vrot.lane.b32.xlu0 %v1639, 64
        %v1644 = vpop.permute.xlu0 %1643
        %1645 = vrot.lane.b32.xlu0 %v1641, 64
        %v1646 = vpop.permute.xlu0 %1645
        %1647 = vrot.lane.b32.xlu0 %v1642, 64
        %v1648 = vpop.permute.xlu0 %1647
        %v1654 = vrot.slane %v1536, 7
        %v1655 = vrot.slane %v1537, 7
        %v1656 = vsel %vm509, %v1654, %v1655
        %v1657 = vsel %vm509, %v1655, %v822
        %1658 = vrot.lane.b32.xlu0 %v1654, 96
        %v1659 = vpop.permute.xlu0 %1658
        %1660 = vrot.lane.b32.xlu0 %v1656, 96
        %v1661 = vpop.permute.xlu0 %1660
        %1662 = vrot.lane.b32.xlu0 %v1657, 96
        %v1663 = vpop.permute.xlu0 %1662
        %v1669 = vrot.slane %v1538, 6
        %v1670 = vrot.slane %v1539, 6
        %v1671 = vsel %vm428, %v1669, %v1670
        %v1672 = vsel %vm428, %v1670, %v839
        %v1678 = vrot.slane %v1540, 5
        %v1679 = vrot.slane %v1541, 5
        %v1680 = vsel %vm550, %v1678, %v1679
        %v1681 = vsel %vm550, %v1679, %v850
        %1682 = vrot.lane.b32.xlu0 %v1678, 32
        %v1683 = vpop.permute.xlu0 %1682
        %1684 = vrot.lane.b32.xlu0 %v1680, 32
        %v1685 = vpop.permute.xlu0 %1684
        %1686 = vrot.lane.b32.xlu0 %v1681, 32
        %v1687 = vpop.permute.xlu0 %1686
        %v1692 = vrot.slane %v1542, 3
        %v1693 = vsel %vm329, %v1692, %v864
        %1694 = vrot.lane.b32.xlu0 %v1692, 64
        %v1695 = vpop.permute.xlu0 %1694
        %1696 = vrot.lane.b32.xlu0 %v1693, 64
        %v1697 = vpop.permute.xlu0 %1696
        %v1702 = vrot.slane %v1543, 1
        %v1703 = vrot.slane %v1544, 1
        %v1704 = vsel %vm371, %v1702, %v1703
        %v1705 = vsel %vm371, %v1703, %v881
        %1706 = vrot.lane.b32.xlu0 %v1704, 96
        %v1707 = vpop.permute.xlu0 %1706
        %1708 = vrot.lane.b32.xlu0 %v1705, 96
        %v1709 = vpop.permute.xlu0 %1708
        %v1712 = vsel %vm892, %v1519, %v686
        %v1713 = vsel %vm892, %v1520, %v1553
        %v1714 = vsel %vm896, %v1712, %v1559
        %v1715 = vsel %vm896, %v1713, %v1561
        %v1716 = vsel %vm900, %v897, %v1571
        %v1717 = vsel %vm900, %v1714, %v1573
        %v1718 = vsel %vm900, %v1715, %v1575
        %v1719 = vsel %vm892, %v1581, %v1591
        %v1720 = vsel %vm892, %v1580, %v1593
        %v1721 = vsel %vm896, %v904, %v1603
        %v1722 = vsel %vm896, %v1719, %v1605
        %v1723 = vsel %vm896, %v1720, %v1607
        %v1724 = vsel %vm900, %v1721, %v777
        %v1725 = vsel %vm900, %v1722, %v1618
        %v1726 = vsel %vm900, %v1723, %v1620
        %v1727 = vsel %vm892, %v495, %v1629
        %v1728 = vsel %vm892, %v1532, %v1631
        %v1729 = vsel %vm892, %v1533, %v1633
        %v1730 = vsel %vm896, %v1727, %v1644
        %v1731 = vsel %vm896, %v1728, %v1646
        %v1732 = vsel %vm896, %v1729, %v1648
        %v1733 = vsel %vm900, %v1730, %v1659
        %v1734 = vsel %vm900, %v1731, %v1661
        %v1735 = vsel %vm900, %v1732, %v1663
        %v1736 = vsel %vm892, %v1669, %v1683
        %v1737 = vsel %vm892, %v1671, %v1685
        %v1738 = vsel %vm892, %v1672, %v1687
        %v1739 = vsel %vm896, %v1736, %v1695
        %v1740 = vsel %vm896, %v1737, %v1697
        %v1741 = vsel %vm896, %v1738, %v871
        %v1742 = vsel %vm900, %v1739, %v1707
        %v1743 = vsel %vm900, %v1740, %v1709
        %v1744 = vsel %vm900, %v1741, %v888
        %v1746 = vrot.slane %v1547, 1
        %v1747 = vsel %vm371, %v1746, %v935
        %1748 = vrot.lane.b32.xlu0 %v1747, 32
        %v1749 = vpop.permute.xlu0 %1748
        %v1752 = vrot.slane %v1548, 6
        %v1753 = vsel %vm428, %v1752, %v952
        %1754 = vrot.lane.b32.xlu0 %v1752, 64
        %v1755 = vpop.permute.xlu0 %1754
        %1756 = vrot.lane.b32.xlu0 %v1753, 64
        %v1757 = vpop.permute.xlu0 %1756
        %v1760 = vsel %vm892, %v1545, %v1749
        %v1761 = vsel %vm892, %v1546, %v942
        %v1762 = vsel %vm896, %v1760, %v1755
        %v1763 = vsel %vm896, %v1761, %v1757
        %v1766 = vrot.slane %v1762, 6
        %v1767 = vrot.slane %v1763, 6
        %v1768 = vsel %vm428, %v1766, %v1767
        %v1769 = vsel %vm428, %v1767, %v977
        %v1773 = vpack.c.bf16 %v1717, %v1716
        %v1774 = vpack.c.bf16 %v1725, %v1724
        %v1775 = vpack.c.bf16 %v1734, %v1733
        %v1776 = vpack.c.bf16 %v1743, %v1742
        %v1777 = vpack.c.bf16 %v1768, %v1766
        %v1778 = vpack.c.bf16 %v1718, %v1718
        %v1779 = vpack.c.bf16 %v1726, %v1726
        %v1780 = vpack.c.bf16 %v1735, %v1735
        %v1781 = vpack.c.bf16 %v1744, %v1744
        %v1782 = vpack.c.bf16 %v1769, %v1769
        %s1783 = scalar_lea.vmem %s4, 304
        %v1784 = vld [vmem:[%s1783] sm:$0xf]
        %v1785 = vld [vmem:[%s1783 + $0x4] sm:$0xf]
        %v1786 = vld [vmem:[%s1783 + $0x8] sm:$0xf]
        %v1787 = vld [vmem:[%s1783 + $0xc] sm:$0xf]
        %v1788 = vld [vmem:[%s1783 + $0x10] sm:$0xf]
        %v1789 = vld [vmem:[%s1783 + $0x14] sm:$0xf]
        %v1790 = vld [vmem:[%s1783 + $0x18] sm:$0xf]
        %v1791 = vld [vmem:[%s1783 + $0x1c] sm:$0xf]
        %v1792 = vld [vmem:[%s1783 + $0x20] sm:$0xf]
        %v1793 = vld [vmem:[%s1783 + $0x24] sm:$0xf]
        %v1794 = vld [vmem:[%s1783 + $0x28] sm:$0xf]
        %v1795 = vld [vmem:[%s1783 + $0x2c] sm:$0xf]
        %v1796 = vld [vmem:[%s1783 + $0x30] sm:$0xf]
        %v1797 = vld [vmem:[%s1783 + $0x34] sm:$0xf]
        %v1798 = vld [vmem:[%s1783 + $0x38] sm:$0xf]
        %v1799 = vld [vmem:[%s1783 + $0x3c] sm:$0xf]
        %v1800 = vld [vmem:[%s1783 + $0x40] sm:$0xf]
        %v1801 = vld [vmem:[%s1783 + $0x44] sm:$0xf]
        %v1802 = vld [vmem:[%s1783 + $0x48] sm:$0xf]
        %v1803 = vld [vmem:[%s1783 + $0x4c] sm:$0xf]
        %v1804 = vld [vmem:[%s1783 + $0x50] sm:$0xf]
        %v1805 = vld [vmem:[%s1783 + $0x54] sm:$0xf]
        %v1806 = vld [vmem:[%s1783 + $0x58] sm:$0xf]
        %v1807 = vld [vmem:[%s1783 + $0x5c] sm:$0xf]
        %v1808 = vld [vmem:[%s1783 + $0x60] sm:$0xf]
        %v1809 = vld [vmem:[%s1783 + $0x64] sm:$0xf]
        %v1810 = vld [vmem:[%s1783 + $0x68] sm:$0xf]
        %v1811 = vld [vmem:[%s1783 + $0x6c] sm:$0xf]
        %v1812 = vld [vmem:[%s1783 + $0x70] sm:$0xf]
        %v1813 = vld [vmem:[%s1783 + $0x74] sm:$0xf]
        %v1814 = vld [vmem:[%s1783 + $0x78] sm:$0xf]
        %v1815 = vld [vmem:[%s1783 + $0x7c] sm:$0xf]
        %v1816 = vld [vmem:[%s1783 + $0x80] sm:$0xf]
        %v1817 = vld [vmem:[%s1783 + $0x84] sm:$0xf]
        %v1818 = vld [vmem:[%s1783 + $0x88] sm:$0xf]
        %v1819 = vld [vmem:[%s1783 + $0x8c] sm:$0xf]
        %v1820 = vld [vmem:[%s1783 + $0x90] sm:$0xf]
        %v1821 = vld [vmem:[%s1783 + $0x94] sm:$0xf]
        %v1822 = vld [vmem:[%s1783 + $0x98] sm:$0xf]
        %v1823 = vld [vmem:[%s1783 + $0x9c] sm:$0xf]
        %v1824 = vld [vmem:[%s1783 + $0xa0] sm:$0xf]
        %v1825 = vld [vmem:[%s1783 + $0xa4] sm:$0xf]
        %v1826 = vld [vmem:[%s1783 + $0xa8] sm:$0xf]
        %v1827 = vld [vmem:[%s1783 + $0xac] sm:$0xf]
        %v1828 = vld [vmem:[%s1783 + $0xb0] sm:$0xf]
        %v1829 = vld [vmem:[%s1783 + $0xb4] sm:$0xf]
        %v1830 = vld [vmem:[%s1783 + $0xb8] sm:$0xf]
        %v1831 = vld [vmem:[%s1783 + $0xbc] sm:$0xf]
        %v1832 = vld [vmem:[%s1783 + $0xc0] sm:$0xf]
        %v1833 = vld [vmem:[%s1783 + $0xc4] sm:$0xf]
        %v1834 = vld [vmem:[%s1783 + $0xc8] sm:$0xf]
        %v1835 = vld [vmem:[%s1783 + $0xcc] sm:$0xf]
        %v1836 = vld [vmem:[%s1783 + $0xd0] sm:$0xf]
        %v1837 = vld [vmem:[%s1783 + $0xd4] sm:$0xf]
        %v1838 = vld [vmem:[%s1783 + $0xd8] sm:$0xf]
        %v1839 = vld [vmem:[%s1783 + $0xdc] sm:$0xf]
        %v1840 = vld [vmem:[%s1783 + $0xe0] sm:$0xf]
        %v1841 = vld [vmem:[%s1783 + $0xe4] sm:$0xf]
        %v1842 = vld [vmem:[%s1783 + $0xe8] sm:$0xf]
        %v1843 = vld [vmem:[%s1783 + $0xec] sm:$0xf]
        %v1844 = vld [vmem:[%s1783 + $0xf0] sm:$0xf]
        %v1845 = vld [vmem:[%s1783 + $0xf4] sm:$0xf]
        %v1846 = vld [vmem:[%s1783 + $0xf8] sm:$0xf]
        %v1847 = vld [vmem:[%s1783 + $0xfc] sm:$0xf]
        %v1848 = vld [vmem:[%s1783 + $0x100] sm:$0xf]
        %v1849 = vld [vmem:[%s1783 + $0x104] sm:$0xf]
        %v1850 = vld [vmem:[%s1783 + $0x108] sm:$0xf]
        %v1851 = vld [vmem:[%s1783 + $0x10c] sm:$0xf]
        %v1852 = vld [vmem:[%s1783 + $0x110] sm:$0xf]
        %v1853 = vld [vmem:[%s1783 + $0x114] sm:$0xf]
        %v1854 = vld [vmem:[%s1783 + $0x118] sm:$0xf]
        %v1855 = vld [vmem:[%s1783 + $0x11c] sm:$0xf]
        %v1856 = vld [vmem:[%s1783 + $0x120] sm:$0xf]
        %v1857 = vld [vmem:[%s1783 + $0x124] sm:$0xf]
        %v1858 = vld [vmem:[%s1783 + $0x128] sm:$0xf]
        %v1859 = vld [vmem:[%s1783 + $0x12c] sm:$0xf]
        %s1860 = scalar_lea.vmem %s5, 1
        %v1861 = vld [vmem:[%s1860] sm:$0x1]
        %v1863 = vlaneseq
        %v1864 = vshrl.u32 %v1863, 7
        %v1865 = vsub.s32 0, %v1864
        %v1866 = vrot.slane %v1861, %v1865
        %v1869 = vshrl.u32 %v1773, 16
        %v1871 = vrot.slane %v1869, 2
        %v1872 = vshll.u32 %v1773, 16
        %v1874 = vrot.slane %v1872, 3
        %v1875 = vor.u32 %v1871, %v1874
        %v1877 = vshrl.u32 %v1778, 16
        %v1879 = vrot.slane %v1877, 2
        %v1880 = vshll.u32 %v1778, 16
        %v1882 = vrot.slane %v1880, 3
        %v1883 = vor.u32 %v1879, %v1882
        %v1884 = vsel %vm1075, %v1875, %v1883
        %v1886 = vshrl.u32 %v1774, 16
        %v1888 = vrot.slane %v1886, 2
        %v1889 = vshll.u32 %v1774, 16
        %v1891 = vrot.slane %v1889, 3
        %v1892 = vor.u32 %v1888, %v1891
        %v1894 = vshrl.u32 %v1779, 16
        %v1896 = vrot.slane %v1894, 2
        %v1897 = vshll.u32 %v1779, 16
        %v1899 = vrot.slane %v1897, 3
        %v1900 = vor.u32 %v1896, %v1899
        %v1901 = vsel %vm1075, %v1892, %v1900
        %v1903 = vshrl.u32 %v1775, 16
        %v1905 = vrot.slane %v1903, 2
        %v1906 = vshll.u32 %v1775, 16
        %v1908 = vrot.slane %v1906, 3
        %v1909 = vor.u32 %v1905, %v1908
        %v1911 = vshrl.u32 %v1780, 16
        %v1913 = vrot.slane %v1911, 2
        %v1914 = vshll.u32 %v1780, 16
        %v1916 = vrot.slane %v1914, 3
        %v1917 = vor.u32 %v1913, %v1916
        %v1918 = vsel %vm1075, %v1909, %v1917
        %v1920 = vshrl.u32 %v1776, 16
        %v1922 = vrot.slane %v1920, 2
        %v1923 = vshll.u32 %v1776, 16
        %v1925 = vrot.slane %v1923, 3
        %v1926 = vor.u32 %v1922, %v1925
        %v1928 = vshrl.u32 %v1781, 16
        %v1930 = vrot.slane %v1928, 2
        %v1931 = vshll.u32 %v1781, 16
        %v1933 = vrot.slane %v1931, 3
        %v1934 = vor.u32 %v1930, %v1933
        %v1935 = vsel %vm1075, %v1926, %v1934
        %v1937 = vshrl.u32 %v1777, 16
        %v1939 = vrot.slane %v1937, 2
        %v1940 = vshll.u32 %v1777, 16
        %v1942 = vrot.slane %v1940, 3
        %v1943 = vor.u32 %v1939, %v1942
        %v1945 = vshrl.u32 %v1782, 16
        %v1947 = vrot.slane %v1945, 2
        %v1948 = vshll.u32 %v1782, 16
        %v1950 = vrot.slane %v1948, 3
        %v1951 = vor.u32 %v1947, %v1950
        %v1952 = vsel %vm1075, %v1943, %v1951
        %v2033 = vunpack.c.l.b16 %v1784
        %v2034 = vunpack.c.l.b16 %v1785
        %v2035 = vunpack.c.l.b16 %v1786
        %v2036 = vunpack.c.l.b16 %v1787
        %v2037 = vunpack.c.l.b16 %v1788
        %v2038 = vunpack.c.l.b16 %v1789
        %v2039 = vunpack.c.l.b16 %v1790
        %v2040 = vunpack.c.l.b16 %v1791
        %v2041 = vunpack.c.l.b16 %v1792
        %v2042 = vunpack.c.l.b16 %v1793
        %v2043 = vunpack.c.l.b16 %v1794
        %v2044 = vunpack.c.l.b16 %v1795
        %v2045 = vunpack.c.l.b16 %v1796
        %v2046 = vunpack.c.l.b16 %v1797
        %v2047 = vunpack.c.l.b16 %v1798
        %v2048 = vunpack.c.l.b16 %v1799
        %v2049 = vunpack.c.l.b16 %v1800
        %v2050 = vunpack.c.l.b16 %v1801
        %v2051 = vunpack.c.l.b16 %v1802
        %v2052 = vunpack.c.l.b16 %v1803
        %v2053 = vunpack.c.l.b16 %v1804
        %v2054 = vunpack.c.l.b16 %v1805
        %v2055 = vunpack.c.l.b16 %v1806
        %v2056 = vunpack.c.l.b16 %v1807
        %v2057 = vunpack.c.l.b16 %v1808
        %v2058 = vunpack.c.l.b16 %v1809
        %v2059 = vunpack.c.l.b16 %v1810
        %v2060 = vunpack.c.l.b16 %v1811
        %v2061 = vunpack.c.l.b16 %v1812
        %v2062 = vunpack.c.l.b16 %v1813
        %v2063 = vunpack.c.l.b16 %v1814
        %v2064 = vunpack.c.l.b16 %v1815
        %v2065 = vunpack.c.l.b16 %v1816
        %v2066 = vunpack.c.l.b16 %v1817
        %v2067 = vunpack.c.l.b16 %v1818
        %v2068 = vunpack.c.l.b16 %v1819
        %v2069 = vunpack.c.l.b16 %v1820
        %v2070 = vunpack.c.l.b16 %v1821
        %v2071 = vunpack.c.l.b16 %v1822
        %v2072 = vunpack.c.l.b16 %v1823
        %v2073 = vunpack.c.l.b16 %v1824
        %v2074 = vunpack.c.l.b16 %v1825
        %v2075 = vunpack.c.l.b16 %v1826
        %v2076 = vunpack.c.l.b16 %v1827
        %v2077 = vunpack.c.l.b16 %v1828
        %v2078 = vunpack.c.l.b16 %v1829
        %v2079 = vunpack.c.l.b16 %v1830
        %v2080 = vunpack.c.l.b16 %v1831
        %v2081 = vunpack.c.l.b16 %v1832
        %v2082 = vunpack.c.l.b16 %v1833
        %v2083 = vunpack.c.l.b16 %v1834
        %v2084 = vunpack.c.l.b16 %v1835
        %v2085 = vunpack.c.l.b16 %v1836
        %v2086 = vunpack.c.l.b16 %v1837
        %v2087 = vunpack.c.l.b16 %v1838
        %v2088 = vunpack.c.l.b16 %v1839
        %v2089 = vunpack.c.l.b16 %v1840
        %v2090 = vunpack.c.l.b16 %v1841
        %v2091 = vunpack.c.l.b16 %v1842
        %v2092 = vunpack.c.l.b16 %v1843
        %v2093 = vunpack.c.l.b16 %v1844
        %v2094 = vunpack.c.l.b16 %v1845
        %v2095 = vunpack.c.l.b16 %v1846
        %v2096 = vunpack.c.l.b16 %v1847
        %v2097 = vunpack.c.l.b16 %v1848
        %v2098 = vunpack.c.l.b16 %v1849
        %v2099 = vunpack.c.l.b16 %v1850
        %v2100 = vunpack.c.l.b16 %v1851
        %v2101 = vunpack.c.l.b16 %v1852
        %v2102 = vunpack.c.l.b16 %v1853
        %v2103 = vunpack.c.l.b16 %v1854
        %v2104 = vunpack.c.l.b16 %v1855
        %v2105 = vunpack.c.l.b16 %v1856
        %v2106 = vunpack.c.l.b16 %v1857
        %v2107 = vunpack.c.l.b16 %v1858
        %v2108 = vunpack.c.l.b16 %v1859
        %v2109 = vpack.c.b16 %v2034, %v2033
        %v2110 = vpack.c.b16 %v2036, %v2035
        %v2111 = vpack.c.b16 %v2038, %v2037
        %v2112 = vpack.c.b16 %v2040, %v2039
        %v2113 = vpack.c.b16 %v2042, %v2041
        %v2114 = vpack.c.b16 %v2044, %v2043
        %v2115 = vpack.c.b16 %v2046, %v2045
        %v2116 = vpack.c.b16 %v2048, %v2047
        %v2117 = vpack.c.b16 %v2050, %v2049
        %v2118 = vpack.c.b16 %v2052, %v2051
        %v2119 = vpack.c.b16 %v2054, %v2053
        %v2120 = vpack.c.b16 %v2056, %v2055
        %v2121 = vpack.c.b16 %v2058, %v2057
        %v2122 = vpack.c.b16 %v2060, %v2059
        %v2123 = vpack.c.b16 %v2062, %v2061
        %v2124 = vpack.c.b16 %v2064, %v2063
        %v2125 = vpack.c.b16 %v2066, %v2065
        %v2126 = vpack.c.b16 %v2068, %v2067
        %v2127 = vpack.c.b16 %v2070, %v2069
        %v2128 = vpack.c.b16 %v2072, %v2071
        %v2129 = vpack.c.b16 %v2074, %v2073
        %v2130 = vpack.c.b16 %v2076, %v2075
        %v2131 = vpack.c.b16 %v2078, %v2077
        %v2132 = vpack.c.b16 %v2080, %v2079
        %v2133 = vpack.c.b16 %v2082, %v2081
        %v2134 = vpack.c.b16 %v2084, %v2083
        %v2135 = vpack.c.b16 %v2086, %v2085
        %v2136 = vpack.c.b16 %v2088, %v2087
        %v2137 = vpack.c.b16 %v2090, %v2089
        %v2138 = vpack.c.b16 %v2092, %v2091
        %v2139 = vpack.c.b16 %v2094, %v2093
        %v2140 = vpack.c.b16 %v2096, %v2095
        %v2141 = vpack.c.b16 %v2098, %v2097
        %v2142 = vpack.c.b16 %v2100, %v2099
        %v2143 = vpack.c.b16 %v2102, %v2101
        %v2144 = vpack.c.b16 %v2104, %v2103
        %v2145 = vpack.c.b16 %v2106, %v2105
        %v2146 = vpack.c.b16 %v2108, %v2107
        %v2186 = vsel %vm900, %v1952, 0
        %2188 = vmatprep.subr.bf16.mxu0 0
        %2189 = vmatpush1.bf16.msra.mxu0 %v2109
        %2190 = vmatprep.subr.bf16.mxu0 0
        %2191 = vmatpush1.bf16.msra.mxu0 %v2110
        %2192 = vmatprep.subr.bf16.mxu0 0
        %2193 = vmatpush1.bf16.msra.mxu0 %v2111
        %2194 = vmatprep.subr.bf16.mxu0 0
        %2195 = vmatpush1.bf16.msra.mxu0 %v2112
        %2196 = vmatprep.subr.bf16.mxu0 0
        %2197 = vmatpush1.bf16.msra.mxu0 %v2113
        %2198 = vmatprep.subr.bf16.mxu0 0
        %2199 = vmatpush1.bf16.msra.mxu0 %v2114
        %2200 = vmatprep.subr.bf16.mxu0 0
        %2201 = vmatpush1.bf16.msra.mxu0 %v2115
        %2202 = vmatprep.subr.bf16.mxu0 0
        %2203 = vmatpush1.bf16.msra.mxu0 %v2116
        %2204 = vmatprep.subr.bf16.mxu0 0
        %2205 = vmatpush1.bf16.msra.mxu0 %v2117
        %2206 = vmatprep.subr.bf16.mxu0 0
        %2207 = vmatpush1.bf16.msra.mxu0 %v2118
        %2208 = vmatprep.subr.bf16.mxu0 0
        %2209 = vmatpush1.bf16.msra.mxu0 %v2119
        %2210 = vmatprep.subr.bf16.mxu0 0
        %2211 = vmatpush1.bf16.msra.mxu0 %v2120
        %2212 = vmatprep.subr.bf16.mxu0 0
        %2213 = vmatpush1.bf16.msra.mxu0 %v2121
        %2214 = vmatprep.subr.bf16.mxu0 0
        %2215 = vmatpush1.bf16.msra.mxu0 %v2122
        %2216 = vmatprep.subr.bf16.mxu0 0
        %2217 = vmatpush1.bf16.msra.mxu0 %v2123
        %2218 = vmatprep.subr.bf16.mxu0 0
        %2219 = vmatpush1.bf16.msra.mxu0 %v2124
        %2220 = vmatprep.mubr.bf16.mxu0 %v1901
        %2221 = vmatmul.mubr.bf16.gmra.mrb[0].mxu0 %v1884
        %v2222 = vpop.f32.mrb[0].mxu0
        %v2223 = vadd.f32 %v1866, %v2222
        %v2224 = vpop.f32.mrb[0].mxu0
        %v2225 = vpop.f32.mrb[0].mxu0
        %v2226 = vadd.f32 %v1866, %v2225
        %v2227 = vpop.f32.mrb[0].mxu0
        %2228 = vdwg.mxu0
        %2229 = vmatprep.subr.bf16.mxu0 0
        %2230 = vmatpush1.bf16.msra.mxu0 %v2125
        %2231 = vmatprep.subr.bf16.mxu0 0
        %2232 = vmatpush1.bf16.msra.mxu0 %v2126
        %2233 = vmatprep.subr.bf16.mxu0 0
        %2234 = vmatpush1.bf16.msra.mxu0 %v2127
        %2235 = vmatprep.subr.bf16.mxu0 0
        %2236 = vmatpush1.bf16.msra.mxu0 %v2128
        %2237 = vmatprep.subr.bf16.mxu0 0
        %2238 = vmatpush1.bf16.msra.mxu0 %v2129
        %2239 = vmatprep.subr.bf16.mxu0 0
        %2240 = vmatpush1.bf16.msra.mxu0 %v2130
        %2241 = vmatprep.subr.bf16.mxu0 0
        %2242 = vmatpush1.bf16.msra.mxu0 %v2131
        %2243 = vmatprep.subr.bf16.mxu0 0
        %2244 = vmatpush1.bf16.msra.mxu0 %v2132
        %2245 = vmatprep.subr.bf16.mxu0 0
        %2246 = vmatpush1.bf16.msra.mxu0 %v2133
        %2247 = vmatprep.subr.bf16.mxu0 0
        %2248 = vmatpush1.bf16.msra.mxu0 %v2134
        %2249 = vmatprep.subr.bf16.mxu0 0
        %2250 = vmatpush1.bf16.msra.mxu0 %v2135
        %2251 = vmatprep.subr.bf16.mxu0 0
        %2252 = vmatpush1.bf16.msra.mxu0 %v2136
        %2253 = vmatprep.subr.bf16.mxu0 0
        %2254 = vmatpush1.bf16.msra.mxu0 %v2137
        %2255 = vmatprep.subr.bf16.mxu0 0
        %2256 = vmatpush1.bf16.msra.mxu0 %v2138
        %2257 = vmatprep.subr.bf16.mxu0 0
        %2258 = vmatpush1.bf16.msra.mxu0 %v2139
        %2259 = vmatprep.subr.bf16.mxu0 0
        %2260 = vmatpush1.bf16.msra.mxu0 %v2140
        %2261 = vmatprep.mubr.bf16.mxu0 %v1935
        %2262 = vmatmul.mubr.bf16.gmra.mrb[0].mxu0 %v1918
        %v2263 = vpop.f32.mrb[0].mxu0
        %v2264 = vadd.f32 %v2223, %v2263
        %v2265 = vpop.f32.mrb[0].mxu0
        %v2266 = vpop.f32.mrb[0].mxu0
        %v2267 = vadd.f32 %v2226, %v2266
        %v2268 = vpop.f32.mrb[0].mxu0
        %2269 = vdwg.mxu0
        %2270 = vmatprep.subr.bf16.mxu0 0
        %2271 = vmatpush1.bf16.msra.mxu0 %v2141
        %2272 = vmatprep.subr.bf16.mxu0 0
        %2273 = vmatpush1.bf16.msra.mxu0 %v2142
        %2274 = vmatprep.subr.bf16.mxu0 0
        %2275 = vmatpush1.bf16.msra.mxu0 %v2143
        %2276 = vmatprep.subr.bf16.mxu0 0
        %2277 = vmatpush1.bf16.msra.mxu0 %v2144
        %2278 = vmatprep.subr.bf16.mxu0 0
        %2279 = vmatpush1.bf16.msra.mxu0 %v2145
        %2280 = vmatprep.subr.bf16.mxu0 0
        %2281 = vmatpush1.bf16.msra.mxu0 %v2146
        %2282 = vmatprep.subr.bf16.mxu0 0
        %2283 = vmatpush1.bf16.msra.mxu0 0
        %2284 = vmatprep.subr.bf16.mxu0 0
        %2285 = vmatpush1.bf16.msra.mxu0 0
        %2286 = vmatprep.subr.bf16.mxu0 0
        %2287 = vmatpush1.bf16.msra.mxu0 0
        %2288 = vmatprep.subr.bf16.mxu0 0
        %2289 = vmatpush1.bf16.msra.mxu0 0
        %2290 = vmatprep.subr.bf16.mxu0 0
        %2291 = vmatpush1.bf16.msra.mxu0 0
        %2292 = vmatprep.subr.bf16.mxu0 0
        %2293 = vmatpush1.bf16.msra.mxu0 0
        %2294 = vmatprep.subr.bf16.mxu0 0
        %2295 = vmatpush1.bf16.msra.mxu0 0
        %2296 = vmatprep.subr.bf16.mxu0 0
        %2297 = vmatpush1.bf16.msra.mxu0 0
        %2298 = vmatprep.subr.bf16.mxu0 0
        %2299 = vmatpush1.bf16.msra.mxu0 0
        %2300 = vmatprep.subr.bf16.mxu0 0
        %2301 = vmatpush1.bf16.msra.mxu0 0
        %2302 = vmatprep.mubr.bf16.mxu0 0
        %2303 = vmatmul.mubr.bf16.gmra.mrb[0].mxu0 %v2186
        %v2304 = vpop.f32.mrb[0].mxu0
        %v2305 = vadd.f32 %v2264, %v2304
        %v2306 = vpop.f32.mrb[0].mxu0
        %v2307 = vpop.f32.mrb[0].mxu0
        %v2308 = vadd.f32 %v2267, %v2307
        %v2309 = vpop.f32.mrb[0].mxu0
        %2310 = vdwg.mxu0
        %v2311 = vmax.f32 %v2305, 0.0
        %v2312 = vmax.f32 %v2308, 0.0
        %v2313 = vmul.f32 %v2311, %v332
        %v2314 = vmul.f32 %v2312, %v331
        %v2315 = vmul.f32 %v2311, %v352
        %v2316 = vmul.f32 %v2311, %v373
        %v2317 = vmul.f32 %v2311, %v395
        %v2318 = vmul.f32 %v2312, %v394
        %v2319 = vmul.f32 %v2311, %v413
        %v2320 = vmul.f32 %v2311, %v431
        %v2321 = vmul.f32 %v2312, %v430
        %v2322 = vmul.f32 %v2311, %v451
        %v2323 = vmul.f32 %v2312, %v450
        %v2324 = vmul.f32 %v2311, %v471
        %v2325 = vmul.f32 %v2312, %v470
        %v2326 = vmul.f32 %v2311, %v491
        %v2327 = vmul.f32 %v2312, %v490
        %v2328 = vmul.f32 %v2311, %v510
        %v2329 = vmul.f32 %v2312, %v512
        %v2330 = vmul.f32 %v2311, %v530
        %v2331 = vmul.f32 %v2312, %v532
        %v2332 = vmul.f32 %v2311, %v551
        %v2333 = vmul.f32 %v2312, %v553
        %v2334 = vmul.f32 %v2311, %v571
        %v2335 = vmul.f32 %v2312, %v573
        %v2336 = vmul.f32 %v2312, %v586
        %v2337 = vmul.f32 %v2311, %v606
        %v2338 = vmul.f32 %v2312, %v608
        %v2339 = vmul.f32 %v2311, %v626
        %v2340 = vmul.f32 %v2312, %v628
        %v2341 = vmul.f32 %v2312, %v646
        %v2342 = vmul.f32 %v2312, %v666
        %v2344 = vrot.slane %v2315, 7
        %v2345 = vsel %vm509, %v679, %v2344
        %2346 = vrot.lane.b32.xlu0 %v2345, 32
        %v2347 = vpop.permute.xlu0 %2346
        %v2350 = vrot.slane %v2316, 2
        %v2351 = vsel %vm392, %v696, %v2350
        %2352 = vrot.lane.b32.xlu0 %v2351, 64
        %v2353 = vpop.permute.xlu0 %2352
        %2354 = vrot.lane.b32.xlu0 %v2350, 64
        %v2355 = vpop.permute.xlu0 %2354
        %v2360 = vrot.slane %v2317, 1
        %v2361 = vsel %vm371, %v712, %v2360
        %v2362 = vrot.slane %v2318, 1
        %v2363 = vsel %vm371, %v2360, %v2362
        %2364 = vrot.lane.b32.xlu0 %v2361, 96
        %v2365 = vpop.permute.xlu0 %2364
        %2366 = vrot.lane.b32.xlu0 %v2363, 96
        %v2367 = vpop.permute.xlu0 %2366
        %2368 = vrot.lane.b32.xlu0 %v2362, 96
        %v2369 = vpop.permute.xlu0 %2368
        %v2374 = vrot.slane %v2319, 3
        %v2375 = vsel %vm329, %v728, %v2374
        %v2380 = vrot.slane %v2320, 5
        %v2381 = vsel %vm550, %v737, %v2380
        %v2382 = vrot.slane %v2321, 5
        %v2383 = vsel %vm550, %v2380, %v2382
        %2384 = vrot.lane.b32.xlu0 %v2381, 32
        %v2385 = vpop.permute.xlu0 %2384
        %2386 = vrot.lane.b32.xlu0 %v2383, 32
        %v2387 = vpop.permute.xlu0 %2386
        %v2392 = vrot.slane %v2322, 2
        %v2393 = vsel %vm392, %v754, %v2392
        %v2394 = vrot.slane %v2323, 2
        %v2395 = vsel %vm392, %v2392, %v2394
        %2396 = vrot.lane.b32.xlu0 %v2393, 64
        %v2397 = vpop.permute.xlu0 %2396
        %2398 = vrot.lane.b32.xlu0 %v2395, 64
        %v2399 = vpop.permute.xlu0 %2398
        %2400 = vrot.lane.b32.xlu0 %v2394, 64
        %v2401 = vpop.permute.xlu0 %2400
        %v2407 = vrot.slane %v2324, 7
        %v2408 = vsel %vm509, %v771, %v2407
        %v2409 = vrot.slane %v2325, 7
        %v2410 = vsel %vm509, %v2407, %v2409
        %2411 = vrot.lane.b32.xlu0 %v2408, 96
        %v2412 = vpop.permute.xlu0 %2411
        %2413 = vrot.lane.b32.xlu0 %v2410, 96
        %v2414 = vpop.permute.xlu0 %2413
        %v2419 = vrot.slane %v2311, 3
        %v2420 = vrot.slane %v2312, 3
        %v2421 = vsel %vm329, %v2419, %v2420
        %2422 = vrot.lane.b32.xlu0 %v2419, 32
        %v2423 = vpop.permute.xlu0 %2422
        %2424 = vrot.lane.b32.xlu0 %v2421, 32
        %v2425 = vpop.permute.xlu0 %2424
        %2426 = vrot.lane.b32.xlu0 %v2420, 32
        %v2427 = vpop.permute.xlu0 %2426
        %v2433 = vrot.slane %v2328, 4
        %v2434 = vrot.slane %v2329, 4
        %v2435 = vsel %vm350, %v2433, %v2434
        %v2436 = vsel %vm350, %v2434, %v805
        %2437 = vrot.lane.b32.xlu0 %v2433, 64
        %v2438 = vpop.permute.xlu0 %2437
        %2439 = vrot.lane.b32.xlu0 %v2435, 64
        %v2440 = vpop.permute.xlu0 %2439
        %2441 = vrot.lane.b32.xlu0 %v2436, 64
        %v2442 = vpop.permute.xlu0 %2441
        %v2448 = vrot.slane %v2330, 7
        %v2449 = vrot.slane %v2331, 7
        %v2450 = vsel %vm509, %v2448, %v2449
        %v2451 = vsel %vm509, %v2449, %v822
        %2452 = vrot.lane.b32.xlu0 %v2448, 96
        %v2453 = vpop.permute.xlu0 %2452
        %2454 = vrot.lane.b32.xlu0 %v2450, 96
        %v2455 = vpop.permute.xlu0 %2454
        %2456 = vrot.lane.b32.xlu0 %v2451, 96
        %v2457 = vpop.permute.xlu0 %2456
        %v2463 = vrot.slane %v2332, 6
        %v2464 = vrot.slane %v2333, 6
        %v2465 = vsel %vm428, %v2463, %v2464
        %v2466 = vsel %vm428, %v2464, %v839
        %v2472 = vrot.slane %v2334, 5
        %v2473 = vrot.slane %v2335, 5
        %v2474 = vsel %vm550, %v2472, %v2473
        %v2475 = vsel %vm550, %v2473, %v850
        %2476 = vrot.lane.b32.xlu0 %v2472, 32
        %v2477 = vpop.permute.xlu0 %2476
        %2478 = vrot.lane.b32.xlu0 %v2474, 32
        %v2479 = vpop.permute.xlu0 %2478
        %2480 = vrot.lane.b32.xlu0 %v2475, 32
        %v2481 = vpop.permute.xlu0 %2480
        %v2486 = vrot.slane %v2336, 3
        %v2487 = vsel %vm329, %v2486, %v864
        %2488 = vrot.lane.b32.xlu0 %v2486, 64
        %v2489 = vpop.permute.xlu0 %2488
        %2490 = vrot.lane.b32.xlu0 %v2487, 64
        %v2491 = vpop.permute.xlu0 %2490
        %v2496 = vrot.slane %v2337, 1
        %v2497 = vrot.slane %v2338, 1
        %v2498 = vsel %vm371, %v2496, %v2497
        %v2499 = vsel %vm371, %v2497, %v881
        %2500 = vrot.lane.b32.xlu0 %v2498, 96
        %v2501 = vpop.permute.xlu0 %2500
        %2502 = vrot.lane.b32.xlu0 %v2499, 96
        %v2503 = vpop.permute.xlu0 %2502
        %v2506 = vsel %vm892, %v2313, %v686
        %v2507 = vsel %vm892, %v2314, %v2347
        %v2508 = vsel %vm896, %v2506, %v2353
        %v2509 = vsel %vm896, %v2507, %v2355
        %v2510 = vsel %vm900, %v897, %v2365
        %v2511 = vsel %vm900, %v2508, %v2367
        %v2512 = vsel %vm900, %v2509, %v2369
        %v2513 = vsel %vm892, %v2375, %v2385
        %v2514 = vsel %vm892, %v2374, %v2387
        %v2515 = vsel %vm896, %v904, %v2397
        %v2516 = vsel %vm896, %v2513, %v2399
        %v2517 = vsel %vm896, %v2514, %v2401
        %v2518 = vsel %vm900, %v2515, %v777
        %v2519 = vsel %vm900, %v2516, %v2412
        %v2520 = vsel %vm900, %v2517, %v2414
        %v2521 = vsel %vm892, %v495, %v2423
        %v2522 = vsel %vm892, %v2326, %v2425
        %v2523 = vsel %vm892, %v2327, %v2427
        %v2524 = vsel %vm896, %v2521, %v2438
        %v2525 = vsel %vm896, %v2522, %v2440
        %v2526 = vsel %vm896, %v2523, %v2442
        %v2527 = vsel %vm900, %v2524, %v2453
        %v2528 = vsel %vm900, %v2525, %v2455
        %v2529 = vsel %vm900, %v2526, %v2457
        %v2530 = vsel %vm892, %v2463, %v2477
        %v2531 = vsel %vm892, %v2465, %v2479
        %v2532 = vsel %vm892, %v2466, %v2481
        %v2533 = vsel %vm896, %v2530, %v2489
        %v2534 = vsel %vm896, %v2531, %v2491
        %v2535 = vsel %vm896, %v2532, %v871
        %v2536 = vsel %vm900, %v2533, %v2501
        %v2537 = vsel %vm900, %v2534, %v2503
        %v2538 = vsel %vm900, %v2535, %v888
        %v2540 = vrot.slane %v2341, 1
        %v2541 = vsel %vm371, %v2540, %v935
        %2542 = vrot.lane.b32.xlu0 %v2541, 32
        %v2543 = vpop.permute.xlu0 %2542
        %v2546 = vrot.slane %v2342, 6
        %v2547 = vsel %vm428, %v2546, %v952
        %2548 = vrot.lane.b32.xlu0 %v2546, 64
        %v2549 = vpop.permute.xlu0 %2548
        %2550 = vrot.lane.b32.xlu0 %v2547, 64
        %v2551 = vpop.permute.xlu0 %2550
        %v2554 = vsel %vm892, %v2339, %v2543
        %v2555 = vsel %vm892, %v2340, %v942
        %v2556 = vsel %vm896, %v2554, %v2549
        %v2557 = vsel %vm896, %v2555, %v2551
        %v2560 = vrot.slane %v2556, 6
        %v2561 = vrot.slane %v2557, 6
        %v2562 = vsel %vm428, %v2560, %v2561
        %v2563 = vsel %vm428, %v2561, %v977
        %v2567 = vpack.c.bf16 %v2511, %v2510
        %v2568 = vpack.c.bf16 %v2519, %v2518
        %v2569 = vpack.c.bf16 %v2528, %v2527
        %v2570 = vpack.c.bf16 %v2537, %v2536
        %v2571 = vpack.c.bf16 %v2562, %v2560
        %v2572 = vpack.c.bf16 %v2512, %v2512
        %v2573 = vpack.c.bf16 %v2520, %v2520
        %v2574 = vpack.c.bf16 %v2529, %v2529
        %v2575 = vpack.c.bf16 %v2538, %v2538
        %v2576 = vpack.c.bf16 %v2563, %v2563
        %s2577 = scalar_lea.vmem %s4, 608
        %v2578 = vld [vmem:[%s2577] sm:$0xf]
        %v2579 = vld [vmem:[%s2577 + $0x4] sm:$0xf]
        %v2580 = vld [vmem:[%s2577 + $0x8] sm:$0xf]
        %v2581 = vld [vmem:[%s2577 + $0xc] sm:$0xf]
        %v2582 = vld [vmem:[%s2577 + $0x10] sm:$0xf]
        %v2583 = vld [vmem:[%s2577 + $0x14] sm:$0xf]
        %v2584 = vld [vmem:[%s2577 + $0x18] sm:$0xf]
        %v2585 = vld [vmem:[%s2577 + $0x1c] sm:$0xf]
        %v2586 = vld [vmem:[%s2577 + $0x20] sm:$0xf]
        %v2587 = vld [vmem:[%s2577 + $0x24] sm:$0xf]
        %v2588 = vld [vmem:[%s2577 + $0x28] sm:$0xf]
        %v2589 = vld [vmem:[%s2577 + $0x2c] sm:$0xf]
        %v2590 = vld [vmem:[%s2577 + $0x30] sm:$0xf]
        %v2591 = vld [vmem:[%s2577 + $0x34] sm:$0xf]
        %v2592 = vld [vmem:[%s2577 + $0x38] sm:$0xf]
        %v2593 = vld [vmem:[%s2577 + $0x3c] sm:$0xf]
        %v2594 = vld [vmem:[%s2577 + $0x40] sm:$0xf]
        %v2595 = vld [vmem:[%s2577 + $0x44] sm:$0xf]
        %v2596 = vld [vmem:[%s2577 + $0x48] sm:$0xf]
        %v2597 = vld [vmem:[%s2577 + $0x4c] sm:$0xf]
        %v2598 = vld [vmem:[%s2577 + $0x50] sm:$0xf]
        %v2599 = vld [vmem:[%s2577 + $0x54] sm:$0xf]
        %v2600 = vld [vmem:[%s2577 + $0x58] sm:$0xf]
        %v2601 = vld [vmem:[%s2577 + $0x5c] sm:$0xf]
        %v2602 = vld [vmem:[%s2577 + $0x60] sm:$0xf]
        %v2603 = vld [vmem:[%s2577 + $0x64] sm:$0xf]
        %v2604 = vld [vmem:[%s2577 + $0x68] sm:$0xf]
        %v2605 = vld [vmem:[%s2577 + $0x6c] sm:$0xf]
        %v2606 = vld [vmem:[%s2577 + $0x70] sm:$0xf]
        %v2607 = vld [vmem:[%s2577 + $0x74] sm:$0xf]
        %v2608 = vld [vmem:[%s2577 + $0x78] sm:$0xf]
        %v2609 = vld [vmem:[%s2577 + $0x7c] sm:$0xf]
        %v2610 = vld [vmem:[%s2577 + $0x80] sm:$0xf]
        %v2611 = vld [vmem:[%s2577 + $0x84] sm:$0xf]
        %v2612 = vld [vmem:[%s2577 + $0x88] sm:$0xf]
        %v2613 = vld [vmem:[%s2577 + $0x8c] sm:$0xf]
        %v2614 = vld [vmem:[%s2577 + $0x90] sm:$0xf]
        %v2615 = vld [vmem:[%s2577 + $0x94] sm:$0xf]
        %v2616 = vld [vmem:[%s2577 + $0x98] sm:$0xf]
        %v2617 = vld [vmem:[%s2577 + $0x9c] sm:$0xf]
        %v2618 = vld [vmem:[%s2577 + $0xa0] sm:$0xf]
        %v2619 = vld [vmem:[%s2577 + $0xa4] sm:$0xf]
        %v2620 = vld [vmem:[%s2577 + $0xa8] sm:$0xf]
        %v2621 = vld [vmem:[%s2577 + $0xac] sm:$0xf]
        %v2622 = vld [vmem:[%s2577 + $0xb0] sm:$0xf]
        %v2623 = vld [vmem:[%s2577 + $0xb4] sm:$0xf]
        %v2624 = vld [vmem:[%s2577 + $0xb8] sm:$0xf]
        %v2625 = vld [vmem:[%s2577 + $0xbc] sm:$0xf]
        %v2626 = vld [vmem:[%s2577 + $0xc0] sm:$0xf]
        %v2627 = vld [vmem:[%s2577 + $0xc4] sm:$0xf]
        %v2628 = vld [vmem:[%s2577 + $0xc8] sm:$0xf]
        %v2629 = vld [vmem:[%s2577 + $0xcc] sm:$0xf]
        %v2630 = vld [vmem:[%s2577 + $0xd0] sm:$0xf]
        %v2631 = vld [vmem:[%s2577 + $0xd4] sm:$0xf]
        %v2632 = vld [vmem:[%s2577 + $0xd8] sm:$0xf]
        %v2633 = vld [vmem:[%s2577 + $0xdc] sm:$0xf]
        %v2634 = vld [vmem:[%s2577 + $0xe0] sm:$0xf]
        %v2635 = vld [vmem:[%s2577 + $0xe4] sm:$0xf]
        %v2636 = vld [vmem:[%s2577 + $0xe8] sm:$0xf]
        %v2637 = vld [vmem:[%s2577 + $0xec] sm:$0xf]
        %v2638 = vld [vmem:[%s2577 + $0xf0] sm:$0xf]
        %v2639 = vld [vmem:[%s2577 + $0xf4] sm:$0xf]
        %v2640 = vld [vmem:[%s2577 + $0xf8] sm:$0xf]
        %v2641 = vld [vmem:[%s2577 + $0xfc] sm:$0xf]
        %v2642 = vld [vmem:[%s2577 + $0x100] sm:$0xf]
        %v2643 = vld [vmem:[%s2577 + $0x104] sm:$0xf]
        %v2644 = vld [vmem:[%s2577 + $0x108] sm:$0xf]
        %v2645 = vld [vmem:[%s2577 + $0x10c] sm:$0xf]
        %v2646 = vld [vmem:[%s2577 + $0x110] sm:$0xf]
        %v2647 = vld [vmem:[%s2577 + $0x114] sm:$0xf]
        %v2648 = vld [vmem:[%s2577 + $0x118] sm:$0xf]
        %v2649 = vld [vmem:[%s2577 + $0x11c] sm:$0xf]
        %v2650 = vld [vmem:[%s2577 + $0x120] sm:$0xf]
        %v2651 = vld [vmem:[%s2577 + $0x124] sm:$0xf]
        %v2652 = vld [vmem:[%s2577 + $0x128] sm:$0xf]
        %v2653 = vld [vmem:[%s2577 + $0x12c] sm:$0xf]
        %s2654 = scalar_lea.vmem %s5, 2
        %v2655 = vld [vmem:[%s2654] sm:$0x1]
        %v2657 = vlaneseq
        %v2658 = vshrl.u32 %v2657, 7
        %v2659 = vsub.s32 0, %v2658
        %v2660 = vrot.slane %v2655, %v2659
        %v2663 = vshrl.u32 %v2567, 16
        %v2665 = vrot.slane %v2663, 2
        %v2666 = vshll.u32 %v2567, 16
        %v2668 = vrot.slane %v2666, 3
        %v2669 = vor.u32 %v2665, %v2668
        %v2671 = vshrl.u32 %v2572, 16
        %v2673 = vrot.slane %v2671, 2
        %v2674 = vshll.u32 %v2572, 16
        %v2676 = vrot.slane %v2674, 3
        %v2677 = vor.u32 %v2673, %v2676
        %v2678 = vsel %vm1075, %v2669, %v2677
        %v2680 = vshrl.u32 %v2568, 16
        %v2682 = vrot.slane %v2680, 2
        %v2683 = vshll.u32 %v2568, 16
        %v2685 = vrot.slane %v2683, 3
        %v2686 = vor.u32 %v2682, %v2685
        %v2688 = vshrl.u32 %v2573, 16
        %v2690 = vrot.slane %v2688, 2
        %v2691 = vshll.u32 %v2573, 16
        %v2693 = vrot.slane %v2691, 3
        %v2694 = vor.u32 %v2690, %v2693
        %v2695 = vsel %vm1075, %v2686, %v2694
        %v2697 = vshrl.u32 %v2569, 16
        %v2699 = vrot.slane %v2697, 2
        %v2700 = vshll.u32 %v2569, 16
        %v2702 = vrot.slane %v2700, 3
        %v2703 = vor.u32 %v2699, %v2702
        %v2705 = vshrl.u32 %v2574, 16
        %v2707 = vrot.slane %v2705, 2
        %v2708 = vshll.u32 %v2574, 16
        %v2710 = vrot.slane %v2708, 3
        %v2711 = vor.u32 %v2707, %v2710
        %v2712 = vsel %vm1075, %v2703, %v2711
        %v2714 = vshrl.u32 %v2570, 16
        %v2716 = vrot.slane %v2714, 2
        %v2717 = vshll.u32 %v2570, 16
        %v2719 = vrot.slane %v2717, 3
        %v2720 = vor.u32 %v2716, %v2719
        %v2722 = vshrl.u32 %v2575, 16
        %v2724 = vrot.slane %v2722, 2
        %v2725 = vshll.u32 %v2575, 16
        %v2727 = vrot.slane %v2725, 3
        %v2728 = vor.u32 %v2724, %v2727
        %v2729 = vsel %vm1075, %v2720, %v2728
        %v2731 = vshrl.u32 %v2571, 16
        %v2733 = vrot.slane %v2731, 2
        %v2734 = vshll.u32 %v2571, 16
        %v2736 = vrot.slane %v2734, 3
        %v2737 = vor.u32 %v2733, %v2736
        %v2739 = vshrl.u32 %v2576, 16
        %v2741 = vrot.slane %v2739, 2
        %v2742 = vshll.u32 %v2576, 16
        %v2744 = vrot.slane %v2742, 3
        %v2745 = vor.u32 %v2741, %v2744
        %v2746 = vsel %vm1075, %v2737, %v2745
        %v2827 = vunpack.c.l.b16 %v2578
        %v2828 = vunpack.c.l.b16 %v2579
        %v2829 = vunpack.c.l.b16 %v2580
        %v2830 = vunpack.c.l.b16 %v2581
        %v2831 = vunpack.c.l.b16 %v2582
        %v2832 = vunpack.c.l.b16 %v2583
        %v2833 = vunpack.c.l.b16 %v2584
        %v2834 = vunpack.c.l.b16 %v2585
        %v2835 = vunpack.c.l.b16 %v2586
        %v2836 = vunpack.c.l.b16 %v2587
        %v2837 = vunpack.c.l.b16 %v2588
        %v2838 = vunpack.c.l.b16 %v2589
        %v2839 = vunpack.c.l.b16 %v2590
        %v2840 = vunpack.c.l.b16 %v2591
        %v2841 = vunpack.c.l.b16 %v2592
        %v2842 = vunpack.c.l.b16 %v2593
        %v2843 = vunpack.c.l.b16 %v2594
        %v2844 = vunpack.c.l.b16 %v2595
        %v2845 = vunpack.c.l.b16 %v2596
        %v2846 = vunpack.c.l.b16 %v2597
        %v2847 = vunpack.c.l.b16 %v2598
        %v2848 = vunpack.c.l.b16 %v2599
        %v2849 = vunpack.c.l.b16 %v2600
        %v2850 = vunpack.c.l.b16 %v2601
        %v2851 = vunpack.c.l.b16 %v2602
        %v2852 = vunpack.c.l.b16 %v2603
        %v2853 = vunpack.c.l.b16 %v2604
        %v2854 = vunpack.c.l.b16 %v2605
        %v2855 = vunpack.c.l.b16 %v2606
        %v2856 = vunpack.c.l.b16 %v2607
        %v2857 = vunpack.c.l.b16 %v2608
        %v2858 = vunpack.c.l.b16 %v2609
        %v2859 = vunpack.c.l.b16 %v2610
        %v2860 = vunpack.c.l.b16 %v2611
        %v2861 = vunpack.c.l.b16 %v2612
        %v2862 = vunpack.c.l.b16 %v2613
        %v2863 = vunpack.c.l.b16 %v2614
        %v2864 = vunpack.c.l.b16 %v2615
        %v2865 = vunpack.c.l.b16 %v2616
        %v2866 = vunpack.c.l.b16 %v2617
        %v2867 = vunpack.c.l.b16 %v2618
        %v2868 = vunpack.c.l.b16 %v2619
        %v2869 = vunpack.c.l.b16 %v2620
        %v2870 = vunpack.c.l.b16 %v2621
        %v2871 = vunpack.c.l.b16 %v2622
        %v2872 = vunpack.c.l.b16 %v2623
        %v2873 = vunpack.c.l.b16 %v2624
        %v2874 = vunpack.c.l.b16 %v2625
        %v2875 = vunpack.c.l.b16 %v2626
        %v2876 = vunpack.c.l.b16 %v2627
        %v2877 = vunpack.c.l.b16 %v2628
        %v2878 = vunpack.c.l.b16 %v2629
        %v2879 = vunpack.c.l.b16 %v2630
        %v2880 = vunpack.c.l.b16 %v2631
        %v2881 = vunpack.c.l.b16 %v2632
        %v2882 = vunpack.c.l.b16 %v2633
        %v2883 = vunpack.c.l.b16 %v2634
        %v2884 = vunpack.c.l.b16 %v2635
        %v2885 = vunpack.c.l.b16 %v2636
        %v2886 = vunpack.c.l.b16 %v2637
        %v2887 = vunpack.c.l.b16 %v2638
        %v2888 = vunpack.c.l.b16 %v2639
        %v2889 = vunpack.c.l.b16 %v2640
        %v2890 = vunpack.c.l.b16 %v2641
        %v2891 = vunpack.c.l.b16 %v2642
        %v2892 = vunpack.c.l.b16 %v2643
        %v2893 = vunpack.c.l.b16 %v2644
        %v2894 = vunpack.c.l.b16 %v2645
        %v2895 = vunpack.c.l.b16 %v2646
        %v2896 = vunpack.c.l.b16 %v2647
        %v2897 = vunpack.c.l.b16 %v2648
        %v2898 = vunpack.c.l.b16 %v2649
        %v2899 = vunpack.c.l.b16 %v2650
        %v2900 = vunpack.c.l.b16 %v2651
        %v2901 = vunpack.c.l.b16 %v2652
        %v2902 = vunpack.c.l.b16 %v2653
        %v2903 = vpack.c.b16 %v2828, %v2827
        %v2904 = vpack.c.b16 %v2830, %v2829
        %v2905 = vpack.c.b16 %v2832, %v2831
        %v2906 = vpack.c.b16 %v2834, %v2833
        %v2907 = vpack.c.b16 %v2836, %v2835
        %v2908 = vpack.c.b16 %v2838, %v2837
        %v2909 = vpack.c.b16 %v2840, %v2839
        %v2910 = vpack.c.b16 %v2842, %v2841
        %v2911 = vpack.c.b16 %v2844, %v2843
        %v2912 = vpack.c.b16 %v2846, %v2845
        %v2913 = vpack.c.b16 %v2848, %v2847
        %v2914 = vpack.c.b16 %v2850, %v2849
        %v2915 = vpack.c.b16 %v2852, %v2851
        %v2916 = vpack.c.b16 %v2854, %v2853
        %v2917 = vpack.c.b16 %v2856, %v2855
        %v2918 = vpack.c.b16 %v2858, %v2857
        %v2919 = vpack.c.b16 %v2860, %v2859
        %v2920 = vpack.c.b16 %v2862, %v2861
        %v2921 = vpack.c.b16 %v2864, %v2863
        %v2922 = vpack.c.b16 %v2866, %v2865
        %v2923 = vpack.c.b16 %v2868, %v2867
        %v2924 = vpack.c.b16 %v2870, %v2869
        %v2925 = vpack.c.b16 %v2872, %v2871
        %v2926 = vpack.c.b16 %v2874, %v2873
        %v2927 = vpack.c.b16 %v2876, %v2875
        %v2928 = vpack.c.b16 %v2878, %v2877
        %v2929 = vpack.c.b16 %v2880, %v2879
        %v2930 = vpack.c.b16 %v2882, %v2881
        %v2931 = vpack.c.b16 %v2884, %v2883
        %v2932 = vpack.c.b16 %v2886, %v2885
        %v2933 = vpack.c.b16 %v2888, %v2887
        %v2934 = vpack.c.b16 %v2890, %v2889
        %v2935 = vpack.c.b16 %v2892, %v2891
        %v2936 = vpack.c.b16 %v2894, %v2893
        %v2937 = vpack.c.b16 %v2896, %v2895
        %v2938 = vpack.c.b16 %v2898, %v2897
        %v2939 = vpack.c.b16 %v2900, %v2899
        %v2940 = vpack.c.b16 %v2902, %v2901
        %v2980 = vsel %vm900, %v2746, 0
        %2982 = vmatprep.subr.bf16.mxu0 0
        %2983 = vmatpush1.bf16.msra.mxu0 %v2903
        %2984 = vmatprep.subr.bf16.mxu0 0
        %2985 = vmatpush1.bf16.msra.mxu0 %v2904
        %2986 = vmatprep.subr.bf16.mxu0 0
        %2987 = vmatpush1.bf16.msra.mxu0 %v2905
        %2988 = vmatprep.subr.bf16.mxu0 0
        %2989 = vmatpush1.bf16.msra.mxu0 %v2906
        %2990 = vmatprep.subr.bf16.mxu0 0
        %2991 = vmatpush1.bf16.msra.mxu0 %v2907
        %2992 = vmatprep.subr.bf16.mxu0 0
        %2993 = vmatpush1.bf16.msra.mxu0 %v2908
        %2994 = vmatprep.subr.bf16.mxu0 0
        %2995 = vmatpush1.bf16.msra.mxu0 %v2909
        %2996 = vmatprep.subr.bf16.mxu0 0
        %2997 = vmatpush1.bf16.msra.mxu0 %v2910
        %2998 = vmatprep.subr.bf16.mxu0 0
        %2999 = vmatpush1.bf16.msra.mxu0 %v2911
        %3000 = vmatprep.subr.bf16.mxu0 0
        %3001 = vmatpush1.bf16.msra.mxu0 %v2912
        %3002 = vmatprep.subr.bf16.mxu0 0
        %3003 = vmatpush1.bf16.msra.mxu0 %v2913
        %3004 = vmatprep.subr.bf16.mxu0 0
        %3005 = vmatpush1.bf16.msra.mxu0 %v2914
        %3006 = vmatprep.subr.bf16.mxu0 0
        %3007 = vmatpush1.bf16.msra.mxu0 %v2915
        %3008 = vmatprep.subr.bf16.mxu0 0
        %3009 = vmatpush1.bf16.msra.mxu0 %v2916
        %3010 = vmatprep.subr.bf16.mxu0 0
        %3011 = vmatpush1.bf16.msra.mxu0 %v2917
        %3012 = vmatprep.subr.bf16.mxu0 0
        %3013 = vmatpush1.bf16.msra.mxu0 %v2918
        %3014 = vmatprep.mubr.bf16.mxu0 %v2695
        %3015 = vmatmul.mubr.bf16.gmra.mrb[0].mxu0 %v2678
        %v3016 = vpop.f32.mrb[0].mxu0
        %v3017 = vadd.f32 %v2660, %v3016
        %v3018 = vpop.f32.mrb[0].mxu0
        %v3019 = vpop.f32.mrb[0].mxu0
        %v3020 = vadd.f32 %v2660, %v3019
        %v3021 = vpop.f32.mrb[0].mxu0
        %3022 = vdwg.mxu0
        %3023 = vmatprep.subr.bf16.mxu0 0
        %3024 = vmatpush1.bf16.msra.mxu0 %v2919
        %3025 = vmatprep.subr.bf16.mxu0 0
        %3026 = vmatpush1.bf16.msra.mxu0 %v2920
        %3027 = vmatprep.subr.bf16.mxu0 0
        %3028 = vmatpush1.bf16.msra.mxu0 %v2921
        %3029 = vmatprep.subr.bf16.mxu0 0
        %3030 = vmatpush1.bf16.msra.mxu0 %v2922
        %3031 = vmatprep.subr.bf16.mxu0 0
        %3032 = vmatpush1.bf16.msra.mxu0 %v2923
        %3033 = vmatprep.subr.bf16.mxu0 0
        %3034 = vmatpush1.bf16.msra.mxu0 %v2924
        %3035 = vmatprep.subr.bf16.mxu0 0
        %3036 = vmatpush1.bf16.msra.mxu0 %v2925
        %3037 = vmatprep.subr.bf16.mxu0 0
        %3038 = vmatpush1.bf16.msra.mxu0 %v2926
        %3039 = vmatprep.subr.bf16.mxu0 0
        %3040 = vmatpush1.bf16.msra.mxu0 %v2927
        %3041 = vmatprep.subr.bf16.mxu0 0
        %3042 = vmatpush1.bf16.msra.mxu0 %v2928
        %3043 = vmatprep.subr.bf16.mxu0 0
        %3044 = vmatpush1.bf16.msra.mxu0 %v2929
        %3045 = vmatprep.subr.bf16.mxu0 0
        %3046 = vmatpush1.bf16.msra.mxu0 %v2930
        %3047 = vmatprep.subr.bf16.mxu0 0
        %3048 = vmatpush1.bf16.msra.mxu0 %v2931
        %3049 = vmatprep.subr.bf16.mxu0 0
        %3050 = vmatpush1.bf16.msra.mxu0 %v2932
        %3051 = vmatprep.subr.bf16.mxu0 0
        %3052 = vmatpush1.bf16.msra.mxu0 %v2933
        %3053 = vmatprep.subr.bf16.mxu0 0
        %3054 = vmatpush1.bf16.msra.mxu0 %v2934
        %3055 = vmatprep.mubr.bf16.mxu0 %v2729
        %3056 = vmatmul.mubr.bf16.gmra.mrb[0].mxu0 %v2712
        %v3057 = vpop.f32.mrb[0].mxu0
        %v3058 = vadd.f32 %v3017, %v3057
        %v3059 = vpop.f32.mrb[0].mxu0
        %v3060 = vpop.f32.mrb[0].mxu0
        %v3061 = vadd.f32 %v3020, %v3060
        %v3062 = vpop.f32.mrb[0].mxu0
        %3063 = vdwg.mxu0
        %3064 = vmatprep.subr.bf16.mxu0 0
        %3065 = vmatpush1.bf16.msra.mxu0 %v2935
        %3066 = vmatprep.subr.bf16.mxu0 0
        %3067 = vmatpush1.bf16.msra.mxu0 %v2936
        %3068 = vmatprep.subr.bf16.mxu0 0
        %3069 = vmatpush1.bf16.msra.mxu0 %v2937
        %3070 = vmatprep.subr.bf16.mxu0 0
        %3071 = vmatpush1.bf16.msra.mxu0 %v2938
        %3072 = vmatprep.subr.bf16.mxu0 0
        %3073 = vmatpush1.bf16.msra.mxu0 %v2939
        %3074 = vmatprep.subr.bf16.mxu0 0
        %3075 = vmatpush1.bf16.msra.mxu0 %v2940
        %3076 = vmatprep.subr.bf16.mxu0 0
        %3077 = vmatpush1.bf16.msra.mxu0 0
        %3078 = vmatprep.subr.bf16.mxu0 0
        %3079 = vmatpush1.bf16.msra.mxu0 0
        %3080 = vmatprep.subr.bf16.mxu0 0
        %3081 = vmatpush1.bf16.msra.mxu0 0
        %3082 = vmatprep.subr.bf16.mxu0 0
        %3083 = vmatpush1.bf16.msra.mxu0 0
        %3084 = vmatprep.subr.bf16.mxu0 0
        %3085 = vmatpush1.bf16.msra.mxu0 0
        %3086 = vmatprep.subr.bf16.mxu0 0
        %3087 = vmatpush1.bf16.msra.mxu0 0
        %3088 = vmatprep.subr.bf16.mxu0 0
        %3089 = vmatpush1.bf16.msra.mxu0 0
        %3090 = vmatprep.subr.bf16.mxu0 0
        %3091 = vmatpush1.bf16.msra.mxu0 0
        %3092 = vmatprep.subr.bf16.mxu0 0
        %3093 = vmatpush1.bf16.msra.mxu0 0
        %3094 = vmatprep.subr.bf16.mxu0 0
        %3095 = vmatpush1.bf16.msra.mxu0 0
        %3096 = vmatprep.mubr.bf16.mxu0 0
        %3097 = vmatmul.mubr.bf16.gmra.mrb[0].mxu0 %v2980
        %v3098 = vpop.f32.mrb[0].mxu0
        %v3099 = vadd.f32 %v3058, %v3098
        %v3100 = vpop.f32.mrb[0].mxu0
        %v3101 = vpop.f32.mrb[0].mxu0
        %v3102 = vadd.f32 %v3061, %v3101
        %v3103 = vpop.f32.mrb[0].mxu0
        %3104 = vdwg.mxu0
        %v3105 = vadd.f32 %v1513, %v3099
        %v3106 = vadd.f32 %v1516, %v3102
        %v3107 = vmul.f32 %v3105, %v332
        %v3108 = vmul.f32 %v3106, %v331
        %v3109 = vmul.f32 %v3105, %v352
        %v3110 = vmul.f32 %v3105, %v373
        %v3111 = vmul.f32 %v3105, %v395
        %v3112 = vmul.f32 %v3106, %v394
        %v3113 = vmul.f32 %v3105, %v413
        %v3114 = vmul.f32 %v3105, %v431
        %v3115 = vmul.f32 %v3106, %v430
        %v3116 = vmul.f32 %v3105, %v451
        %v3117 = vmul.f32 %v3106, %v450
        %v3118 = vmul.f32 %v3105, %v471
        %v3119 = vmul.f32 %v3106, %v470
        %v3120 = vmul.f32 %v3105, %v491
        %v3121 = vmul.f32 %v3106, %v490
        %v3122 = vmul.f32 %v3105, %v510
        %v3123 = vmul.f32 %v3106, %v512
        %v3124 = vmul.f32 %v3105, %v530
        %v3125 = vmul.f32 %v3106, %v532
        %v3126 = vmul.f32 %v3105, %v551
        %v3127 = vmul.f32 %v3106, %v553
        %v3128 = vmul.f32 %v3105, %v571
        %v3129 = vmul.f32 %v3106, %v573
        %v3130 = vmul.f32 %v3106, %v586
        %v3131 = vmul.f32 %v3105, %v606
        %v3132 = vmul.f32 %v3106, %v608
        %v3133 = vmul.f32 %v3105, %v626
        %v3134 = vmul.f32 %v3106, %v628
        %v3135 = vmul.f32 %v3106, %v646
        %v3136 = vmul.f32 %v3106, %v666
        %v3138 = vrot.slane %v3109, 7
        %v3139 = vsel %vm509, %v679, %v3138
        %3140 = vrot.lane.b32.xlu0 %v3139, 32
        %v3141 = vpop.permute.xlu0 %3140
        %v3144 = vrot.slane %v3110, 2
        %v3145 = vsel %vm392, %v696, %v3144
        %3146 = vrot.lane.b32.xlu0 %v3145, 64
        %v3147 = vpop.permute.xlu0 %3146
        %3148 = vrot.lane.b32.xlu0 %v3144, 64
        %v3149 = vpop.permute.xlu0 %3148
        %v3154 = vrot.slane %v3111, 1
        %v3155 = vsel %vm371, %v712, %v3154
        %v3156 = vrot.slane %v3112, 1
        %v3157 = vsel %vm371, %v3154, %v3156
        %3158 = vrot.lane.b32.xlu0 %v3155, 96
        %v3159 = vpop.permute.xlu0 %3158
        %3160 = vrot.lane.b32.xlu0 %v3157, 96
        %v3161 = vpop.permute.xlu0 %3160
        %3162 = vrot.lane.b32.xlu0 %v3156, 96
        %v3163 = vpop.permute.xlu0 %3162
        %v3168 = vrot.slane %v3113, 3
        %v3169 = vsel %vm329, %v728, %v3168
        %v3174 = vrot.slane %v3114, 5
        %v3175 = vsel %vm550, %v737, %v3174
        %v3176 = vrot.slane %v3115, 5
        %v3177 = vsel %vm550, %v3174, %v3176
        %3178 = vrot.lane.b32.xlu0 %v3175, 32
        %v3179 = vpop.permute.xlu0 %3178
        %3180 = vrot.lane.b32.xlu0 %v3177, 32
        %v3181 = vpop.permute.xlu0 %3180
        %v3186 = vrot.slane %v3116, 2
        %v3187 = vsel %vm392, %v754, %v3186
        %v3188 = vrot.slane %v3117, 2
        %v3189 = vsel %vm392, %v3186, %v3188
        %3190 = vrot.lane.b32.xlu0 %v3187, 64
        %v3191 = vpop.permute.xlu0 %3190
        %3192 = vrot.lane.b32.xlu0 %v3189, 64
        %v3193 = vpop.permute.xlu0 %3192
        %3194 = vrot.lane.b32.xlu0 %v3188, 64
        %v3195 = vpop.permute.xlu0 %3194
        %v3201 = vrot.slane %v3118, 7
        %v3202 = vsel %vm509, %v771, %v3201
        %v3203 = vrot.slane %v3119, 7
        %v3204 = vsel %vm509, %v3201, %v3203
        %3205 = vrot.lane.b32.xlu0 %v3202, 96
        %v3206 = vpop.permute.xlu0 %3205
        %3207 = vrot.lane.b32.xlu0 %v3204, 96
        %v3208 = vpop.permute.xlu0 %3207
        %v3213 = vrot.slane %v3105, 3
        %v3214 = vrot.slane %v3106, 3
        %v3215 = vsel %vm329, %v3213, %v3214
        %3216 = vrot.lane.b32.xlu0 %v3213, 32
        %v3217 = vpop.permute.xlu0 %3216
        %3218 = vrot.lane.b32.xlu0 %v3215, 32
        %v3219 = vpop.permute.xlu0 %3218
        %3220 = vrot.lane.b32.xlu0 %v3214, 32
        %v3221 = vpop.permute.xlu0 %3220
        %v3227 = vrot.slane %v3122, 4
        %v3228 = vrot.slane %v3123, 4
        %v3229 = vsel %vm350, %v3227, %v3228
        %v3230 = vsel %vm350, %v3228, %v805
        %3231 = vrot.lane.b32.xlu0 %v3227, 64
        %v3232 = vpop.permute.xlu0 %3231
        %3233 = vrot.lane.b32.xlu0 %v3229, 64
        %v3234 = vpop.permute.xlu0 %3233
        %3235 = vrot.lane.b32.xlu0 %v3230, 64
        %v3236 = vpop.permute.xlu0 %3235
        %v3242 = vrot.slane %v3124, 7
        %v3243 = vrot.slane %v3125, 7
        %v3244 = vsel %vm509, %v3242, %v3243
        %v3245 = vsel %vm509, %v3243, %v822
        %3246 = vrot.lane.b32.xlu0 %v3242, 96
        %v3247 = vpop.permute.xlu0 %3246
        %3248 = vrot.lane.b32.xlu0 %v3244, 96
        %v3249 = vpop.permute.xlu0 %3248
        %3250 = vrot.lane.b32.xlu0 %v3245, 96
        %v3251 = vpop.permute.xlu0 %3250
        %v3257 = vrot.slane %v3126, 6
        %v3258 = vrot.slane %v3127, 6
        %v3259 = vsel %vm428, %v3257, %v3258
        %v3260 = vsel %vm428, %v3258, %v839
        %v3266 = vrot.slane %v3128, 5
        %v3267 = vrot.slane %v3129, 5
        %v3268 = vsel %vm550, %v3266, %v3267
        %v3269 = vsel %vm550, %v3267, %v850
        %3270 = vrot.lane.b32.xlu0 %v3266, 32
        %v3271 = vpop.permute.xlu0 %3270
        %3272 = vrot.lane.b32.xlu0 %v3268, 32
        %v3273 = vpop.permute.xlu0 %3272
        %3274 = vrot.lane.b32.xlu0 %v3269, 32
        %v3275 = vpop.permute.xlu0 %3274
        %v3280 = vrot.slane %v3130, 3
        %v3281 = vsel %vm329, %v3280, %v864
        %3282 = vrot.lane.b32.xlu0 %v3280, 64
        %v3283 = vpop.permute.xlu0 %3282
        %3284 = vrot.lane.b32.xlu0 %v3281, 64
        %v3285 = vpop.permute.xlu0 %3284
        %v3290 = vrot.slane %v3131, 1
        %v3291 = vrot.slane %v3132, 1
        %v3292 = vsel %vm371, %v3290, %v3291
        %v3293 = vsel %vm371, %v3291, %v881
        %3294 = vrot.lane.b32.xlu0 %v3292, 96
        %v3295 = vpop.permute.xlu0 %3294
        %3296 = vrot.lane.b32.xlu0 %v3293, 96
        %v3297 = vpop.permute.xlu0 %3296
        %v3300 = vsel %vm892, %v3107, %v686
        %v3301 = vsel %vm892, %v3108, %v3141
        %v3302 = vsel %vm896, %v3300, %v3147
        %v3303 = vsel %vm896, %v3301, %v3149
        %v3304 = vsel %vm900, %v897, %v3159
        %v3305 = vsel %vm900, %v3302, %v3161
        %v3306 = vsel %vm900, %v3303, %v3163
        %v3307 = vsel %vm892, %v3169, %v3179
        %v3308 = vsel %vm892, %v3168, %v3181
        %v3309 = vsel %vm896, %v904, %v3191
        %v3310 = vsel %vm896, %v3307, %v3193
        %v3311 = vsel %vm896, %v3308, %v3195
        %v3312 = vsel %vm900, %v3309, %v777
        %v3313 = vsel %vm900, %v3310, %v3206
        %v3314 = vsel %vm900, %v3311, %v3208
        %v3315 = vsel %vm892, %v495, %v3217
        %v3316 = vsel %vm892, %v3120, %v3219
        %v3317 = vsel %vm892, %v3121, %v3221
        %v3318 = vsel %vm896, %v3315, %v3232
        %v3319 = vsel %vm896, %v3316, %v3234
        %v3320 = vsel %vm896, %v3317, %v3236
        %v3321 = vsel %vm900, %v3318, %v3247
        %v3322 = vsel %vm900, %v3319, %v3249
        %v3323 = vsel %vm900, %v3320, %v3251
        %v3324 = vsel %vm892, %v3257, %v3271
        %v3325 = vsel %vm892, %v3259, %v3273
        %v3326 = vsel %vm892, %v3260, %v3275
        %v3327 = vsel %vm896, %v3324, %v3283
        %v3328 = vsel %vm896, %v3325, %v3285
        %v3329 = vsel %vm896, %v3326, %v871
        %v3330 = vsel %vm900, %v3327, %v3295
        %v3331 = vsel %vm900, %v3328, %v3297
        %v3332 = vsel %vm900, %v3329, %v888
        %v3334 = vrot.slane %v3135, 1
        %v3335 = vsel %vm371, %v3334, %v935
        %3336 = vrot.lane.b32.xlu0 %v3335, 32
        %v3337 = vpop.permute.xlu0 %3336
        %v3340 = vrot.slane %v3136, 6
        %v3341 = vsel %vm428, %v3340, %v952
        %3342 = vrot.lane.b32.xlu0 %v3340, 64
        %v3343 = vpop.permute.xlu0 %3342
        %3344 = vrot.lane.b32.xlu0 %v3341, 64
        %v3345 = vpop.permute.xlu0 %3344
        %v3348 = vsel %vm892, %v3133, %v3337
        %v3349 = vsel %vm892, %v3134, %v942
        %v3350 = vsel %vm896, %v3348, %v3343
        %v3351 = vsel %vm896, %v3349, %v3345
        %v3354 = vrot.slane %v3350, 6
        %v3355 = vrot.slane %v3351, 6
        %v3356 = vsel %vm428, %v3354, %v3355
        %v3357 = vsel %vm428, %v3355, %v977
        %v3361 = vpack.c.bf16 %v3305, %v3304
        %v3362 = vpack.c.bf16 %v3313, %v3312
        %v3363 = vpack.c.bf16 %v3322, %v3321
        %v3364 = vpack.c.bf16 %v3331, %v3330
        %v3365 = vpack.c.bf16 %v3356, %v3354
        %v3366 = vpack.c.bf16 %v3306, %v3306
        %v3367 = vpack.c.bf16 %v3314, %v3314
        %v3368 = vpack.c.bf16 %v3323, %v3323
        %v3369 = vpack.c.bf16 %v3332, %v3332
        %v3370 = vpack.c.bf16 %v3357, %v3357
        %s3371 = scalar_lea.vmem %s4, 912
        %v3372 = vld [vmem:[%s3371] sm:$0xf]
        %v3373 = vld [vmem:[%s3371 + $0x4] sm:$0xf]
        %v3374 = vld [vmem:[%s3371 + $0x8] sm:$0xf]
        %v3375 = vld [vmem:[%s3371 + $0xc] sm:$0xf]
        %v3376 = vld [vmem:[%s3371 + $0x10] sm:$0xf]
        %v3377 = vld [vmem:[%s3371 + $0x14] sm:$0xf]
        %v3378 = vld [vmem:[%s3371 + $0x18] sm:$0xf]
        %v3379 = vld [vmem:[%s3371 + $0x1c] sm:$0xf]
        %v3380 = vld [vmem:[%s3371 + $0x20] sm:$0xf]
        %v3381 = vld [vmem:[%s3371 + $0x24] sm:$0xf]
        %v3382 = vld [vmem:[%s3371 + $0x28] sm:$0xf]
        %v3383 = vld [vmem:[%s3371 + $0x2c] sm:$0xf]
        %v3384 = vld [vmem:[%s3371 + $0x30] sm:$0xf]
        %v3385 = vld [vmem:[%s3371 + $0x34] sm:$0xf]
        %v3386 = vld [vmem:[%s3371 + $0x38] sm:$0xf]
        %v3387 = vld [vmem:[%s3371 + $0x3c] sm:$0xf]
        %v3388 = vld [vmem:[%s3371 + $0x40] sm:$0xf]
        %v3389 = vld [vmem:[%s3371 + $0x44] sm:$0xf]
        %v3390 = vld [vmem:[%s3371 + $0x48] sm:$0xf]
        %v3391 = vld [vmem:[%s3371 + $0x4c] sm:$0xf]
        %v3392 = vld [vmem:[%s3371 + $0x50] sm:$0xf]
        %v3393 = vld [vmem:[%s3371 + $0x54] sm:$0xf]
        %v3394 = vld [vmem:[%s3371 + $0x58] sm:$0xf]
        %v3395 = vld [vmem:[%s3371 + $0x5c] sm:$0xf]
        %v3396 = vld [vmem:[%s3371 + $0x60] sm:$0xf]
        %v3397 = vld [vmem:[%s3371 + $0x64] sm:$0xf]
        %v3398 = vld [vmem:[%s3371 + $0x68] sm:$0xf]
        %v3399 = vld [vmem:[%s3371 + $0x6c] sm:$0xf]
        %v3400 = vld [vmem:[%s3371 + $0x70] sm:$0xf]
        %v3401 = vld [vmem:[%s3371 + $0x74] sm:$0xf]
        %v3402 = vld [vmem:[%s3371 + $0x78] sm:$0xf]
        %v3403 = vld [vmem:[%s3371 + $0x7c] sm:$0xf]
        %v3404 = vld [vmem:[%s3371 + $0x80] sm:$0xf]
        %v3405 = vld [vmem:[%s3371 + $0x84] sm:$0xf]
        %v3406 = vld [vmem:[%s3371 + $0x88] sm:$0xf]
        %v3407 = vld [vmem:[%s3371 + $0x8c] sm:$0xf]
        %v3408 = vld [vmem:[%s3371 + $0x90] sm:$0xf]
        %v3409 = vld [vmem:[%s3371 + $0x94] sm:$0xf]
        %v3410 = vld [vmem:[%s3371 + $0x98] sm:$0xf]
        %v3411 = vld [vmem:[%s3371 + $0x9c] sm:$0xf]
        %v3412 = vld [vmem:[%s3371 + $0xa0] sm:$0xf]
        %v3413 = vld [vmem:[%s3371 + $0xa4] sm:$0xf]
        %v3414 = vld [vmem:[%s3371 + $0xa8] sm:$0xf]
        %v3415 = vld [vmem:[%s3371 + $0xac] sm:$0xf]
        %v3416 = vld [vmem:[%s3371 + $0xb0] sm:$0xf]
        %v3417 = vld [vmem:[%s3371 + $0xb4] sm:$0xf]
        %v3418 = vld [vmem:[%s3371 + $0xb8] sm:$0xf]
        %v3419 = vld [vmem:[%s3371 + $0xbc] sm:$0xf]
        %v3420 = vld [vmem:[%s3371 + $0xc0] sm:$0xf]
        %v3421 = vld [vmem:[%s3371 + $0xc4] sm:$0xf]
        %v3422 = vld [vmem:[%s3371 + $0xc8] sm:$0xf]
        %v3423 = vld [vmem:[%s3371 + $0xcc] sm:$0xf]
        %v3424 = vld [vmem:[%s3371 + $0xd0] sm:$0xf]
        %v3425 = vld [vmem:[%s3371 + $0xd4] sm:$0xf]
        %v3426 = vld [vmem:[%s3371 + $0xd8] sm:$0xf]
        %v3427 = vld [vmem:[%s3371 + $0xdc] sm:$0xf]
        %v3428 = vld [vmem:[%s3371 + $0xe0] sm:$0xf]
        %v3429 = vld [vmem:[%s3371 + $0xe4] sm:$0xf]
        %v3430 = vld [vmem:[%s3371 + $0xe8] sm:$0xf]
        %v3431 = vld [vmem:[%s3371 + $0xec] sm:$0xf]
        %v3432 = vld [vmem:[%s3371 + $0xf0] sm:$0xf]
        %v3433 = vld [vmem:[%s3371 + $0xf4] sm:$0xf]
        %v3434 = vld [vmem:[%s3371 + $0xf8] sm:$0xf]
        %v3435 = vld [vmem:[%s3371 + $0xfc] sm:$0xf]
        %v3436 = vld [vmem:[%s3371 + $0x100] sm:$0xf]
        %v3437 = vld [vmem:[%s3371 + $0x104] sm:$0xf]
        %v3438 = vld [vmem:[%s3371 + $0x108] sm:$0xf]
        %v3439 = vld [vmem:[%s3371 + $0x10c] sm:$0xf]
        %v3440 = vld [vmem:[%s3371 + $0x110] sm:$0xf]
        %v3441 = vld [vmem:[%s3371 + $0x114] sm:$0xf]
        %v3442 = vld [vmem:[%s3371 + $0x118] sm:$0xf]
        %v3443 = vld [vmem:[%s3371 + $0x11c] sm:$0xf]
        %v3444 = vld [vmem:[%s3371 + $0x120] sm:$0xf]
        %v3445 = vld [vmem:[%s3371 + $0x124] sm:$0xf]
        %v3446 = vld [vmem:[%s3371 + $0x128] sm:$0xf]
        %v3447 = vld [vmem:[%s3371 + $0x12c] sm:$0xf]
        %s3448 = scalar_lea.vmem %s5, 3
        %v3449 = vld [vmem:[%s3448] sm:$0x1]
        %v3451 = vlaneseq
        %v3452 = vshrl.u32 %v3451, 7
        %v3453 = vsub.s32 0, %v3452
        %v3454 = vrot.slane %v3449, %v3453
        %v3457 = vshrl.u32 %v3361, 16
        %v3459 = vrot.slane %v3457, 2
        %v3460 = vshll.u32 %v3361, 16
        %v3462 = vrot.slane %v3460, 3
        %v3463 = vor.u32 %v3459, %v3462
        %v3465 = vshrl.u32 %v3366, 16
        %v3467 = vrot.slane %v3465, 2
        %v3468 = vshll.u32 %v3366, 16
        %v3470 = vrot.slane %v3468, 3
        %v3471 = vor.u32 %v3467, %v3470
        %v3472 = vsel %vm1075, %v3463, %v3471
        %v3474 = vshrl.u32 %v3362, 16
        %v3476 = vrot.slane %v3474, 2
        %v3477 = vshll.u32 %v3362, 16
        %v3479 = vrot.slane %v3477, 3
        %v3480 = vor.u32 %v3476, %v3479
        %v3482 = vshrl.u32 %v3367, 16
        %v3484 = vrot.slane %v3482, 2
        %v3485 = vshll.u32 %v3367, 16
        %v3487 = vrot.slane %v3485, 3
        %v3488 = vor.u32 %v3484, %v3487
        %v3489 = vsel %vm1075, %v3480, %v3488
        %v3491 = vshrl.u32 %v3363, 16
        %v3493 = vrot.slane %v3491, 2
        %v3494 = vshll.u32 %v3363, 16
        %v3496 = vrot.slane %v3494, 3
        %v3497 = vor.u32 %v3493, %v3496
        %v3499 = vshrl.u32 %v3368, 16
        %v3501 = vrot.slane %v3499, 2
        %v3502 = vshll.u32 %v3368, 16
        %v3504 = vrot.slane %v3502, 3
        %v3505 = vor.u32 %v3501, %v3504
        %v3506 = vsel %vm1075, %v3497, %v3505
        %v3508 = vshrl.u32 %v3364, 16
        %v3510 = vrot.slane %v3508, 2
        %v3511 = vshll.u32 %v3364, 16
        %v3513 = vrot.slane %v3511, 3
        %v3514 = vor.u32 %v3510, %v3513
        %v3516 = vshrl.u32 %v3369, 16
        %v3518 = vrot.slane %v3516, 2
        %v3519 = vshll.u32 %v3369, 16
        %v3521 = vrot.slane %v3519, 3
        %v3522 = vor.u32 %v3518, %v3521
        %v3523 = vsel %vm1075, %v3514, %v3522
        %v3525 = vshrl.u32 %v3365, 16
        %v3527 = vrot.slane %v3525, 2
        %v3528 = vshll.u32 %v3365, 16
        %v3530 = vrot.slane %v3528, 3
        %v3531 = vor.u32 %v3527, %v3530
        %v3533 = vshrl.u32 %v3370, 16
        %v3535 = vrot.slane %v3533, 2
        %v3536 = vshll.u32 %v3370, 16
        %v3538 = vrot.slane %v3536, 3
        %v3539 = vor.u32 %v3535, %v3538
        %v3540 = vsel %vm1075, %v3531, %v3539
        %v3621 = vunpack.c.l.b16 %v3372
        %v3622 = vunpack.c.l.b16 %v3373
        %v3623 = vunpack.c.l.b16 %v3374
        %v3624 = vunpack.c.l.b16 %v3375
        %v3625 = vunpack.c.l.b16 %v3376
        %v3626 = vunpack.c.l.b16 %v3377
        %v3627 = vunpack.c.l.b16 %v3378
        %v3628 = vunpack.c.l.b16 %v3379
        %v3629 = vunpack.c.l.b16 %v3380
        %v3630 = vunpack.c.l.b16 %v3381
        %v3631 = vunpack.c.l.b16 %v3382
        %v3632 = vunpack.c.l.b16 %v3383
        %v3633 = vunpack.c.l.b16 %v3384
        %v3634 = vunpack.c.l.b16 %v3385
        %v3635 = vunpack.c.l.b16 %v3386
        %v3636 = vunpack.c.l.b16 %v3387
        %v3637 = vunpack.c.l.b16 %v3388
        %v3638 = vunpack.c.l.b16 %v3389
        %v3639 = vunpack.c.l.b16 %v3390
        %v3640 = vunpack.c.l.b16 %v3391
        %v3641 = vunpack.c.l.b16 %v3392
        %v3642 = vunpack.c.l.b16 %v3393
        %v3643 = vunpack.c.l.b16 %v3394
        %v3644 = vunpack.c.l.b16 %v3395
        %v3645 = vunpack.c.l.b16 %v3396
        %v3646 = vunpack.c.l.b16 %v3397
        %v3647 = vunpack.c.l.b16 %v3398
        %v3648 = vunpack.c.l.b16 %v3399
        %v3649 = vunpack.c.l.b16 %v3400
        %v3650 = vunpack.c.l.b16 %v3401
        %v3651 = vunpack.c.l.b16 %v3402
        %v3652 = vunpack.c.l.b16 %v3403
        %v3653 = vunpack.c.l.b16 %v3404
        %v3654 = vunpack.c.l.b16 %v3405
        %v3655 = vunpack.c.l.b16 %v3406
        %v3656 = vunpack.c.l.b16 %v3407
        %v3657 = vunpack.c.l.b16 %v3408
        %v3658 = vunpack.c.l.b16 %v3409
        %v3659 = vunpack.c.l.b16 %v3410
        %v3660 = vunpack.c.l.b16 %v3411
        %v3661 = vunpack.c.l.b16 %v3412
        %v3662 = vunpack.c.l.b16 %v3413
        %v3663 = vunpack.c.l.b16 %v3414
        %v3664 = vunpack.c.l.b16 %v3415
        %v3665 = vunpack.c.l.b16 %v3416
        %v3666 = vunpack.c.l.b16 %v3417
        %v3667 = vunpack.c.l.b16 %v3418
        %v3668 = vunpack.c.l.b16 %v3419
        %v3669 = vunpack.c.l.b16 %v3420
        %v3670 = vunpack.c.l.b16 %v3421
        %v3671 = vunpack.c.l.b16 %v3422
        %v3672 = vunpack.c.l.b16 %v3423
        %v3673 = vunpack.c.l.b16 %v3424
        %v3674 = vunpack.c.l.b16 %v3425
        %v3675 = vunpack.c.l.b16 %v3426
        %v3676 = vunpack.c.l.b16 %v3427
        %v3677 = vunpack.c.l.b16 %v3428
        %v3678 = vunpack.c.l.b16 %v3429
        %v3679 = vunpack.c.l.b16 %v3430
        %v3680 = vunpack.c.l.b16 %v3431
        %v3681 = vunpack.c.l.b16 %v3432
        %v3682 = vunpack.c.l.b16 %v3433
        %v3683 = vunpack.c.l.b16 %v3434
        %v3684 = vunpack.c.l.b16 %v3435
        %v3685 = vunpack.c.l.b16 %v3436
        %v3686 = vunpack.c.l.b16 %v3437
        %v3687 = vunpack.c.l.b16 %v3438
        %v3688 = vunpack.c.l.b16 %v3439
        %v3689 = vunpack.c.l.b16 %v3440
        %v3690 = vunpack.c.l.b16 %v3441
        %v3691 = vunpack.c.l.b16 %v3442
        %v3692 = vunpack.c.l.b16 %v3443
        %v3693 = vunpack.c.l.b16 %v3444
        %v3694 = vunpack.c.l.b16 %v3445
        %v3695 = vunpack.c.l.b16 %v3446
        %v3696 = vunpack.c.l.b16 %v3447
        %v3697 = vpack.c.b16 %v3622, %v3621
        %v3698 = vpack.c.b16 %v3624, %v3623
        %v3699 = vpack.c.b16 %v3626, %v3625
        %v3700 = vpack.c.b16 %v3628, %v3627
        %v3701 = vpack.c.b16 %v3630, %v3629
        %v3702 = vpack.c.b16 %v3632, %v3631
        %v3703 = vpack.c.b16 %v3634, %v3633
        %v3704 = vpack.c.b16 %v3636, %v3635
        %v3705 = vpack.c.b16 %v3638, %v3637
        %v3706 = vpack.c.b16 %v3640, %v3639
        %v3707 = vpack.c.b16 %v3642, %v3641
        %v3708 = vpack.c.b16 %v3644, %v3643
        %v3709 = vpack.c.b16 %v3646, %v3645
        %v3710 = vpack.c.b16 %v3648, %v3647
        %v3711 = vpack.c.b16 %v3650, %v3649
        %v3712 = vpack.c.b16 %v3652, %v3651
        %v3713 = vpack.c.b16 %v3654, %v3653
        %v3714 = vpack.c.b16 %v3656, %v3655
        %v3715 = vpack.c.b16 %v3658, %v3657
        %v3716 = vpack.c.b16 %v3660, %v3659
        %v3717 = vpack.c.b16 %v3662, %v3661
        %v3718 = vpack.c.b16 %v3664, %v3663
        %v3719 = vpack.c.b16 %v3666, %v3665
        %v3720 = vpack.c.b16 %v3668, %v3667
        %v3721 = vpack.c.b16 %v3670, %v3669
        %v3722 = vpack.c.b16 %v3672, %v3671
        %v3723 = vpack.c.b16 %v3674, %v3673
        %v3724 = vpack.c.b16 %v3676, %v3675
        %v3725 = vpack.c.b16 %v3678, %v3677
        %v3726 = vpack.c.b16 %v3680, %v3679
        %v3727 = vpack.c.b16 %v3682, %v3681
        %v3728 = vpack.c.b16 %v3684, %v3683
        %v3729 = vpack.c.b16 %v3686, %v3685
        %v3730 = vpack.c.b16 %v3688, %v3687
        %v3731 = vpack.c.b16 %v3690, %v3689
        %v3732 = vpack.c.b16 %v3692, %v3691
        %v3733 = vpack.c.b16 %v3694, %v3693
        %v3734 = vpack.c.b16 %v3696, %v3695
        %v3774 = vsel %vm900, %v3540, 0
        %3776 = vmatprep.subr.bf16.mxu0 0
        %3777 = vmatpush1.bf16.msra.mxu0 %v3697
        %3778 = vmatprep.subr.bf16.mxu0 0
        %3779 = vmatpush1.bf16.msra.mxu0 %v3698
        %3780 = vmatprep.subr.bf16.mxu0 0
        %3781 = vmatpush1.bf16.msra.mxu0 %v3699
        %3782 = vmatprep.subr.bf16.mxu0 0
        %3783 = vmatpush1.bf16.msra.mxu0 %v3700
        %3784 = vmatprep.subr.bf16.mxu0 0
        %3785 = vmatpush1.bf16.msra.mxu0 %v3701
        %3786 = vmatprep.subr.bf16.mxu0 0
        %3787 = vmatpush1.bf16.msra.mxu0 %v3702
        %3788 = vmatprep.subr.bf16.mxu0 0
        %3789 = vmatpush1.bf16.msra.mxu0 %v3703
        %3790 = vmatprep.subr.bf16.mxu0 0
        %3791 = vmatpush1.bf16.msra.mxu0 %v3704
        %3792 = vmatprep.subr.bf16.mxu0 0
        %3793 = vmatpush1.bf16.msra.mxu0 %v3705
        %3794 = vmatprep.subr.bf16.mxu0 0
        %3795 = vmatpush1.bf16.msra.mxu0 %v3706
        %3796 = vmatprep.subr.bf16.mxu0 0
        %3797 = vmatpush1.bf16.msra.mxu0 %v3707
        %3798 = vmatprep.subr.bf16.mxu0 0
        %3799 = vmatpush1.bf16.msra.mxu0 %v3708
        %3800 = vmatprep.subr.bf16.mxu0 0
        %3801 = vmatpush1.bf16.msra.mxu0 %v3709
        %3802 = vmatprep.subr.bf16.mxu0 0
        %3803 = vmatpush1.bf16.msra.mxu0 %v3710
        %3804 = vmatprep.subr.bf16.mxu0 0
        %3805 = vmatpush1.bf16.msra.mxu0 %v3711
        %3806 = vmatprep.subr.bf16.mxu0 0
        %3807 = vmatpush1.bf16.msra.mxu0 %v3712
        %3808 = vmatprep.mubr.bf16.mxu0 %v3489
        %3809 = vmatmul.mubr.bf16.gmra.mrb[0].mxu0 %v3472
        %v3810 = vpop.f32.mrb[0].mxu0
        %v3811 = vadd.f32 %v3454, %v3810
        %v3812 = vpop.f32.mrb[0].mxu0
        %v3813 = vpop.f32.mrb[0].mxu0
        %v3814 = vadd.f32 %v3454, %v3813
        %v3815 = vpop.f32.mrb[0].mxu0
        %3816 = vdwg.mxu0
        %3817 = vmatprep.subr.bf16.mxu0 0
        %3818 = vmatpush1.bf16.msra.mxu0 %v3713
        %3819 = vmatprep.subr.bf16.mxu0 0
        %3820 = vmatpush1.bf16.msra.mxu0 %v3714
        %3821 = vmatprep.subr.bf16.mxu0 0
        %3822 = vmatpush1.bf16.msra.mxu0 %v3715
        %3823 = vmatprep.subr.bf16.mxu0 0
        %3824 = vmatpush1.bf16.msra.mxu0 %v3716
        %3825 = vmatprep.subr.bf16.mxu0 0
        %3826 = vmatpush1.bf16.msra.mxu0 %v3717
        %3827 = vmatprep.subr.bf16.mxu0 0
        %3828 = vmatpush1.bf16.msra.mxu0 %v3718
        %3829 = vmatprep.subr.bf16.mxu0 0
        %3830 = vmatpush1.bf16.msra.mxu0 %v3719
        %3831 = vmatprep.subr.bf16.mxu0 0
        %3832 = vmatpush1.bf16.msra.mxu0 %v3720
        %3833 = vmatprep.subr.bf16.mxu0 0
        %3834 = vmatpush1.bf16.msra.mxu0 %v3721
        %3835 = vmatprep.subr.bf16.mxu0 0
        %3836 = vmatpush1.bf16.msra.mxu0 %v3722
        %3837 = vmatprep.subr.bf16.mxu0 0
        %3838 = vmatpush1.bf16.msra.mxu0 %v3723
        %3839 = vmatprep.subr.bf16.mxu0 0
        %3840 = vmatpush1.bf16.msra.mxu0 %v3724
        %3841 = vmatprep.subr.bf16.mxu0 0
        %3842 = vmatpush1.bf16.msra.mxu0 %v3725
        %3843 = vmatprep.subr.bf16.mxu0 0
        %3844 = vmatpush1.bf16.msra.mxu0 %v3726
        %3845 = vmatprep.subr.bf16.mxu0 0
        %3846 = vmatpush1.bf16.msra.mxu0 %v3727
        %3847 = vmatprep.subr.bf16.mxu0 0
        %3848 = vmatpush1.bf16.msra.mxu0 %v3728
        %3849 = vmatprep.mubr.bf16.mxu0 %v3523
        %3850 = vmatmul.mubr.bf16.gmra.mrb[0].mxu0 %v3506
        %v3851 = vpop.f32.mrb[0].mxu0
        %v3852 = vadd.f32 %v3811, %v3851
        %v3853 = vpop.f32.mrb[0].mxu0
        %v3854 = vpop.f32.mrb[0].mxu0
        %v3855 = vadd.f32 %v3814, %v3854
        %v3856 = vpop.f32.mrb[0].mxu0
        %3857 = vdwg.mxu0
        %3858 = vmatprep.subr.bf16.mxu0 0
        %3859 = vmatpush1.bf16.msra.mxu0 %v3729
        %3860 = vmatprep.subr.bf16.mxu0 0
        %3861 = vmatpush1.bf16.msra.mxu0 %v3730
        %3862 = vmatprep.subr.bf16.mxu0 0
        %3863 = vmatpush1.bf16.msra.mxu0 %v3731
        %3864 = vmatprep.subr.bf16.mxu0 0
        %3865 = vmatpush1.bf16.msra.mxu0 %v3732
        %3866 = vmatprep.subr.bf16.mxu0 0
        %3867 = vmatpush1.bf16.msra.mxu0 %v3733
        %3868 = vmatprep.subr.bf16.mxu0 0
        %3869 = vmatpush1.bf16.msra.mxu0 %v3734
        %3870 = vmatprep.subr.bf16.mxu0 0
        %3871 = vmatpush1.bf16.msra.mxu0 0
        %3872 = vmatprep.subr.bf16.mxu0 0
        %3873 = vmatpush1.bf16.msra.mxu0 0
        %3874 = vmatprep.subr.bf16.mxu0 0
        %3875 = vmatpush1.bf16.msra.mxu0 0
        %3876 = vmatprep.subr.bf16.mxu0 0
        %3877 = vmatpush1.bf16.msra.mxu0 0
        %3878 = vmatprep.subr.bf16.mxu0 0
        %3879 = vmatpush1.bf16.msra.mxu0 0
        %3880 = vmatprep.subr.bf16.mxu0 0
        %3881 = vmatpush1.bf16.msra.mxu0 0
        %3882 = vmatprep.subr.bf16.mxu0 0
        %3883 = vmatpush1.bf16.msra.mxu0 0
        %3884 = vmatprep.subr.bf16.mxu0 0
        %3885 = vmatpush1.bf16.msra.mxu0 0
        %3886 = vmatprep.subr.bf16.mxu0 0
        %3887 = vmatpush1.bf16.msra.mxu0 0
        %3888 = vmatprep.subr.bf16.mxu0 0
        %3889 = vmatpush1.bf16.msra.mxu0 0
        %3890 = vmatprep.mubr.bf16.mxu0 0
        %3891 = vmatmul.mubr.bf16.gmra.mrb[0].mxu0 %v3774
        %v3892 = vpop.f32.mrb[0].mxu0
        %v3893 = vadd.f32 %v3852, %v3892
        %v3894 = vpop.f32.mrb[0].mxu0
        %v3895 = vpop.f32.mrb[0].mxu0
        %v3896 = vadd.f32 %v3855, %v3895
        %v3897 = vpop.f32.mrb[0].mxu0
        %3898 = vdwg.mxu0
        %v3899 = vmax.f32 %v3893, 0.0
        %v3900 = vmax.f32 %v3896, 0.0
        %v3901 = vmul.f32 %v3899, %v332
        %v3902 = vmul.f32 %v3900, %v331
        %v3903 = vmul.f32 %v3899, %v352
        %v3904 = vmul.f32 %v3899, %v373
        %v3905 = vmul.f32 %v3899, %v395
        %v3906 = vmul.f32 %v3900, %v394
        %v3907 = vmul.f32 %v3899, %v413
        %v3908 = vmul.f32 %v3899, %v431
        %v3909 = vmul.f32 %v3900, %v430
        %v3910 = vmul.f32 %v3899, %v451
        %v3911 = vmul.f32 %v3900, %v450
        %v3912 = vmul.f32 %v3899, %v471
        %v3913 = vmul.f32 %v3900, %v470
        %v3914 = vmul.f32 %v3899, %v491
        %v3915 = vmul.f32 %v3900, %v490
        %v3916 = vmul.f32 %v3899, %v510
        %v3917 = vmul.f32 %v3900, %v512
        %v3918 = vmul.f32 %v3899, %v530
        %v3919 = vmul.f32 %v3900, %v532
        %v3920 = vmul.f32 %v3899, %v551
        %v3921 = vmul.f32 %v3900, %v553
        %v3922 = vmul.f32 %v3899, %v571
        %v3923 = vmul.f32 %v3900, %v573
        %v3924 = vmul.f32 %v3900, %v586
        %v3925 = vmul.f32 %v3899, %v606
        %v3926 = vmul.f32 %v3900, %v608
        %v3927 = vmul.f32 %v3899, %v626
        %v3928 = vmul.f32 %v3900, %v628
        %v3929 = vmul.f32 %v3900, %v646
        %v3930 = vmul.f32 %v3900, %v666
        %v3932 = vrot.slane %v3903, 7
        %v3933 = vsel %vm509, %v679, %v3932
        %3934 = vrot.lane.b32.xlu0 %v3933, 32
        %v3935 = vpop.permute.xlu0 %3934
        %v3938 = vrot.slane %v3904, 2
        %v3939 = vsel %vm392, %v696, %v3938
        %3940 = vrot.lane.b32.xlu0 %v3939, 64
        %v3941 = vpop.permute.xlu0 %3940
        %3942 = vrot.lane.b32.xlu0 %v3938, 64
        %v3943 = vpop.permute.xlu0 %3942
        %v3948 = vrot.slane %v3905, 1
        %v3949 = vsel %vm371, %v712, %v3948
        %v3950 = vrot.slane %v3906, 1
        %v3951 = vsel %vm371, %v3948, %v3950
        %3952 = vrot.lane.b32.xlu0 %v3949, 96
        %v3953 = vpop.permute.xlu0 %3952
        %3954 = vrot.lane.b32.xlu0 %v3951, 96
        %v3955 = vpop.permute.xlu0 %3954
        %3956 = vrot.lane.b32.xlu0 %v3950, 96
        %v3957 = vpop.permute.xlu0 %3956
        %v3962 = vrot.slane %v3907, 3
        %v3963 = vsel %vm329, %v728, %v3962
        %v3968 = vrot.slane %v3908, 5
        %v3969 = vsel %vm550, %v737, %v3968
        %v3970 = vrot.slane %v3909, 5
        %v3971 = vsel %vm550, %v3968, %v3970
        %3972 = vrot.lane.b32.xlu0 %v3969, 32
        %v3973 = vpop.permute.xlu0 %3972
        %3974 = vrot.lane.b32.xlu0 %v3971, 32
        %v3975 = vpop.permute.xlu0 %3974
        %v3980 = vrot.slane %v3910, 2
        %v3981 = vsel %vm392, %v754, %v3980
        %v3982 = vrot.slane %v3911, 2
        %v3983 = vsel %vm392, %v3980, %v3982
        %3984 = vrot.lane.b32.xlu0 %v3981, 64
        %v3985 = vpop.permute.xlu0 %3984
        %3986 = vrot.lane.b32.xlu0 %v3983, 64
        %v3987 = vpop.permute.xlu0 %3986
        %3988 = vrot.lane.b32.xlu0 %v3982, 64
        %v3989 = vpop.permute.xlu0 %3988
        %v3995 = vrot.slane %v3912, 7
        %v3996 = vsel %vm509, %v771, %v3995
        %v3997 = vrot.slane %v3913, 7
        %v3998 = vsel %vm509, %v3995, %v3997
        %3999 = vrot.lane.b32.xlu0 %v3996, 96
        %v4000 = vpop.permute.xlu0 %3999
        %4001 = vrot.lane.b32.xlu0 %v3998, 96
        %v4002 = vpop.permute.xlu0 %4001
        %v4007 = vrot.slane %v3899, 3
        %v4008 = vrot.slane %v3900, 3
        %v4009 = vsel %vm329, %v4007, %v4008
        %4010 = vrot.lane.b32.xlu0 %v4007, 32
        %v4011 = vpop.permute.xlu0 %4010
        %4012 = vrot.lane.b32.xlu0 %v4009, 32
        %v4013 = vpop.permute.xlu0 %4012
        %4014 = vrot.lane.b32.xlu0 %v4008, 32
        %v4015 = vpop.permute.xlu0 %4014
        %v4021 = vrot.slane %v3916, 4
        %v4022 = vrot.slane %v3917, 4
        %v4023 = vsel %vm350, %v4021, %v4022
        %v4024 = vsel %vm350, %v4022, %v805
        %4025 = vrot.lane.b32.xlu0 %v4021, 64
        %v4026 = vpop.permute.xlu0 %4025
        %4027 = vrot.lane.b32.xlu0 %v4023, 64
        %v4028 = vpop.permute.xlu0 %4027
        %4029 = vrot.lane.b32.xlu0 %v4024, 64
        %v4030 = vpop.permute.xlu0 %4029
        %v4036 = vrot.slane %v3918, 7
        %v4037 = vrot.slane %v3919, 7
        %v4038 = vsel %vm509, %v4036, %v4037
        %v4039 = vsel %vm509, %v4037, %v822
        %4040 = vrot.lane.b32.xlu0 %v4036, 96
        %v4041 = vpop.permute.xlu0 %4040
        %4042 = vrot.lane.b32.xlu0 %v4038, 96
        %v4043 = vpop.permute.xlu0 %4042
        %4044 = vrot.lane.b32.xlu0 %v4039, 96
        %v4045 = vpop.permute.xlu0 %4044
        %v4051 = vrot.slane %v3920, 6
        %v4052 = vrot.slane %v3921, 6
        %v4053 = vsel %vm428, %v4051, %v4052
        %v4054 = vsel %vm428, %v4052, %v839
        %v4060 = vrot.slane %v3922, 5
        %v4061 = vrot.slane %v3923, 5
        %v4062 = vsel %vm550, %v4060, %v4061
        %v4063 = vsel %vm550, %v4061, %v850
        %4064 = vrot.lane.b32.xlu0 %v4060, 32
        %v4065 = vpop.permute.xlu0 %4064
        %4066 = vrot.lane.b32.xlu0 %v4062, 32
        %v4067 = vpop.permute.xlu0 %4066
        %4068 = vrot.lane.b32.xlu0 %v4063, 32
        %v4069 = vpop.permute.xlu0 %4068
        %v4074 = vrot.slane %v3924, 3
        %v4075 = vsel %vm329, %v4074, %v864
        %4076 = vrot.lane.b32.xlu0 %v4074, 64
        %v4077 = vpop.permute.xlu0 %4076
        %4078 = vrot.lane.b32.xlu0 %v4075, 64
        %v4079 = vpop.permute.xlu0 %4078
        %v4084 = vrot.slane %v3925, 1
        %v4085 = vrot.slane %v3926, 1
        %v4086 = vsel %vm371, %v4084, %v4085
        %v4087 = vsel %vm371, %v4085, %v881
        %4088 = vrot.lane.b32.xlu0 %v4086, 96
        %v4089 = vpop.permute.xlu0 %4088
        %4090 = vrot.lane.b32.xlu0 %v4087, 96
        %v4091 = vpop.permute.xlu0 %4090
        %v4094 = vsel %vm892, %v3901, %v686
        %v4095 = vsel %vm892, %v3902, %v3935
        %v4096 = vsel %vm896, %v4094, %v3941
        %v4097 = vsel %vm896, %v4095, %v3943
        %v4098 = vsel %vm900, %v897, %v3953
        %v4099 = vsel %vm900, %v4096, %v3955
        %v4100 = vsel %vm900, %v4097, %v3957
        %v4101 = vsel %vm892, %v3963, %v3973
        %v4102 = vsel %vm892, %v3962, %v3975
        %v4103 = vsel %vm896, %v904, %v3985
        %v4104 = vsel %vm896, %v4101, %v3987
        %v4105 = vsel %vm896, %v4102, %v3989
        %v4106 = vsel %vm900, %v4103, %v777
        %v4107 = vsel %vm900, %v4104, %v4000
        %v4108 = vsel %vm900, %v4105, %v4002
        %v4109 = vsel %vm892, %v495, %v4011
        %v4110 = vsel %vm892, %v3914, %v4013
        %v4111 = vsel %vm892, %v3915, %v4015
        %v4112 = vsel %vm896, %v4109, %v4026
        %v4113 = vsel %vm896, %v4110, %v4028
        %v4114 = vsel %vm896, %v4111, %v4030
        %v4115 = vsel %vm900, %v4112, %v4041
        %v4116 = vsel %vm900, %v4113, %v4043
        %v4117 = vsel %vm900, %v4114, %v4045
        %v4118 = vsel %vm892, %v4051, %v4065
        %v4119 = vsel %vm892, %v4053, %v4067
        %v4120 = vsel %vm892, %v4054, %v4069
        %v4121 = vsel %vm896, %v4118, %v4077
        %v4122 = vsel %vm896, %v4119, %v4079
        %v4123 = vsel %vm896, %v4120, %v871
        %v4124 = vsel %vm900, %v4121, %v4089
        %v4125 = vsel %vm900, %v4122, %v4091
        %v4126 = vsel %vm900, %v4123, %v888
        %v4128 = vrot.slane %v3929, 1
        %v4129 = vsel %vm371, %v4128, %v935
        %4130 = vrot.lane.b32.xlu0 %v4129, 32
        %v4131 = vpop.permute.xlu0 %4130
        %v4134 = vrot.slane %v3930, 6
        %v4135 = vsel %vm428, %v4134, %v952
        %4136 = vrot.lane.b32.xlu0 %v4134, 64
        %v4137 = vpop.permute.xlu0 %4136
        %4138 = vrot.lane.b32.xlu0 %v4135, 64
        %v4139 = vpop.permute.xlu0 %4138
        %v4142 = vsel %vm892, %v3927, %v4131
        %v4143 = vsel %vm892, %v3928, %v942
        %v4144 = vsel %vm896, %v4142, %v4137
        %v4145 = vsel %vm896, %v4143, %v4139
        %v4148 = vrot.slane %v4144, 6
        %v4149 = vrot.slane %v4145, 6
        %v4150 = vsel %vm428, %v4148, %v4149
        %v4151 = vsel %vm428, %v4149, %v977
        %v4155 = vpack.c.bf16 %v4099, %v4098
        %v4156 = vpack.c.bf16 %v4107, %v4106
        %v4157 = vpack.c.bf16 %v4116, %v4115
        %v4158 = vpack.c.bf16 %v4125, %v4124
        %v4159 = vpack.c.bf16 %v4150, %v4148
        %v4160 = vpack.c.bf16 %v4100, %v4100
        %v4161 = vpack.c.bf16 %v4108, %v4108
        %v4162 = vpack.c.bf16 %v4117, %v4117
        %v4163 = vpack.c.bf16 %v4126, %v4126
        %v4164 = vpack.c.bf16 %v4151, %v4151
        %s4165 = scalar_lea.vmem %s4, 1216
        %v4166 = vld [vmem:[%s4165] sm:$0xf]
        %v4167 = vld [vmem:[%s4165 + $0x4] sm:$0xf]
        %v4168 = vld [vmem:[%s4165 + $0x8] sm:$0xf]
        %v4169 = vld [vmem:[%s4165 + $0xc] sm:$0xf]
        %v4170 = vld [vmem:[%s4165 + $0x10] sm:$0xf]
        %v4171 = vld [vmem:[%s4165 + $0x14] sm:$0xf]
        %v4172 = vld [vmem:[%s4165 + $0x18] sm:$0xf]
        %v4173 = vld [vmem:[%s4165 + $0x1c] sm:$0xf]
        %v4174 = vld [vmem:[%s4165 + $0x20] sm:$0xf]
        %v4175 = vld [vmem:[%s4165 + $0x24] sm:$0xf]
        %v4176 = vld [vmem:[%s4165 + $0x28] sm:$0xf]
        %v4177 = vld [vmem:[%s4165 + $0x2c] sm:$0xf]
        %v4178 = vld [vmem:[%s4165 + $0x30] sm:$0xf]
        %v4179 = vld [vmem:[%s4165 + $0x34] sm:$0xf]
        %v4180 = vld [vmem:[%s4165 + $0x38] sm:$0xf]
        %v4181 = vld [vmem:[%s4165 + $0x3c] sm:$0xf]
        %v4182 = vld [vmem:[%s4165 + $0x40] sm:$0xf]
        %v4183 = vld [vmem:[%s4165 + $0x44] sm:$0xf]
        %v4184 = vld [vmem:[%s4165 + $0x48] sm:$0xf]
        %v4185 = vld [vmem:[%s4165 + $0x4c] sm:$0xf]
        %v4186 = vld [vmem:[%s4165 + $0x50] sm:$0xf]
        %v4187 = vld [vmem:[%s4165 + $0x54] sm:$0xf]
        %v4188 = vld [vmem:[%s4165 + $0x58] sm:$0xf]
        %v4189 = vld [vmem:[%s4165 + $0x5c] sm:$0xf]
        %v4190 = vld [vmem:[%s4165 + $0x60] sm:$0xf]
        %v4191 = vld [vmem:[%s4165 + $0x64] sm:$0xf]
        %v4192 = vld [vmem:[%s4165 + $0x68] sm:$0xf]
        %v4193 = vld [vmem:[%s4165 + $0x6c] sm:$0xf]
        %v4194 = vld [vmem:[%s4165 + $0x70] sm:$0xf]
        %v4195 = vld [vmem:[%s4165 + $0x74] sm:$0xf]
        %v4196 = vld [vmem:[%s4165 + $0x78] sm:$0xf]
        %v4197 = vld [vmem:[%s4165 + $0x7c] sm:$0xf]
        %v4198 = vld [vmem:[%s4165 + $0x80] sm:$0xf]
        %v4199 = vld [vmem:[%s4165 + $0x84] sm:$0xf]
        %v4200 = vld [vmem:[%s4165 + $0x88] sm:$0xf]
        %v4201 = vld [vmem:[%s4165 + $0x8c] sm:$0xf]
        %v4202 = vld [vmem:[%s4165 + $0x90] sm:$0xf]
        %v4203 = vld [vmem:[%s4165 + $0x94] sm:$0xf]
        %v4204 = vld [vmem:[%s4165 + $0x98] sm:$0xf]
        %v4205 = vld [vmem:[%s4165 + $0x9c] sm:$0xf]
        %v4206 = vld [vmem:[%s4165 + $0xa0] sm:$0xf]
        %v4207 = vld [vmem:[%s4165 + $0xa4] sm:$0xf]
        %v4208 = vld [vmem:[%s4165 + $0xa8] sm:$0xf]
        %v4209 = vld [vmem:[%s4165 + $0xac] sm:$0xf]
        %v4210 = vld [vmem:[%s4165 + $0xb0] sm:$0xf]
        %v4211 = vld [vmem:[%s4165 + $0xb4] sm:$0xf]
        %v4212 = vld [vmem:[%s4165 + $0xb8] sm:$0xf]
        %v4213 = vld [vmem:[%s4165 + $0xbc] sm:$0xf]
        %v4214 = vld [vmem:[%s4165 + $0xc0] sm:$0xf]
        %v4215 = vld [vmem:[%s4165 + $0xc4] sm:$0xf]
        %v4216 = vld [vmem:[%s4165 + $0xc8] sm:$0xf]
        %v4217 = vld [vmem:[%s4165 + $0xcc] sm:$0xf]
        %v4218 = vld [vmem:[%s4165 + $0xd0] sm:$0xf]
        %v4219 = vld [vmem:[%s4165 + $0xd4] sm:$0xf]
        %v4220 = vld [vmem:[%s4165 + $0xd8] sm:$0xf]
        %v4221 = vld [vmem:[%s4165 + $0xdc] sm:$0xf]
        %v4222 = vld [vmem:[%s4165 + $0xe0] sm:$0xf]
        %v4223 = vld [vmem:[%s4165 + $0xe4] sm:$0xf]
        %v4224 = vld [vmem:[%s4165 + $0xe8] sm:$0xf]
        %v4225 = vld [vmem:[%s4165 + $0xec] sm:$0xf]
        %v4226 = vld [vmem:[%s4165 + $0xf0] sm:$0xf]
        %v4227 = vld [vmem:[%s4165 + $0xf4] sm:$0xf]
        %v4228 = vld [vmem:[%s4165 + $0xf8] sm:$0xf]
        %v4229 = vld [vmem:[%s4165 + $0xfc] sm:$0xf]
        %v4230 = vld [vmem:[%s4165 + $0x100] sm:$0xf]
        %v4231 = vld [vmem:[%s4165 + $0x104] sm:$0xf]
        %v4232 = vld [vmem:[%s4165 + $0x108] sm:$0xf]
        %v4233 = vld [vmem:[%s4165 + $0x10c] sm:$0xf]
        %v4234 = vld [vmem:[%s4165 + $0x110] sm:$0xf]
        %v4235 = vld [vmem:[%s4165 + $0x114] sm:$0xf]
        %v4236 = vld [vmem:[%s4165 + $0x118] sm:$0xf]
        %v4237 = vld [vmem:[%s4165 + $0x11c] sm:$0xf]
        %v4238 = vld [vmem:[%s4165 + $0x120] sm:$0xf]
        %v4239 = vld [vmem:[%s4165 + $0x124] sm:$0xf]
        %v4240 = vld [vmem:[%s4165 + $0x128] sm:$0xf]
        %v4241 = vld [vmem:[%s4165 + $0x12c] sm:$0xf]
        %s4242 = scalar_lea.vmem %s5, 4
        %v4243 = vld [vmem:[%s4242] sm:$0x1]
        %v4245 = vlaneseq
        %v4246 = vshrl.u32 %v4245, 7
        %v4247 = vsub.s32 0, %v4246
        %v4248 = vrot.slane %v4243, %v4247
        %v4251 = vshrl.u32 %v4155, 16
        %v4253 = vrot.slane %v4251, 2
        %v4254 = vshll.u32 %v4155, 16
        %v4256 = vrot.slane %v4254, 3
        %v4257 = vor.u32 %v4253, %v4256
        %v4259 = vshrl.u32 %v4160, 16
        %v4261 = vrot.slane %v4259, 2
        %v4262 = vshll.u32 %v4160, 16
        %v4264 = vrot.slane %v4262, 3
        %v4265 = vor.u32 %v4261, %v4264
        %v4266 = vsel %vm1075, %v4257, %v4265
        %v4268 = vshrl.u32 %v4156, 16
        %v4270 = vrot.slane %v4268, 2
        %v4271 = vshll.u32 %v4156, 16
        %v4273 = vrot.slane %v4271, 3
        %v4274 = vor.u32 %v4270, %v4273
        %v4276 = vshrl.u32 %v4161, 16
        %v4278 = vrot.slane %v4276, 2
        %v4279 = vshll.u32 %v4161, 16
        %v4281 = vrot.slane %v4279, 3
        %v4282 = vor.u32 %v4278, %v4281
        %v4283 = vsel %vm1075, %v4274, %v4282
        %v4285 = vshrl.u32 %v4157, 16
        %v4287 = vrot.slane %v4285, 2
        %v4288 = vshll.u32 %v4157, 16
        %v4290 = vrot.slane %v4288, 3
        %v4291 = vor.u32 %v4287, %v4290
        %v4293 = vshrl.u32 %v4162, 16
        %v4295 = vrot.slane %v4293, 2
        %v4296 = vshll.u32 %v4162, 16
        %v4298 = vrot.slane %v4296, 3
        %v4299 = vor.u32 %v4295, %v4298
        %v4300 = vsel %vm1075, %v4291, %v4299
        %v4302 = vshrl.u32 %v4158, 16
        %v4304 = vrot.slane %v4302, 2
        %v4305 = vshll.u32 %v4158, 16
        %v4307 = vrot.slane %v4305, 3
        %v4308 = vor.u32 %v4304, %v4307
        %v4310 = vshrl.u32 %v4163, 16
        %v4312 = vrot.slane %v4310, 2
        %v4313 = vshll.u32 %v4163, 16
        %v4315 = vrot.slane %v4313, 3
        %v4316 = vor.u32 %v4312, %v4315
        %v4317 = vsel %vm1075, %v4308, %v4316
        %v4319 = vshrl.u32 %v4159, 16
        %v4321 = vrot.slane %v4319, 2
        %v4322 = vshll.u32 %v4159, 16
        %v4324 = vrot.slane %v4322, 3
        %v4325 = vor.u32 %v4321, %v4324
        %v4327 = vshrl.u32 %v4164, 16
        %v4329 = vrot.slane %v4327, 2
        %v4330 = vshll.u32 %v4164, 16
        %v4332 = vrot.slane %v4330, 3
        %v4333 = vor.u32 %v4329, %v4332
        %v4334 = vsel %vm1075, %v4325, %v4333
        %v4415 = vunpack.c.l.b16 %v4166
        %v4416 = vunpack.c.l.b16 %v4167
        %v4417 = vunpack.c.l.b16 %v4168
        %v4418 = vunpack.c.l.b16 %v4169
        %v4419 = vunpack.c.l.b16 %v4170
        %v4420 = vunpack.c.l.b16 %v4171
        %v4421 = vunpack.c.l.b16 %v4172
        %v4422 = vunpack.c.l.b16 %v4173
        %v4423 = vunpack.c.l.b16 %v4174
        %v4424 = vunpack.c.l.b16 %v4175
        %v4425 = vunpack.c.l.b16 %v4176
        %v4426 = vunpack.c.l.b16 %v4177
        %v4427 = vunpack.c.l.b16 %v4178
        %v4428 = vunpack.c.l.b16 %v4179
        %v4429 = vunpack.c.l.b16 %v4180
        %v4430 = vunpack.c.l.b16 %v4181
        %v4431 = vunpack.c.l.b16 %v4182
        %v4432 = vunpack.c.l.b16 %v4183
        %v4433 = vunpack.c.l.b16 %v4184
        %v4434 = vunpack.c.l.b16 %v4185
        %v4435 = vunpack.c.l.b16 %v4186
        %v4436 = vunpack.c.l.b16 %v4187
        %v4437 = vunpack.c.l.b16 %v4188
        %v4438 = vunpack.c.l.b16 %v4189
        %v4439 = vunpack.c.l.b16 %v4190
        %v4440 = vunpack.c.l.b16 %v4191
        %v4441 = vunpack.c.l.b16 %v4192
        %v4442 = vunpack.c.l.b16 %v4193
        %v4443 = vunpack.c.l.b16 %v4194
        %v4444 = vunpack.c.l.b16 %v4195
        %v4445 = vunpack.c.l.b16 %v4196
        %v4446 = vunpack.c.l.b16 %v4197
        %v4447 = vunpack.c.l.b16 %v4198
        %v4448 = vunpack.c.l.b16 %v4199
        %v4449 = vunpack.c.l.b16 %v4200
        %v4450 = vunpack.c.l.b16 %v4201
        %v4451 = vunpack.c.l.b16 %v4202
        %v4452 = vunpack.c.l.b16 %v4203
        %v4453 = vunpack.c.l.b16 %v4204
        %v4454 = vunpack.c.l.b16 %v4205
        %v4455 = vunpack.c.l.b16 %v4206
        %v4456 = vunpack.c.l.b16 %v4207
        %v4457 = vunpack.c.l.b16 %v4208
        %v4458 = vunpack.c.l.b16 %v4209
        %v4459 = vunpack.c.l.b16 %v4210
        %v4460 = vunpack.c.l.b16 %v4211
        %v4461 = vunpack.c.l.b16 %v4212
        %v4462 = vunpack.c.l.b16 %v4213
        %v4463 = vunpack.c.l.b16 %v4214
        %v4464 = vunpack.c.l.b16 %v4215
        %v4465 = vunpack.c.l.b16 %v4216
        %v4466 = vunpack.c.l.b16 %v4217
        %v4467 = vunpack.c.l.b16 %v4218
        %v4468 = vunpack.c.l.b16 %v4219
        %v4469 = vunpack.c.l.b16 %v4220
        %v4470 = vunpack.c.l.b16 %v4221
        %v4471 = vunpack.c.l.b16 %v4222
        %v4472 = vunpack.c.l.b16 %v4223
        %v4473 = vunpack.c.l.b16 %v4224
        %v4474 = vunpack.c.l.b16 %v4225
        %v4475 = vunpack.c.l.b16 %v4226
        %v4476 = vunpack.c.l.b16 %v4227
        %v4477 = vunpack.c.l.b16 %v4228
        %v4478 = vunpack.c.l.b16 %v4229
        %v4479 = vunpack.c.l.b16 %v4230
        %v4480 = vunpack.c.l.b16 %v4231
        %v4481 = vunpack.c.l.b16 %v4232
        %v4482 = vunpack.c.l.b16 %v4233
        %v4483 = vunpack.c.l.b16 %v4234
        %v4484 = vunpack.c.l.b16 %v4235
        %v4485 = vunpack.c.l.b16 %v4236
        %v4486 = vunpack.c.l.b16 %v4237
        %v4487 = vunpack.c.l.b16 %v4238
        %v4488 = vunpack.c.l.b16 %v4239
        %v4489 = vunpack.c.l.b16 %v4240
        %v4490 = vunpack.c.l.b16 %v4241
        %v4491 = vpack.c.b16 %v4416, %v4415
        %v4492 = vpack.c.b16 %v4418, %v4417
        %v4493 = vpack.c.b16 %v4420, %v4419
        %v4494 = vpack.c.b16 %v4422, %v4421
        %v4495 = vpack.c.b16 %v4424, %v4423
        %v4496 = vpack.c.b16 %v4426, %v4425
        %v4497 = vpack.c.b16 %v4428, %v4427
        %v4498 = vpack.c.b16 %v4430, %v4429
        %v4499 = vpack.c.b16 %v4432, %v4431
        %v4500 = vpack.c.b16 %v4434, %v4433
        %v4501 = vpack.c.b16 %v4436, %v4435
        %v4502 = vpack.c.b16 %v4438, %v4437
        %v4503 = vpack.c.b16 %v4440, %v4439
        %v4504 = vpack.c.b16 %v4442, %v4441
        %v4505 = vpack.c.b16 %v4444, %v4443
        %v4506 = vpack.c.b16 %v4446, %v4445
        %v4507 = vpack.c.b16 %v4448, %v4447
        %v4508 = vpack.c.b16 %v4450, %v4449
        %v4509 = vpack.c.b16 %v4452, %v4451
        %v4510 = vpack.c.b16 %v4454, %v4453
        %v4511 = vpack.c.b16 %v4456, %v4455
        %v4512 = vpack.c.b16 %v4458, %v4457
        %v4513 = vpack.c.b16 %v4460, %v4459
        %v4514 = vpack.c.b16 %v4462, %v4461
        %v4515 = vpack.c.b16 %v4464, %v4463
        %v4516 = vpack.c.b16 %v4466, %v4465
        %v4517 = vpack.c.b16 %v4468, %v4467
        %v4518 = vpack.c.b16 %v4470, %v4469
        %v4519 = vpack.c.b16 %v4472, %v4471
        %v4520 = vpack.c.b16 %v4474, %v4473
        %v4521 = vpack.c.b16 %v4476, %v4475
        %v4522 = vpack.c.b16 %v4478, %v4477
        %v4523 = vpack.c.b16 %v4480, %v4479
        %v4524 = vpack.c.b16 %v4482, %v4481
        %v4525 = vpack.c.b16 %v4484, %v4483
        %v4526 = vpack.c.b16 %v4486, %v4485
        %v4527 = vpack.c.b16 %v4488, %v4487
        %v4528 = vpack.c.b16 %v4490, %v4489
        %v4568 = vsel %vm900, %v4334, 0
        %4570 = vmatprep.subr.bf16.mxu0 0
        %4571 = vmatpush1.bf16.msra.mxu0 %v4491
        %4572 = vmatprep.subr.bf16.mxu0 0
        %4573 = vmatpush1.bf16.msra.mxu0 %v4492
        %4574 = vmatprep.subr.bf16.mxu0 0
        %4575 = vmatpush1.bf16.msra.mxu0 %v4493
        %4576 = vmatprep.subr.bf16.mxu0 0
        %4577 = vmatpush1.bf16.msra.mxu0 %v4494
        %4578 = vmatprep.subr.bf16.mxu0 0
        %4579 = vmatpush1.bf16.msra.mxu0 %v4495
        %4580 = vmatprep.subr.bf16.mxu0 0
        %4581 = vmatpush1.bf16.msra.mxu0 %v4496
        %4582 = vmatprep.subr.bf16.mxu0 0
        %4583 = vmatpush1.bf16.msra.mxu0 %v4497
        %4584 = vmatprep.subr.bf16.mxu0 0
        %4585 = vmatpush1.bf16.msra.mxu0 %v4498
        %4586 = vmatprep.subr.bf16.mxu0 0
        %4587 = vmatpush1.bf16.msra.mxu0 %v4499
        %4588 = vmatprep.subr.bf16.mxu0 0
        %4589 = vmatpush1.bf16.msra.mxu0 %v4500
        %4590 = vmatprep.subr.bf16.mxu0 0
        %4591 = vmatpush1.bf16.msra.mxu0 %v4501
        %4592 = vmatprep.subr.bf16.mxu0 0
        %4593 = vmatpush1.bf16.msra.mxu0 %v4502
        %4594 = vmatprep.subr.bf16.mxu0 0
        %4595 = vmatpush1.bf16.msra.mxu0 %v4503
        %4596 = vmatprep.subr.bf16.mxu0 0
        %4597 = vmatpush1.bf16.msra.mxu0 %v4504
        %4598 = vmatprep.subr.bf16.mxu0 0
        %4599 = vmatpush1.bf16.msra.mxu0 %v4505
        %4600 = vmatprep.subr.bf16.mxu0 0
        %4601 = vmatpush1.bf16.msra.mxu0 %v4506
        %4602 = vmatprep.mubr.bf16.mxu0 %v4283
        %4603 = vmatmul.mubr.bf16.gmra.mrb[0].mxu0 %v4266
        %v4604 = vpop.f32.mrb[0].mxu0
        %v4605 = vadd.f32 %v4248, %v4604
        %v4606 = vpop.f32.mrb[0].mxu0
        %v4607 = vpop.f32.mrb[0].mxu0
        %v4608 = vadd.f32 %v4248, %v4607
        %v4609 = vpop.f32.mrb[0].mxu0
        %4610 = vdwg.mxu0
        %4611 = vmatprep.subr.bf16.mxu0 0
        %4612 = vmatpush1.bf16.msra.mxu0 %v4507
        %4613 = vmatprep.subr.bf16.mxu0 0
        %4614 = vmatpush1.bf16.msra.mxu0 %v4508
        %4615 = vmatprep.subr.bf16.mxu0 0
        %4616 = vmatpush1.bf16.msra.mxu0 %v4509
        %4617 = vmatprep.subr.bf16.mxu0 0
        %4618 = vmatpush1.bf16.msra.mxu0 %v4510
        %4619 = vmatprep.subr.bf16.mxu0 0
        %4620 = vmatpush1.bf16.msra.mxu0 %v4511
        %4621 = vmatprep.subr.bf16.mxu0 0
        %4622 = vmatpush1.bf16.msra.mxu0 %v4512
        %4623 = vmatprep.subr.bf16.mxu0 0
        %4624 = vmatpush1.bf16.msra.mxu0 %v4513
        %4625 = vmatprep.subr.bf16.mxu0 0
        %4626 = vmatpush1.bf16.msra.mxu0 %v4514
        %4627 = vmatprep.subr.bf16.mxu0 0
        %4628 = vmatpush1.bf16.msra.mxu0 %v4515
        %4629 = vmatprep.subr.bf16.mxu0 0
        %4630 = vmatpush1.bf16.msra.mxu0 %v4516
        %4631 = vmatprep.subr.bf16.mxu0 0
        %4632 = vmatpush1.bf16.msra.mxu0 %v4517
        %4633 = vmatprep.subr.bf16.mxu0 0
        %4634 = vmatpush1.bf16.msra.mxu0 %v4518
        %4635 = vmatprep.subr.bf16.mxu0 0
        %4636 = vmatpush1.bf16.msra.mxu0 %v4519
        %4637 = vmatprep.subr.bf16.mxu0 0
        %4638 = vmatpush1.bf16.msra.mxu0 %v4520
        %4639 = vmatprep.subr.bf16.mxu0 0
        %4640 = vmatpush1.bf16.msra.mxu0 %v4521
        %4641 = vmatprep.subr.bf16.mxu0 0
        %4642 = vmatpush1.bf16.msra.mxu0 %v4522
        %4643 = vmatprep.mubr.bf16.mxu0 %v4317
        %4644 = vmatmul.mubr.bf16.gmra.mrb[0].mxu0 %v4300
        %v4645 = vpop.f32.mrb[0].mxu0
        %v4646 = vadd.f32 %v4605, %v4645
        %v4647 = vpop.f32.mrb[0].mxu0
        %v4648 = vpop.f32.mrb[0].mxu0
        %v4649 = vadd.f32 %v4608, %v4648
        %v4650 = vpop.f32.mrb[0].mxu0
        %4651 = vdwg.mxu0
        %4652 = vmatprep.subr.bf16.mxu0 0
        %4653 = vmatpush1.bf16.msra.mxu0 %v4523
        %4654 = vmatprep.subr.bf16.mxu0 0
        %4655 = vmatpush1.bf16.msra.mxu0 %v4524
        %4656 = vmatprep.subr.bf16.mxu0 0
        %4657 = vmatpush1.bf16.msra.mxu0 %v4525
        %4658 = vmatprep.subr.bf16.mxu0 0
        %4659 = vmatpush1.bf16.msra.mxu0 %v4526
        %4660 = vmatprep.subr.bf16.mxu0 0
        %4661 = vmatpush1.bf16.msra.mxu0 %v4527
        %4662 = vmatprep.subr.bf16.mxu0 0
        %4663 = vmatpush1.bf16.msra.mxu0 %v4528
        %4664 = vmatprep.subr.bf16.mxu0 0
        %4665 = vmatpush1.bf16.msra.mxu0 0
        %4666 = vmatprep.subr.bf16.mxu0 0
        %4667 = vmatpush1.bf16.msra.mxu0 0
        %4668 = vmatprep.subr.bf16.mxu0 0
        %4669 = vmatpush1.bf16.msra.mxu0 0
        %4670 = vmatprep.subr.bf16.mxu0 0
        %4671 = vmatpush1.bf16.msra.mxu0 0
        %4672 = vmatprep.subr.bf16.mxu0 0
        %4673 = vmatpush1.bf16.msra.mxu0 0
        %4674 = vmatprep.subr.bf16.mxu0 0
        %4675 = vmatpush1.bf16.msra.mxu0 0
        %4676 = vmatprep.subr.bf16.mxu0 0
        %4677 = vmatpush1.bf16.msra.mxu0 0
        %4678 = vmatprep.subr.bf16.mxu0 0
        %4679 = vmatpush1.bf16.msra.mxu0 0
        %4680 = vmatprep.subr.bf16.mxu0 0
        %4681 = vmatpush1.bf16.msra.mxu0 0
        %4682 = vmatprep.subr.bf16.mxu0 0
        %4683 = vmatpush1.bf16.msra.mxu0 0
        %4684 = vmatprep.mubr.bf16.mxu0 0
        %4685 = vmatmul.mubr.bf16.gmra.mrb[0].mxu0 %v4568
        %v4686 = vpop.f32.mrb[0].mxu0
        %v4687 = vadd.f32 %v4646, %v4686
        %v4688 = vpop.f32.mrb[0].mxu0
        %v4689 = vpop.f32.mrb[0].mxu0
        %v4690 = vadd.f32 %v4649, %v4689
        %v4691 = vpop.f32.mrb[0].mxu0
        %4692 = vdwg.mxu0
        %v4693 = vadd.f32 %v3105, %v4687
        %v4694 = vadd.f32 %v3106, %v4690
        %4695 = vst.msk [vmem:[%s245] sm:$0xff] %vm892, %v4693
        %4696 = vst.msk [vmem:[%s245 + $0x8] sm:$0xff] %vm892, %v4694
        %s4697 = sand.u32 %s159, 1
        %s4698 = scalar_lea.sflag [#allocation3], %s4697
        %s4699 = sand.u32 %s159, 1
        %s4700 = smul.addr %s4699, 16
        %s4701 = scalar_lea.vmem [#allocation2], %s4700
        // Predicated region
        $region45: #{roadnet_forward.1} parent=43 // pred_check
          %p4702 = pneg %p169
        $region46: #{roadnet_forward.1} parent=43 // pred_check_branch
          %4704 = sbr.rel (%p4702) target = $region48
        $region47: #{roadnet_forward.1} parent=43 // pred_region
          %s4705 = smul.u32 2, %s20
          %s4707 = ssub.s32 256, 256
          %4708 = vsyncadd %s4698, %s4707
          %s4709 = smul.addr %s4705, 128
          %s4710 = scalar_lea.hbm %s6, %s4709
          %s4711 = sshll.u32 %s4701, 4
          %s4712 = int_to_ptr.vmem [resolvable:$true] %s4711
          %4717 = dma.vmem_to_hbm [thread:$0]  %s4712, 256, %s4710, %s4698, 128, 128, 8
        $region48: #{roadnet_forward.1} parent=43 // pred_fallthru
          _
      $region44: #{roadnet_forward.1} parent=5 // pred_fallthru
        _
      %p4718 = scmp.le.s32.totalorder 2, %s15
      // Predicated region
      $region49: #{roadnet_forward.1} parent=5 // pred_check
        %p4719 = pneg %p4718
      $region50: #{roadnet_forward.1} parent=5 // pred_check_branch
        %4721 = sbr.rel (%p4719) target = $region52
      $region51: #{roadnet_forward.1} parent=5 // pred_region
        %s4722 = ssub.s32 %s15, 2
        // Predicated region
        $region53: #{roadnet_forward.1} parent=51 // pred_check
          %p4723 = pneg %p175
        $region54: #{roadnet_forward.1} parent=51 // pred_check_branch
          %4725 = sbr.rel (%p4723) target = $region56
        $region55: #{roadnet_forward.1} parent=51 // pred_region
          %s4726 = sand.u32 %s160, 1
          %s4727 = scalar_lea.sflag [#allocation3], %s4726
          %s4728 = sand.u32 %s160, 1
          %s4729 = smul.addr %s4728, 16
          %s4730 = scalar_lea.vmem [#allocation2], %s4729
          %4731 = dma.done %s4727, 256
        $region56: #{roadnet_forward.1} parent=51 // pred_fallthru
          _
      $region52: #{roadnet_forward.1} parent=5 // pred_fallthru
        _
    $region6: #{roadnet_forward.1} parent=1 // loop_footer
      %s19 = sadd.s32 1, %s15
    $region7: #{roadnet_forward.1} parent=1 // loop_footer_branch
      %14 = sbr.rel target = $region3
    $region8: #{roadnet_forward.1} parent=1 // loop_exit
      _
    %4732 = vsyncpa [#allocation3], 1
    %s4733 = scalar_lea.sflag [#allocation3], 1
    %4734 = vsyncpa %s4733, 1

</llo_original>
